<compile_context>
chip_gen: v5e
topology: v5e:2x2
jax: 0.10.0
libtpu: 0.0.40
codegen_flags: <defaults>
</compile_context>

<pallas_src>
import math

import jax
import jax.numpy as jnp
from jax.experimental import pallas as pl
from jax.experimental.pallas import tpu as pltpu


# ----------------------------------------------------------------------------
# Single fused Pallas kernel: blocks 2..5
# ----------------------------------------------------------------------------
def _fused_kernel(eca_ref,                                  # SMEM (4, 3): ECA taps per block
                  x32_ref, x64_ref, x128_ref, x256_ref,     # (BB, L, C) channels-last slabs
                  w2_ref, b2_ref, w3_ref, b3_ref,
                  w4_ref, b4_ref, w5_ref, b5_ref,           # 1x1-conv weights (Cin,Cout) bf16 + bias (1,Cout) f32
                  o_ref):                                    # (BB, L_out, 512) f32

    def eca_gate(x, row):
        # x: (BB, L, C) f32.  ECA: y = GAP_L(x); z = 3-tap channel conv with
        # zero padding; gate = sigmoid(z); return x * gate.
        bb, _, c = x.shape
        w_lo = eca_ref[row, 0]     # tap for y[j-1]
        w_md = eca_ref[row, 1]     # tap for y[j]
        w_hi = eca_ref[row, 2]     # tap for y[j+1]
        y = jnp.mean(x, axis=1)                                          # (BB, C)

        if c % 128 == 0:
            # Lane-shift 3-tap: XLU rolls (free slot vs VALU), edge lanes zeroed.
            lane = jax.lax.broadcasted_iota(jnp.int32, (bb, c), 1)
            y_prev = jnp.where(lane == 0, 0.0,
                               pltpu.roll(y, 1, axis=1))                 # y[j-1]
            y_next = jnp.where(lane == c - 1, 0.0,
                               pltpu.roll(y, c - 1, axis=1))             # y[j+1]
            z = w_lo * y_prev + w_md * y + w_hi * y_next                 # (BB, C)
        else:
            # Tiny channels (32/64): a 3*C^2 tridiagonal build + M=1 matvec is
            # only a few Kops and avoids sub-128-lane roll lowering risk.
            i = jax.lax.broadcasted_iota(jnp.int32, (c, c), 0)           # source channel
            j = jax.lax.broadcasted_iota(jnp.int32, (c, c), 1)           # dest channel
            m = (w_lo * (i == j - 1).astype(jnp.float32)
                 + w_md * (i == j).astype(jnp.float32)
                 + w_hi * (i == j + 1).astype(jnp.float32))              # (C, C)
            z = jnp.dot(y, m, preferred_element_type=jnp.float32)        # (BB, C)

        return x * jax.nn.sigmoid(z)[:, None, :]

    def block(x, row, w_ref, b_ref, pool_k):
        bb, l, c_in = x.shape
        xs = eca_gate(x, row)
        # Conv1d(Cin -> Cout, kernel=1) == (BB*L, Cin) @ (Cin, Cout) on the MXU.
        # bf16 operands, f32 accumulation.
        flat = xs.reshape(bb * l, c_in).astype(jnp.bfloat16)
        conv = jnp.dot(flat, w_ref[...], preferred_element_type=jnp.float32)
        conv = conv + b_ref[...]
        c_out = conv.shape[-1]
        conv = conv.reshape(bb, l, c_out)
        if pool_k > 1:   # MaxPool1d(pool_k, pool_k) over the L (sublane) axis.
            conv = jnp.max(conv.reshape(bb, l // pool_k, pool_k, c_out), axis=2)
        return conv

    x32 = x32_ref[...].astype(jnp.float32)
    a = block(x32, 0, w2_ref, b2_ref, 5) + x64_ref[...]     # (BB, L/5,  64)
    b = block(a,   1, w3_ref, b3_ref, 5) + x128_ref[...]    # (BB, L/25, 128)
    c = block(b,   2, w4_ref, b4_ref, 2) + x256_ref[...]    # (BB, L/50, 256)
    d = block(c,   3, w5_ref, b5_ref, 1)                    # (BB, L/50, 512) lane-dense
    o_ref[...] = d.astype(o_ref.dtype)


# ----------------------------------------------------------------------------
# Wrapper
# ----------------------------------------------------------------------------
def _pick_batch_block(b, cap=8):
    """Largest BB (<= cap) dividing B that still leaves >= 2 grid steps."""
    for bb in range(min(cap, b), 0, -1):
        if b % bb == 0 and (b // bb) >= 2:
            return bb
    return 1


@jax.jit
def task_forward(params, x_16, x_32, x_64, x_128, x_256):
    """Inputs in PyTorch NCL layout; returns (B, 512, L//50) in NCL layout."""
    del x_16  # block_1 / x_16 are unused by the reference forward pass

    # NCL -> NLC (lane dim = channels).  Negligible HBM traffic at these sizes;
    # at large B*L this transpose should move inside the kernel (XLU) instead.
    to_lc = lambda t: jnp.transpose(t, (0, 2, 1)).astype(jnp.float32)
    x32, x64, x128, x256 = (to_lc(t) for t in (x_32, x_64, x_128, x_256))

    B = x32.shape[0]
    L4 = x256.shape[1]                                        # final length (L // 50)
    BB = _pick_batch_block(B)
    n_steps = B // BB

    names = ("block_2", "block_3", "block_4", "block_5")
    eca = jnp.stack([params[n][0] for n in names]).astype(jnp.float32)       # (4, 3) -> SMEM
    wts = [jnp.transpose(params[n][1]).astype(jnp.bfloat16) for n in names]  # (Cin, Cout) bf16
    bss = [params[n][2].reshape(1, -1).astype(jnp.float32) for n in names]   # (1, Cout) f32
    c_out = wts[-1].shape[1]

    args = [eca, x32, x64, x128, x256]
    in_specs = [
        pl.BlockSpec(memory_space=pltpu.MemorySpace.SMEM),                   # 12 ECA taps
        pl.BlockSpec((BB,) + x32.shape[1:], lambda b: (b, 0, 0)),
        pl.BlockSpec((BB,) + x64.shape[1:], lambda b: (b, 0, 0)),
        pl.BlockSpec((BB,) + x128.shape[1:], lambda b: (b, 0, 0)),
        pl.BlockSpec((BB,) + x256.shape[1:], lambda b: (b, 0, 0)),
    ]
    for w, bias in zip(wts, bss):
        args += [w, bias]
        # Constant block index -> resident across grid steps (no per-step re-DMA).
        in_specs += [pl.BlockSpec(w.shape, lambda b: (0, 0)),
                     pl.BlockSpec(bias.shape, lambda b: (0, 0))]

    # v7x has 2 TensorCores/chip -> split an even, >=2-step batch grid across
    # them; other generations use plain PARALLEL.
    kind = jax.devices()[0].device_kind.lower()
    if (("v7" in kind) or ("7x" in kind)) and n_steps >= 2 and n_steps % 2 == 0:
        dim_sem = (pltpu.CORE_PARALLEL,)
    else:
        dim_sem = (pltpu.PARALLEL,)

    out = pl.pallas_call(
        _fused_kernel,
        out_shape=jax.ShapeDtypeStruct((B, L4, c_out), jnp.float32),
        grid=(n_steps,),
        in_specs=in_specs,
        out_specs=pl.BlockSpec((BB, L4, c_out), lambda b: (b, 0, 0)),
        compiler_params=pltpu.CompilerParams(
            dimension_semantics=dim_sem,
            vmem_limit_bytes=32 * 1024 * 1024,   # budget against v7x (64 MiB phys)
        ),
    )(*args)

    return jnp.transpose(out, (0, 2, 1))                    # back to (B, 512, L//50)


# ----------------------------------------------------------------------------
# Pure-JAX f32 reference (for correctness check)
# ----------------------------------------------------------------------------
def ref_block(x_ncl, eca_w, conv_w, conv_b, pool_k):
    y = jnp.mean(x_ncl, axis=2)                              # (B, C)
    yp = jnp.pad(y, ((0, 0), (1, 1)))
    z = eca_w[0] * yp[:, :-2] + eca_w[1] * yp[:, 1:-1] + eca_w[2] * yp[:, 2:]
    xs = x_ncl * jax.nn.sigmoid(z)[:, :, None]
    conv = jnp.einsum("oc,bcl->bol", conv_w, xs) + conv_b[None, :, None]
    if pool_k > 1:
        B, Co, L = conv.shape
        conv = jnp.max(conv.reshape(B, Co, L // pool_k, pool_k), axis=-1)
    return conv


def ref_forward(params, x_16, x_32, x_64, x_128, x_256):
    del x_16
    a = ref_block(x_32, *params["block_2"], 5) + x_64
    b = ref_block(a, *params["block_3"], 5) + x_128
    c = ref_block(b, *params["block_4"], 2) + x_256
    return ref_block(c, *params["block_5"], 1)


# ----------------------------------------------------------------------------
# Deterministic parameter init
# ----------------------------------------------------------------------------
def init_block_params(key, c_in, c_out):
    k1, k2, k3 = jax.random.split(key, 3)
    eca_w = jax.random.normal(k1, (3,), jnp.float32) * 0.5
    conv_w = jax.random.normal(k2, (c_out, c_in), jnp.float32) * (1.0 / math.sqrt(c_in))
    conv_b = jax.random.normal(k3, (c_out,), jnp.float32) * 0.1
    return (eca_w, conv_w, conv_b)


if __name__ == "__main__":
    key = jax.random.PRNGKey(0)
    kp2, kp3, kp4, kp5, kx16, kx32, kx64, kx128, kx256 = jax.random.split(key, 9)

    params = {
        "block_2": init_block_params(kp2, 32, 64),
        "block_3": init_block_params(kp3, 64, 128),
        "block_4": init_block_params(kp4, 128, 256),
        "block_5": init_block_params(kp5, 256, 512),
    }

    B, L0 = 2, 200   # 200 / 5 / 5 / 2 = 4
    x_16 = jax.random.normal(kx16, (B, 16, L0), jnp.float32)       # unused by forward
    x_32 = jax.random.normal(kx32, (B, 32, L0), jnp.float32)
    x_64 = jax.random.normal(kx64, (B, 64, L0 // 5), jnp.float32)
    x_128 = jax.random.normal(kx128, (B, 128, L0 // 25), jnp.float32)
    x_256 = jax.random.normal(kx256, (B, 256, L0 // 50), jnp.float32)

    out = task_forward(params, x_16, x_32, x_64, x_128, x_256)
    out = jax.block_until_ready(out)

    ref = ref_forward(params, x_16, x_32, x_64, x_128, x_256)
    assert out.shape == (B, 512, L0 // 50), out.shape
    # bf16 matmul operands (f32 accumulation) -> relaxed tolerance vs f32 ref.
    assert jnp.allclose(out, ref, rtol=5e-2, atol=5e-2), float(jnp.max(jnp.abs(out - ref)))

    print("KERNEL_OK")
</pallas_src>

<mosaic_0001>
module attributes {stable_mosaic.version = 11 : i64} {
  func.func @_fused_kernel(%arg0: i32, %arg1: memref<4x3xf32, #tpu.memory_space<smem>>, %arg2: memref<1x200x32xf32, #tpu.memory_space<vmem>>, %arg3: memref<1x40x64xf32, #tpu.memory_space<vmem>>, %arg4: memref<1x8x128xf32, #tpu.memory_space<vmem>>, %arg5: memref<1x4x256xf32, #tpu.memory_space<vmem>>, %arg6: memref<32x64xbf16, #tpu.memory_space<vmem>>, %arg7: memref<1x64xf32, #tpu.memory_space<vmem>>, %arg8: memref<64x128xbf16, #tpu.memory_space<vmem>>, %arg9: memref<1x128xf32, #tpu.memory_space<vmem>>, %arg10: memref<128x256xbf16, #tpu.memory_space<vmem>>, %arg11: memref<1x256xf32, #tpu.memory_space<vmem>>, %arg12: memref<256x512xbf16, #tpu.memory_space<vmem>>, %arg13: memref<1x512xf32, #tpu.memory_space<vmem>>, %arg14: memref<1x4x512xf32, #tpu.memory_space<vmem>>) attributes {dimension_semantics = [#tpu.dimension_semantics<parallel>], iteration_bounds = array<i64: 2>, scalar_prefetch = 0 : i64, scratch_operands = 0 : i64, tpu.core_type = #tpu.core_type<tc>, window_params = [{transform_indices = @transform_0, window_bounds = array<i64: 4, 3>}, {transform_indices = @transform_1, window_bounds = array<i64: 1, 200, 32>}, {transform_indices = @transform_2, window_bounds = array<i64: 1, 40, 64>}, {transform_indices = @transform_3, window_bounds = array<i64: 1, 8, 128>}, {transform_indices = @transform_4, window_bounds = array<i64: 1, 4, 256>}, {pipeline_mode = #tpu.pipeline_mode<synchronous>, transform_indices = @transform_5, window_bounds = array<i64: 32, 64>}, {pipeline_mode = #tpu.pipeline_mode<synchronous>, transform_indices = @transform_6, window_bounds = array<i64: 1, 64>}, {pipeline_mode = #tpu.pipeline_mode<synchronous>, transform_indices = @transform_7, window_bounds = array<i64: 64, 128>}, {pipeline_mode = #tpu.pipeline_mode<synchronous>, transform_indices = @transform_8, window_bounds = array<i64: 1, 128>}, {pipeline_mode = #tpu.pipeline_mode<synchronous>, transform_indices = @transform_9, window_bounds = array<i64: 128, 256>}, {pipeline_mode = #tpu.pipeline_mode<synchronous>, transform_indices = @transform_10, window_bounds = array<i64: 1, 256>}, {pipeline_mode = #tpu.pipeline_mode<synchronous>, transform_indices = @transform_11, window_bounds = array<i64: 256, 512>}, {pipeline_mode = #tpu.pipeline_mode<synchronous>, transform_indices = @transform_12, window_bounds = array<i64: 1, 512>}, {transform_indices = @transform_13, window_bounds = array<i64: 1, 4, 512>}]} {
    %c0 = arith.constant 0 : index
    %c0_0 = arith.constant 0 : index
    %c0_1 = arith.constant 0 : index
    %0 = vector.load %arg2[%c0, %c0_0, %c0_1] : memref<1x200x32xf32, #tpu.memory_space<vmem>>, vector<1x200x32xf32>
    %c0_2 = arith.constant 0 : index
    %c0_3 = arith.constant 0 : index
    %1 = memref.load %arg1[%c0_2, %c0_3] : memref<4x3xf32, #tpu.memory_space<smem>>
    %c0_4 = arith.constant 0 : index
    %c1 = arith.constant 1 : index
    %2 = memref.load %arg1[%c0_4, %c1] : memref<4x3xf32, #tpu.memory_space<smem>>
    %c0_5 = arith.constant 0 : index
    %c2 = arith.constant 2 : index
    %3 = memref.load %arg1[%c0_5, %c2] : memref<4x3xf32, #tpu.memory_space<smem>>
    %cst = arith.constant dense<0.000000e+00> : vector<1x32xf32>
    %4 = vector.multi_reduction <add>, %0, %cst [1] : vector<1x200x32xf32> to vector<1x32xf32>
    %cst_6 = arith.constant 2.000000e+02 : f32
    %5 = vector.broadcast %cst_6 : f32 to vector<1x32xf32>
    %6 = arith.divf %4, %5 : vector<1x32xf32>
    %7 = tpu.iota {dimensions = array<i32: 0>} : vector<32x32xi32>
    %8 = tpu.iota {dimensions = array<i32: 1>} : vector<32x32xi32>
    %c1_i32 = arith.constant 1 : i32
    %9 = vector.broadcast %c1_i32 : i32 to vector<32x32xi32>
    %10 = arith.subi %8, %9 : vector<32x32xi32>
    %11 = arith.cmpi eq, %7, %10 : vector<32x32xi32>
    %12 = arith.extui %11 : vector<32x32xi1> to vector<32x32xi32>
    %13 = arith.sitofp %12 : vector<32x32xi32> to vector<32x32xf32>
    %14 = vector.broadcast %1 : f32 to vector<32x32xf32>
    %15 = arith.mulf %14, %13 : vector<32x32xf32>
    %16 = arith.cmpi eq, %7, %8 : vector<32x32xi32>
    %17 = arith.extui %16 : vector<32x32xi1> to vector<32x32xi32>
    %18 = arith.sitofp %17 : vector<32x32xi32> to vector<32x32xf32>
    %19 = vector.broadcast %2 : f32 to vector<32x32xf32>
    %20 = arith.mulf %19, %18 : vector<32x32xf32>
    %21 = arith.addf %15, %20 : vector<32x32xf32>
    %c1_i32_7 = arith.constant 1 : i32
    %22 = vector.broadcast %c1_i32_7 : i32 to vector<32x32xi32>
    %23 = arith.addi %8, %22 : vector<32x32xi32>
    %24 = arith.cmpi eq, %7, %23 : vector<32x32xi32>
    %25 = arith.extui %24 : vector<32x32xi1> to vector<32x32xi32>
    %26 = arith.sitofp %25 : vector<32x32xi32> to vector<32x32xf32>
    %27 = vector.broadcast %3 : f32 to vector<32x32xf32>
    %28 = arith.mulf %27, %26 : vector<32x32xf32>
    %29 = arith.addf %21, %28 : vector<32x32xf32>
    %cst_8 = arith.constant dense<0.000000e+00> : vector<1x32xf32>
    %30 = tpu.matmul %6, %29, %cst_8 {dimension_numbers = #tpu.dot_dimension_numbers<[1], [0], [0], [1], [0, 0, 1, 1], [], []>} : vector<1x32xf32>, vector<32x32xf32>, vector<1x32xf32> -> vector<1x32xf32>
    %31 = arith.negf %30 : vector<1x32xf32>
    %32 = math.exp %31 : vector<1x32xf32>
    %cst_9 = arith.constant 1.000000e+00 : f32
    %33 = vector.broadcast %cst_9 : f32 to vector<1x32xf32>
    %34 = arith.addf %33, %32 : vector<1x32xf32>
    %35 = arith.divf %33, %34 : vector<1x32xf32>
    %36 = vector.shape_cast %35 : vector<1x32xf32> to vector<1x1x32xf32>
    %37 = vector.broadcast %36 : vector<1x1x32xf32> to vector<1x200x32xf32>
    %38 = arith.mulf %0, %37 : vector<1x200x32xf32>
    %39 = vector.shape_cast %38 : vector<1x200x32xf32> to vector<200x32xf32>
    %40 = arith.truncf %39 : vector<200x32xf32> to vector<200x32xbf16>
    %c0_10 = arith.constant 0 : index
    %c0_11 = arith.constant 0 : index
    %41 = vector.load %arg6[%c0_10, %c0_11] : memref<32x64xbf16, #tpu.memory_space<vmem>>, vector<32x64xbf16>
    %cst_12 = arith.constant dense<0.000000e+00> : vector<200x64xf32>
    %42 = tpu.matmul %40, %41, %cst_12 {dimension_numbers = #tpu.dot_dimension_numbers<[1], [0], [0], [1], [0, 0, 1, 1], [], []>} : vector<200x32xbf16>, vector<32x64xbf16>, vector<200x64xf32> -> vector<200x64xf32>
    %c0_13 = arith.constant 0 : index
    %c0_14 = arith.constant 0 : index
    %43 = vector.load %arg7[%c0_13, %c0_14] : memref<1x64xf32, #tpu.memory_space<vmem>>, vector<1x64xf32>
    %44 = vector.broadcast %43 : vector<1x64xf32> to vector<200x64xf32>
    %45 = arith.addf %42, %44 : vector<200x64xf32>
    %46 = vector.shape_cast %45 : vector<200x64xf32> to vector<1x200x64xf32>
    %47 = vector.shape_cast %46 : vector<1x200x64xf32> to vector<1x40x5x64xf32>
    %cst_15 = arith.constant dense<0xFF800000> : vector<1x40x64xf32>
    %48 = vector.multi_reduction <maximumf>, %47, %cst_15 [2] : vector<1x40x5x64xf32> to vector<1x40x64xf32>
    %c0_16 = arith.constant 0 : index
    %c0_17 = arith.constant 0 : index
    %c0_18 = arith.constant 0 : index
    %49 = vector.load %arg3[%c0_16, %c0_17, %c0_18] : memref<1x40x64xf32, #tpu.memory_space<vmem>>, vector<1x40x64xf32>
    %50 = arith.addf %48, %49 : vector<1x40x64xf32>
    %c1_19 = arith.constant 1 : index
    %c0_20 = arith.constant 0 : index
    %51 = memref.load %arg1[%c1_19, %c0_20] : memref<4x3xf32, #tpu.memory_space<smem>>
    %c1_21 = arith.constant 1 : index
    %c1_22 = arith.constant 1 : index
    %52 = memref.load %arg1[%c1_21, %c1_22] : memref<4x3xf32, #tpu.memory_space<smem>>
    %c1_23 = arith.constant 1 : index
    %c2_24 = arith.constant 2 : index
    %53 = memref.load %arg1[%c1_23, %c2_24] : memref<4x3xf32, #tpu.memory_space<smem>>
    %cst_25 = arith.constant dense<0.000000e+00> : vector<1x64xf32>
    %54 = vector.multi_reduction <add>, %50, %cst_25 [1] : vector<1x40x64xf32> to vector<1x64xf32>
    %cst_26 = arith.constant 4.000000e+01 : f32
    %55 = vector.broadcast %cst_26 : f32 to vector<1x64xf32>
    %56 = arith.divf %54, %55 : vector<1x64xf32>
    %57 = tpu.iota {dimensions = array<i32: 0>} : vector<64x64xi32>
    %58 = tpu.iota {dimensions = array<i32: 1>} : vector<64x64xi32>
    %c1_i32_27 = arith.constant 1 : i32
    %59 = vector.broadcast %c1_i32_27 : i32 to vector<64x64xi32>
    %60 = arith.subi %58, %59 : vector<64x64xi32>
    %61 = arith.cmpi eq, %57, %60 : vector<64x64xi32>
    %62 = arith.extui %61 : vector<64x64xi1> to vector<64x64xi32>
    %63 = arith.sitofp %62 : vector<64x64xi32> to vector<64x64xf32>
    %64 = vector.broadcast %51 : f32 to vector<64x64xf32>
    %65 = arith.mulf %64, %63 : vector<64x64xf32>
    %66 = arith.cmpi eq, %57, %58 : vector<64x64xi32>
    %67 = arith.extui %66 : vector<64x64xi1> to vector<64x64xi32>
    %68 = arith.sitofp %67 : vector<64x64xi32> to vector<64x64xf32>
    %69 = vector.broadcast %52 : f32 to vector<64x64xf32>
    %70 = arith.mulf %69, %68 : vector<64x64xf32>
    %71 = arith.addf %65, %70 : vector<64x64xf32>
    %c1_i32_28 = arith.constant 1 : i32
    %72 = vector.broadcast %c1_i32_28 : i32 to vector<64x64xi32>
    %73 = arith.addi %58, %72 : vector<64x64xi32>
    %74 = arith.cmpi eq, %57, %73 : vector<64x64xi32>
    %75 = arith.extui %74 : vector<64x64xi1> to vector<64x64xi32>
    %76 = arith.sitofp %75 : vector<64x64xi32> to vector<64x64xf32>
    %77 = vector.broadcast %53 : f32 to vector<64x64xf32>
    %78 = arith.mulf %77, %76 : vector<64x64xf32>
    %79 = arith.addf %71, %78 : vector<64x64xf32>
    %cst_29 = arith.constant dense<0.000000e+00> : vector<1x64xf32>
    %80 = tpu.matmul %56, %79, %cst_29 {dimension_numbers = #tpu.dot_dimension_numbers<[1], [0], [0], [1], [0, 0, 1, 1], [], []>} : vector<1x64xf32>, vector<64x64xf32>, vector<1x64xf32> -> vector<1x64xf32>
    %81 = arith.negf %80 : vector<1x64xf32>
    %82 = math.exp %81 : vector<1x64xf32>
    %cst_30 = arith.constant 1.000000e+00 : f32
    %83 = vector.broadcast %cst_30 : f32 to vector<1x64xf32>
    %84 = arith.addf %83, %82 : vector<1x64xf32>
    %85 = arith.divf %83, %84 : vector<1x64xf32>
    %86 = vector.shape_cast %85 : vector<1x64xf32> to vector<1x1x64xf32>
    %87 = vector.broadcast %86 : vector<1x1x64xf32> to vector<1x40x64xf32>
    %88 = arith.mulf %50, %87 : vector<1x40x64xf32>
    %89 = vector.shape_cast %88 : vector<1x40x64xf32> to vector<40x64xf32>
    %90 = arith.truncf %89 : vector<40x64xf32> to vector<40x64xbf16>
    %c0_31 = arith.constant 0 : index
    %c0_32 = arith.constant 0 : index
    %91 = vector.load %arg8[%c0_31, %c0_32] : memref<64x128xbf16, #tpu.memory_space<vmem>>, vector<64x128xbf16>
    %cst_33 = arith.constant dense<0.000000e+00> : vector<40x128xf32>
    %92 = tpu.matmul %90, %91, %cst_33 {dimension_numbers = #tpu.dot_dimension_numbers<[1], [0], [0], [1], [0, 0, 1, 1], [], []>} : vector<40x64xbf16>, vector<64x128xbf16>, vector<40x128xf32> -> vector<40x128xf32>
    %c0_34 = arith.constant 0 : index
    %c0_35 = arith.constant 0 : index
    %93 = vector.load %arg9[%c0_34, %c0_35] : memref<1x128xf32, #tpu.memory_space<vmem>>, vector<1x128xf32>
    %94 = vector.broadcast %93 : vector<1x128xf32> to vector<40x128xf32>
    %95 = arith.addf %92, %94 : vector<40x128xf32>
    %96 = vector.shape_cast %95 : vector<40x128xf32> to vector<1x40x128xf32>
    %97 = vector.shape_cast %96 : vector<1x40x128xf32> to vector<1x8x5x128xf32>
    %cst_36 = arith.constant dense<0xFF800000> : vector<1x8x128xf32>
    %98 = vector.multi_reduction <maximumf>, %97, %cst_36 [2] : vector<1x8x5x128xf32> to vector<1x8x128xf32>
    %c0_37 = arith.constant 0 : index
    %c0_38 = arith.constant 0 : index
    %c0_39 = arith.constant 0 : index
    %99 = vector.load %arg4[%c0_37, %c0_38, %c0_39] : memref<1x8x128xf32, #tpu.memory_space<vmem>>, vector<1x8x128xf32>
    %100 = arith.addf %98, %99 : vector<1x8x128xf32>
    %c2_40 = arith.constant 2 : index
    %c0_41 = arith.constant 0 : index
    %101 = memref.load %arg1[%c2_40, %c0_41] : memref<4x3xf32, #tpu.memory_space<smem>>
    %c2_42 = arith.constant 2 : index
    %c1_43 = arith.constant 1 : index
    %102 = memref.load %arg1[%c2_42, %c1_43] : memref<4x3xf32, #tpu.memory_space<smem>>
    %c2_44 = arith.constant 2 : index
    %c2_45 = arith.constant 2 : index
    %103 = memref.load %arg1[%c2_44, %c2_45] : memref<4x3xf32, #tpu.memory_space<smem>>
    %cst_46 = arith.constant dense<0.000000e+00> : vector<1x128xf32>
    %104 = vector.multi_reduction <add>, %100, %cst_46 [1] : vector<1x8x128xf32> to vector<1x128xf32>
    %cst_47 = arith.constant 8.000000e+00 : f32
    %105 = vector.broadcast %cst_47 : f32 to vector<1x128xf32>
    %106 = arith.divf %104, %105 : vector<1x128xf32>
    %107 = tpu.iota {dimensions = array<i32: 1>} : vector<1x128xi32>
    %c0_i32 = arith.constant 0 : i32
    %108 = vector.broadcast %c0_i32 : i32 to vector<1x128xi32>
    %109 = arith.cmpi eq, %107, %108 : vector<1x128xi32>
    %c1_i32_48 = arith.constant 1 : i32
    %110 = tpu.dynamic_rotate %106 by %c1_i32_48 dim 1 : vector<1x128xf32>, i32 -> vector<1x128xf32>
    %cst_49 = arith.constant 0.000000e+00 : f32
    %111 = vector.broadcast %cst_49 : f32 to vector<1x128xf32>
    %112 = arith.select %109, %111, %110 : vector<1x128xi1>, vector<1x128xf32>
    %c127_i32 = arith.constant 127 : i32
    %113 = vector.broadcast %c127_i32 : i32 to vector<1x128xi32>
    %114 = arith.cmpi eq, %107, %113 : vector<1x128xi32>
    %c127_i32_50 = arith.constant 127 : i32
    %115 = tpu.dynamic_rotate %106 by %c127_i32_50 dim 1 : vector<1x128xf32>, i32 -> vector<1x128xf32>
    %cst_51 = arith.constant 0.000000e+00 : f32
    %116 = vector.broadcast %cst_51 : f32 to vector<1x128xf32>
    %117 = arith.select %114, %116, %115 : vector<1x128xi1>, vector<1x128xf32>
    %118 = vector.broadcast %101 : f32 to vector<1x128xf32>
    %119 = arith.mulf %118, %112 : vector<1x128xf32>
    %120 = vector.broadcast %102 : f32 to vector<1x128xf32>
    %121 = arith.mulf %120, %106 : vector<1x128xf32>
    %122 = arith.addf %119, %121 : vector<1x128xf32>
    %123 = vector.broadcast %103 : f32 to vector<1x128xf32>
    %124 = arith.mulf %123, %117 : vector<1x128xf32>
    %125 = arith.addf %122, %124 : vector<1x128xf32>
    %126 = arith.negf %125 : vector<1x128xf32>
    %127 = math.exp %126 : vector<1x128xf32>
    %cst_52 = arith.constant 1.000000e+00 : f32
    %128 = vector.broadcast %cst_52 : f32 to vector<1x128xf32>
    %129 = arith.addf %128, %127 : vector<1x128xf32>
    %130 = arith.divf %128, %129 : vector<1x128xf32>
    %131 = vector.shape_cast %130 : vector<1x128xf32> to vector<1x1x128xf32>
    %132 = vector.broadcast %131 : vector<1x1x128xf32> to vector<1x8x128xf32>
    %133 = arith.mulf %100, %132 : vector<1x8x128xf32>
    %134 = vector.shape_cast %133 : vector<1x8x128xf32> to vector<8x128xf32>
    %135 = arith.truncf %134 : vector<8x128xf32> to vector<8x128xbf16>
    %c0_53 = arith.constant 0 : index
    %c0_54 = arith.constant 0 : index
    %136 = vector.load %arg10[%c0_53, %c0_54] : memref<128x256xbf16, #tpu.memory_space<vmem>>, vector<128x256xbf16>
    %cst_55 = arith.constant dense<0.000000e+00> : vector<8x256xf32>
    %137 = tpu.matmul %135, %136, %cst_55 {dimension_numbers = #tpu.dot_dimension_numbers<[1], [0], [0], [1], [0, 0, 1, 1], [], []>} : vector<8x128xbf16>, vector<128x256xbf16>, vector<8x256xf32> -> vector<8x256xf32>
    %c0_56 = arith.constant 0 : index
    %c0_57 = arith.constant 0 : index
    %138 = vector.load %arg11[%c0_56, %c0_57] : memref<1x256xf32, #tpu.memory_space<vmem>>, vector<1x256xf32>
    %139 = vector.broadcast %138 : vector<1x256xf32> to vector<8x256xf32>
    %140 = arith.addf %137, %139 : vector<8x256xf32>
    %141 = vector.shape_cast %140 : vector<8x256xf32> to vector<1x8x256xf32>
    %142 = vector.shape_cast %141 : vector<1x8x256xf32> to vector<1x4x2x256xf32>
    %cst_58 = arith.constant dense<0xFF800000> : vector<1x4x256xf32>
    %143 = vector.multi_reduction <maximumf>, %142, %cst_58 [2] : vector<1x4x2x256xf32> to vector<1x4x256xf32>
    %c0_59 = arith.constant 0 : index
    %c0_60 = arith.constant 0 : index
    %c0_61 = arith.constant 0 : index
    %144 = vector.load %arg5[%c0_59, %c0_60, %c0_61] : memref<1x4x256xf32, #tpu.memory_space<vmem>>, vector<1x4x256xf32>
    %145 = arith.addf %143, %144 : vector<1x4x256xf32>
    %c3 = arith.constant 3 : index
    %c0_62 = arith.constant 0 : index
    %146 = memref.load %arg1[%c3, %c0_62] : memref<4x3xf32, #tpu.memory_space<smem>>
    %c3_63 = arith.constant 3 : index
    %c1_64 = arith.constant 1 : index
    %147 = memref.load %arg1[%c3_63, %c1_64] : memref<4x3xf32, #tpu.memory_space<smem>>
    %c3_65 = arith.constant 3 : index
    %c2_66 = arith.constant 2 : index
    %148 = memref.load %arg1[%c3_65, %c2_66] : memref<4x3xf32, #tpu.memory_space<smem>>
    %cst_67 = arith.constant dense<0.000000e+00> : vector<1x256xf32>
    %149 = vector.multi_reduction <add>, %145, %cst_67 [1] : vector<1x4x256xf32> to vector<1x256xf32>
    %cst_68 = arith.constant 4.000000e+00 : f32
    %150 = vector.broadcast %cst_68 : f32 to vector<1x256xf32>
    %151 = arith.divf %149, %150 : vector<1x256xf32>
    %152 = tpu.iota {dimensions = array<i32: 1>} : vector<1x256xi32>
    %c0_i32_69 = arith.constant 0 : i32
    %153 = vector.broadcast %c0_i32_69 : i32 to vector<1x256xi32>
    %154 = arith.cmpi eq, %152, %153 : vector<1x256xi32>
    %c1_i32_70 = arith.constant 1 : i32
    %155 = tpu.dynamic_rotate %151 by %c1_i32_70 dim 1 : vector<1x256xf32>, i32 -> vector<1x256xf32>
    %cst_71 = arith.constant 0.000000e+00 : f32
    %156 = vector.broadcast %cst_71 : f32 to vector<1x256xf32>
    %157 = arith.select %154, %156, %155 : vector<1x256xi1>, vector<1x256xf32>
    %c255_i32 = arith.constant 255 : i32
    %158 = vector.broadcast %c255_i32 : i32 to vector<1x256xi32>
    %159 = arith.cmpi eq, %152, %158 : vector<1x256xi32>
    %c255_i32_72 = arith.constant 255 : i32
    %160 = tpu.dynamic_rotate %151 by %c255_i32_72 dim 1 : vector<1x256xf32>, i32 -> vector<1x256xf32>
    %cst_73 = arith.constant 0.000000e+00 : f32
    %161 = vector.broadcast %cst_73 : f32 to vector<1x256xf32>
    %162 = arith.select %159, %161, %160 : vector<1x256xi1>, vector<1x256xf32>
    %163 = vector.broadcast %146 : f32 to vector<1x256xf32>
    %164 = arith.mulf %163, %157 : vector<1x256xf32>
    %165 = vector.broadcast %147 : f32 to vector<1x256xf32>
    %166 = arith.mulf %165, %151 : vector<1x256xf32>
    %167 = arith.addf %164, %166 : vector<1x256xf32>
    %168 = vector.broadcast %148 : f32 to vector<1x256xf32>
    %169 = arith.mulf %168, %162 : vector<1x256xf32>
    %170 = arith.addf %167, %169 : vector<1x256xf32>
    %171 = arith.negf %170 : vector<1x256xf32>
    %172 = math.exp %171 : vector<1x256xf32>
    %cst_74 = arith.constant 1.000000e+00 : f32
    %173 = vector.broadcast %cst_74 : f32 to vector<1x256xf32>
    %174 = arith.addf %173, %172 : vector<1x256xf32>
    %175 = arith.divf %173, %174 : vector<1x256xf32>
    %176 = vector.shape_cast %175 : vector<1x256xf32> to vector<1x1x256xf32>
    %177 = vector.broadcast %176 : vector<1x1x256xf32> to vector<1x4x256xf32>
    %178 = arith.mulf %145, %177 : vector<1x4x256xf32>
    %179 = vector.shape_cast %178 : vector<1x4x256xf32> to vector<4x256xf32>
    %180 = arith.truncf %179 : vector<4x256xf32> to vector<4x256xbf16>
    %c0_75 = arith.constant 0 : index
    %c0_76 = arith.constant 0 : index
    %181 = vector.load %arg12[%c0_75, %c0_76] : memref<256x512xbf16, #tpu.memory_space<vmem>>, vector<256x512xbf16>
    %cst_77 = arith.constant dense<0.000000e+00> : vector<4x512xf32>
    %182 = tpu.matmul %180, %181, %cst_77 {dimension_numbers = #tpu.dot_dimension_numbers<[1], [0], [0], [1], [0, 0, 1, 1], [], []>} : vector<4x256xbf16>, vector<256x512xbf16>, vector<4x512xf32> -> vector<4x512xf32>
    %c0_78 = arith.constant 0 : index
    %c0_79 = arith.constant 0 : index
    %183 = vector.load %arg13[%c0_78, %c0_79] : memref<1x512xf32, #tpu.memory_space<vmem>>, vector<1x512xf32>
    %184 = vector.broadcast %183 : vector<1x512xf32> to vector<4x512xf32>
    %185 = arith.addf %182, %184 : vector<4x512xf32>
    %186 = vector.shape_cast %185 : vector<4x512xf32> to vector<1x4x512xf32>
    %c0_80 = arith.constant 0 : index
    %c0_81 = arith.constant 0 : index
    %c0_82 = arith.constant 0 : index
    %187 = vector.load %arg14[%c0_80, %c0_81, %c0_82] : memref<1x4x512xf32, #tpu.memory_space<vmem>>, vector<1x4x512xf32>
    tpu.vector_store %arg14[%c0_80, %c0_81, %c0_82], %186 {strides = array<i32>} : memref<1x4x512xf32, #tpu.memory_space<vmem>>, vector<1x4x512xf32>,
    return
  }
  func.func @transform_0(%arg0: i32) -> (i32, i32) {
    %c0_i32 = arith.constant 0 : i32
    %c0_i32_0 = arith.constant 0 : i32
    %c0_i32_1 = arith.constant 0 : i32
    return %c0_i32, %c0_i32_0 : i32, i32
  }
  func.func @transform_1(%arg0: i32) -> (i32, i32, i32) {
    %c0_i32 = arith.constant 0 : i32
    %c0_i32_0 = arith.constant 0 : i32
    %c0_i32_1 = arith.constant 0 : i32
    return %arg0, %c0_i32, %c0_i32_0 : i32, i32, i32
  }
  func.func @transform_2(%arg0: i32) -> (i32, i32, i32) {
    %c0_i32 = arith.constant 0 : i32
    %c0_i32_0 = arith.constant 0 : i32
    %c0_i32_1 = arith.constant 0 : i32
    return %arg0, %c0_i32, %c0_i32_0 : i32, i32, i32
  }
  func.func @transform_3(%arg0: i32) -> (i32, i32, i32) {
    %c0_i32 = arith.constant 0 : i32
    %c0_i32_0 = arith.constant 0 : i32
    %c0_i32_1 = arith.constant 0 : i32
    return %arg0, %c0_i32, %c0_i32_0 : i32, i32, i32
  }
  func.func @transform_4(%arg0: i32) -> (i32, i32, i32) {
    %c0_i32 = arith.constant 0 : i32
    %c0_i32_0 = arith.constant 0 : i32
    %c0_i32_1 = arith.constant 0 : i32
    return %arg0, %c0_i32, %c0_i32_0 : i32, i32, i32
  }
  func.func @transform_5(%arg0: i32) -> (i32, i32) {
    %c0_i32 = arith.constant 0 : i32
    %c0_i32_0 = arith.constant 0 : i32
    %c0_i32_1 = arith.constant 0 : i32
    return %c0_i32, %c0_i32_0 : i32, i32
  }
  func.func @transform_6(%arg0: i32) -> (i32, i32) {
    %c0_i32 = arith.constant 0 : i32
    %c0_i32_0 = arith.constant 0 : i32
    %c0_i32_1 = arith.constant 0 : i32
    return %c0_i32, %c0_i32_0 : i32, i32
  }
  func.func @transform_7(%arg0: i32) -> (i32, i32) {
    %c0_i32 = arith.constant 0 : i32
    %c0_i32_0 = arith.constant 0 : i32
    %c0_i32_1 = arith.constant 0 : i32
    return %c0_i32, %c0_i32_0 : i32, i32
  }
  func.func @transform_8(%arg0: i32) -> (i32, i32) {
    %c0_i32 = arith.constant 0 : i32
    %c0_i32_0 = arith.constant 0 : i32
    %c0_i32_1 = arith.constant 0 : i32
    return %c0_i32, %c0_i32_0 : i32, i32
  }
  func.func @transform_9(%arg0: i32) -> (i32, i32) {
    %c0_i32 = arith.constant 0 : i32
    %c0_i32_0 = arith.constant 0 : i32
    %c0_i32_1 = arith.constant 0 : i32
    return %c0_i32, %c0_i32_0 : i32, i32
  }
  func.func @transform_10(%arg0: i32) -> (i32, i32) {
    %c0_i32 = arith.constant 0 : i32
    %c0_i32_0 = arith.constant 0 : i32
    %c0_i32_1 = arith.constant 0 : i32
    return %c0_i32, %c0_i32_0 : i32, i32
  }
  func.func @transform_11(%arg0: i32) -> (i32, i32) {
    %c0_i32 = arith.constant 0 : i32
    %c0_i32_0 = arith.constant 0 : i32
    %c0_i32_1 = arith.constant 0 : i32
    return %c0_i32, %c0_i32_0 : i32, i32
  }
  func.func @transform_12(%arg0: i32) -> (i32, i32) {
    %c0_i32 = arith.constant 0 : i32
    %c0_i32_0 = arith.constant 0 : i32
    %c0_i32_1 = arith.constant 0 : i32
    return %c0_i32, %c0_i32_0 : i32, i32
  }
  func.func @transform_13(%arg0: i32) -> (i32, i32, i32) {
    %c0_i32 = arith.constant 0 : i32
    %c0_i32_0 = arith.constant 0 : i32
    %c0_i32_1 = arith.constant 0 : i32
    return %arg0, %c0_i32, %c0_i32_0 : i32, i32, i32
  }
}

</mosaic_0001>

<llo_original>
// kernel: task_forward.1
$region0: #{task_forward.1}
  #allocation0 [shape = 'u32[]', space=smem, size = 0x4, offset = 0x4, fixed_abs, tag = 'smem constant byte address 0x4 - core index']
  #allocation1 [shape = 'u32[72,128]{1,0:T(1,128)}', space=vmem, size = 0x9000, scoped, tag = 'internal scratch']
  %s0 = inlined_call_operand.vmem [shape: f32[4,3], index: 0, kind: input, shape index: {}]
  %s1 = inlined_call_operand.vmem [shape: f32[2,200,32], index: 1, kind: input, shape index: {}]
  %s2 = inlined_call_operand.vmem [shape: f32[2,40,64], index: 2, kind: input, shape index: {}]
  %s3 = inlined_call_operand.vmem [shape: f32[2,8,128], index: 3, kind: input, shape index: {}]
  %s4 = inlined_call_operand.vmem [shape: f32[2,4,256], index: 4, kind: input, shape index: {}]
  %s5 = inlined_call_operand.vmem [shape: bf16[32,64], index: 5, kind: input, shape index: {}]
  %s6 = inlined_call_operand.vmem [shape: f32[1,64], index: 6, kind: input, shape index: {}]
  %s7 = inlined_call_operand.vmem [shape: bf16[64,128], index: 7, kind: input, shape index: {}]
  %s8 = inlined_call_operand.vmem [shape: f32[1,128], index: 8, kind: input, shape index: {}]
  %s9 = inlined_call_operand.vmem [shape: bf16[128,256], index: 9, kind: input, shape index: {}]
  %s10 = inlined_call_operand.vmem [shape: f32[1,256], index: 10, kind: input, shape index: {}]
  %s11 = inlined_call_operand.vmem [shape: bf16[256,512], index: 11, kind: input, shape index: {}]
  %s12 = inlined_call_operand.vmem [shape: f32[1,512], index: 12, kind: input, shape index: {}]
  %s13 = inlined_call_operand.hbm [shape: f32[2,4,512], index: 13, kind: output, shape index: {}]
  %s14 = sld [smem:[#allocation0]]
  $region89: #{task_forward.1} parent=0
    _
  %s16 = ssub.s32 1, %s14
  %s17 = scalar_select 0, %s16, %s14
  $region1: #{task_forward.1} parent=0
    #allocation2 [shape = 'u8[2048]{0}', space=smem, size = 0x800, scoped, tag = 'input window, operand 0, single buffered']
    #allocation3 [shape = 's32[2]{0}', space=sflag, size = 0x8, scoped, tag = 'scoped memory for task_forward.1']
    #allocation4 [shape = 's32[2]{0}', space=sflag, size = 0x8, scoped, tag = 'scoped memory for task_forward.1']
    #allocation5 [shape = 'u8[16384]{0}', space=vmem, size = 0x4000, scoped, tag = 'output window, operand 0']
    %18 = vsyncpa [#allocation4], 0
    %19 = vsyncpa [#allocation3], 0
    %s20 = scalar_lea.sflag [#allocation3], 1
    %21 = vsyncpa %s20, 0
    loop: start=0, step=1, limit=4
    $region2: #{task_forward.1} parent=1 // loop_pre_header
      _
    $region3: #{task_forward.1} parent=1 // loop_header
      %s23 = sphi 0, %s27
      %p24 = scmp.ge.s32.totalorder %s23, 4
      %s31 = sphi 0, %s31
      %s33 = sphi 0, %s31
      %s34 = sphi 0, %s33
      %s48 = sphi 0, %s34
      %s54 = sphi 0, %s56
      %s57 = sphi 0, %s54
      %s58 = sphi 0, %s57
      %s74 = sphi 0, %s58
      %s80 = sphi 0, %s82
      %s83 = sphi 0, %s80
      %s84 = sphi 0, %s83
      %s100 = sphi 0, %s84
      %s106 = sphi 0, %s108
      %s109 = sphi 0, %s106
      %s110 = sphi 0, %s109
      %s126 = sphi 0, %s110
      %s132 = sphi 0, %s134
      %s135 = sphi 0, %s132
      %s136 = sphi 0, %s135
      %s152 = sphi 0, %s136
      %s156 = sphi 0, %s156
      %s158 = sphi 0, %s156
      %s159 = sphi 0, %s158
      %s173 = sphi 0, %s159
      %s177 = sphi 0, %s177
      %s179 = sphi 0, %s177
      %s180 = sphi 0, %s179
      %s194 = sphi 0, %s180
      %s198 = sphi 0, %s198
      %s200 = sphi 0, %s198
      %s201 = sphi 0, %s200
      %s215 = sphi 0, %s201
      %s219 = sphi 0, %s219
      %s221 = sphi 0, %s219
      %s222 = sphi 0, %s221
      %s236 = sphi 0, %s222
      %s240 = sphi 0, %s240
      %s242 = sphi 0, %s240
      %s243 = sphi 0, %s242
      %s257 = sphi 0, %s243
      %s261 = sphi 0, %s261
      %s263 = sphi 0, %s261
      %s264 = sphi 0, %s263
      %s278 = sphi 0, %s264
      %s282 = sphi 0, %s282
      %s284 = sphi 0, %s282
      %s285 = sphi 0, %s284
      %s299 = sphi 0, %s285
      %s303 = sphi 0, %s303
      %s305 = sphi 0, %s303
      %s306 = sphi 0, %s305
      %s320 = sphi 0, %s306
      %s326 = sphi 0, %s328
      %s329 = sphi 0, %s326
      %s330 = sphi 0, %s329
      %s346 = sphi 0, %s330
    $region4: #{task_forward.1} parent=1 // loop_header_branch
      %26 = sbr.rel (%p24) target = $region8
    $region5: #{task_forward.1} parent=1 // loop_body
      %s28 = ssub.s32 %s23, 1
      %s29 = ssub.s32 %s23, 2
      %s30 = sadd.s32 %s23, 1
      %s32 = sadd.s32 %s31, 1
      %p35 = scmp.eq.s32.totalorder %s23, 1
      %p36 = scmp.ne.s32.totalorder %s31, %s33
      %p37 = scmp.eq.s32.totalorder %s23, 0
      %p38 = por %p36, %p37
      %p39 = scmp.ne.s32.totalorder %s31, %s33
      %p40 = scmp.eq.s32.totalorder %s28, 1
      %p41 = por %p39, %p40
      %p42 = scmp.ne.s32.totalorder %s33, %s34
      %p43 = scmp.eq.s32.totalorder %s28, 0
      %p44 = por %p42, %p43
      %p45 = scmp.ne.s32.totalorder %s33, %s34
      %p46 = scmp.eq.s32.totalorder %s29, 1
      %p47 = por %p45, %p46
      %p49 = scmp.ne.s32.totalorder %s34, %s48
      %p50 = scmp.eq.s32.totalorder %s29, 0
      %p51 = por %p49, %p50
      %s52 = ssub.s32 %s23, %s30
      %p53 = scmp.eq.s32.totalorder %s52, 0
      %s55 = sadd.s32 %s54, 1
      %s56 = scalar_select %p53, %s54, %s55
      %p59 = pneg %p53
      %p60 = scmp.eq.s32.totalorder %s23, 1
      %p61 = por %p59, %p60
      %p62 = scmp.ne.s32.totalorder %s54, %s57
      %p63 = scmp.eq.s32.totalorder %s23, 0
      %p64 = por %p62, %p63
      %p65 = scmp.ne.s32.totalorder %s54, %s57
      %p66 = scmp.eq.s32.totalorder %s28, 1
      %p67 = por %p65, %p66
      %p68 = scmp.ne.s32.totalorder %s57, %s58
      %p69 = scmp.eq.s32.totalorder %s28, 0
      %p70 = por %p68, %p69
      %p71 = scmp.ne.s32.totalorder %s57, %s58
      %p72 = scmp.eq.s32.totalorder %s29, 1
      %p73 = por %p71, %p72
      %p75 = scmp.ne.s32.totalorder %s58, %s74
      %p76 = scmp.eq.s32.totalorder %s29, 0
      %p77 = por %p75, %p76
      %s78 = ssub.s32 %s23, %s30
      %p79 = scmp.eq.s32.totalorder %s78, 0
      %s81 = sadd.s32 %s80, 1
      %s82 = scalar_select %p79, %s80, %s81
      %p85 = pneg %p79
      %p86 = scmp.eq.s32.totalorder %s23, 1
      %p87 = por %p85, %p86
      %p88 = scmp.ne.s32.totalorder %s80, %s83
      %p89 = scmp.eq.s32.totalorder %s23, 0
      %p90 = por %p88, %p89
      %p91 = scmp.ne.s32.totalorder %s80, %s83
      %p92 = scmp.eq.s32.totalorder %s28, 1
      %p93 = por %p91, %p92
      %p94 = scmp.ne.s32.totalorder %s83, %s84
      %p95 = scmp.eq.s32.totalorder %s28, 0
      %p96 = por %p94, %p95
      %p97 = scmp.ne.s32.totalorder %s83, %s84
      %p98 = scmp.eq.s32.totalorder %s29, 1
      %p99 = por %p97, %p98
      %p101 = scmp.ne.s32.totalorder %s84, %s100
      %p102 = scmp.eq.s32.totalorder %s29, 0
      %p103 = por %p101, %p102
      %s104 = ssub.s32 %s23, %s30
      %p105 = scmp.eq.s32.totalorder %s104, 0
      %s107 = sadd.s32 %s106, 1
      %s108 = scalar_select %p105, %s106, %s107
      %p111 = pneg %p105
      %p112 = scmp.eq.s32.totalorder %s23, 1
      %p113 = por %p111, %p112
      %p114 = scmp.ne.s32.totalorder %s106, %s109
      %p115 = scmp.eq.s32.totalorder %s23, 0
      %p116 = por %p114, %p115
      %p117 = scmp.ne.s32.totalorder %s106, %s109
      %p118 = scmp.eq.s32.totalorder %s28, 1
      %p119 = por %p117, %p118
      %p120 = scmp.ne.s32.totalorder %s109, %s110
      %p121 = scmp.eq.s32.totalorder %s28, 0
      %p122 = por %p120, %p121
      %p123 = scmp.ne.s32.totalorder %s109, %s110
      %p124 = scmp.eq.s32.totalorder %s29, 1
      %p125 = por %p123, %p124
      %p127 = scmp.ne.s32.totalorder %s110, %s126
      %p128 = scmp.eq.s32.totalorder %s29, 0
      %p129 = por %p127, %p128
      %s130 = ssub.s32 %s23, %s30
      %p131 = scmp.eq.s32.totalorder %s130, 0
      %s133 = sadd.s32 %s132, 1
      %s134 = scalar_select %p131, %s132, %s133
      %p137 = pneg %p131
      %p138 = scmp.eq.s32.totalorder %s23, 1
      %p139 = por %p137, %p138
      %p140 = scmp.ne.s32.totalorder %s132, %s135
      %p141 = scmp.eq.s32.totalorder %s23, 0
      %p142 = por %p140, %p141
      %p143 = scmp.ne.s32.totalorder %s132, %s135
      %p144 = scmp.eq.s32.totalorder %s28, 1
      %p145 = por %p143, %p144
      %p146 = scmp.ne.s32.totalorder %s135, %s136
      %p147 = scmp.eq.s32.totalorder %s28, 0
      %p148 = por %p146, %p147
      %p149 = scmp.ne.s32.totalorder %s135, %s136
      %p150 = scmp.eq.s32.totalorder %s29, 1
      %p151 = por %p149, %p150
      %p153 = scmp.ne.s32.totalorder %s136, %s152
      %p154 = scmp.eq.s32.totalorder %s29, 0
      %p155 = por %p153, %p154
      %s157 = sadd.s32 %s156, 1
      %p160 = scmp.eq.s32.totalorder %s23, 1
      %p161 = scmp.ne.s32.totalorder %s156, %s158
      %p162 = scmp.eq.s32.totalorder %s23, 0
      %p163 = por %p161, %p162
      %p164 = scmp.ne.s32.totalorder %s156, %s158
      %p165 = scmp.eq.s32.totalorder %s28, 1
      %p166 = por %p164, %p165
      %p167 = scmp.ne.s32.totalorder %s158, %s159
      %p168 = scmp.eq.s32.totalorder %s28, 0
      %p169 = por %p167, %p168
      %p170 = scmp.ne.s32.totalorder %s158, %s159
      %p171 = scmp.eq.s32.totalorder %s29, 1
      %p172 = por %p170, %p171
      %p174 = scmp.ne.s32.totalorder %s159, %s173
      %p175 = scmp.eq.s32.totalorder %s29, 0
      %p176 = por %p174, %p175
      %s178 = sadd.s32 %s177, 1
      %p181 = scmp.eq.s32.totalorder %s23, 1
      %p182 = scmp.ne.s32.totalorder %s177, %s179
      %p183 = scmp.eq.s32.totalorder %s23, 0
      %p184 = por %p182, %p183
      %p185 = scmp.ne.s32.totalorder %s177, %s179
      %p186 = scmp.eq.s32.totalorder %s28, 1
      %p187 = por %p185, %p186
      %p188 = scmp.ne.s32.totalorder %s179, %s180
      %p189 = scmp.eq.s32.totalorder %s28, 0
      %p190 = por %p188, %p189
      %p191 = scmp.ne.s32.totalorder %s179, %s180
      %p192 = scmp.eq.s32.totalorder %s29, 1
      %p193 = por %p191, %p192
      %p195 = scmp.ne.s32.totalorder %s180, %s194
      %p196 = scmp.eq.s32.totalorder %s29, 0
      %p197 = por %p195, %p196
      %s199 = sadd.s32 %s198, 1
      %p202 = scmp.eq.s32.totalorder %s23, 1
      %p203 = scmp.ne.s32.totalorder %s198, %s200
      %p204 = scmp.eq.s32.totalorder %s23, 0
      %p205 = por %p203, %p204
      %p206 = scmp.ne.s32.totalorder %s198, %s200
      %p207 = scmp.eq.s32.totalorder %s28, 1
      %p208 = por %p206, %p207
      %p209 = scmp.ne.s32.totalorder %s200, %s201
      %p210 = scmp.eq.s32.totalorder %s28, 0
      %p211 = por %p209, %p210
      %p212 = scmp.ne.s32.totalorder %s200, %s201
      %p213 = scmp.eq.s32.totalorder %s29, 1
      %p214 = por %p212, %p213
      %p216 = scmp.ne.s32.totalorder %s201, %s215
      %p217 = scmp.eq.s32.totalorder %s29, 0
      %p218 = por %p216, %p217
      %s220 = sadd.s32 %s219, 1
      %p223 = scmp.eq.s32.totalorder %s23, 1
      %p224 = scmp.ne.s32.totalorder %s219, %s221
      %p225 = scmp.eq.s32.totalorder %s23, 0
      %p226 = por %p224, %p225
      %p227 = scmp.ne.s32.totalorder %s219, %s221
      %p228 = scmp.eq.s32.totalorder %s28, 1
      %p229 = por %p227, %p228
      %p230 = scmp.ne.s32.totalorder %s221, %s222
      %p231 = scmp.eq.s32.totalorder %s28, 0
      %p232 = por %p230, %p231
      %p233 = scmp.ne.s32.totalorder %s221, %s222
      %p234 = scmp.eq.s32.totalorder %s29, 1
      %p235 = por %p233, %p234
      %p237 = scmp.ne.s32.totalorder %s222, %s236
      %p238 = scmp.eq.s32.totalorder %s29, 0
      %p239 = por %p237, %p238
      %s241 = sadd.s32 %s240, 1
      %p244 = scmp.eq.s32.totalorder %s23, 1
      %p245 = scmp.ne.s32.totalorder %s240, %s242
      %p246 = scmp.eq.s32.totalorder %s23, 0
      %p247 = por %p245, %p246
      %p248 = scmp.ne.s32.totalorder %s240, %s242
      %p249 = scmp.eq.s32.totalorder %s28, 1
      %p250 = por %p248, %p249
      %p251 = scmp.ne.s32.totalorder %s242, %s243
      %p252 = scmp.eq.s32.totalorder %s28, 0
      %p253 = por %p251, %p252
      %p254 = scmp.ne.s32.totalorder %s242, %s243
      %p255 = scmp.eq.s32.totalorder %s29, 1
      %p256 = por %p254, %p255
      %p258 = scmp.ne.s32.totalorder %s243, %s257
      %p259 = scmp.eq.s32.totalorder %s29, 0
      %p260 = por %p258, %p259
      %s262 = sadd.s32 %s261, 1
      %p265 = scmp.eq.s32.totalorder %s23, 1
      %p266 = scmp.ne.s32.totalorder %s261, %s263
      %p267 = scmp.eq.s32.totalorder %s23, 0
      %p268 = por %p266, %p267
      %p269 = scmp.ne.s32.totalorder %s261, %s263
      %p270 = scmp.eq.s32.totalorder %s28, 1
      %p271 = por %p269, %p270
      %p272 = scmp.ne.s32.totalorder %s263, %s264
      %p273 = scmp.eq.s32.totalorder %s28, 0
      %p274 = por %p272, %p273
      %p275 = scmp.ne.s32.totalorder %s263, %s264
      %p276 = scmp.eq.s32.totalorder %s29, 1
      %p277 = por %p275, %p276
      %p279 = scmp.ne.s32.totalorder %s264, %s278
      %p280 = scmp.eq.s32.totalorder %s29, 0
      %p281 = por %p279, %p280
      %s283 = sadd.s32 %s282, 1
      %p286 = scmp.eq.s32.totalorder %s23, 1
      %p287 = scmp.ne.s32.totalorder %s282, %s284
      %p288 = scmp.eq.s32.totalorder %s23, 0
      %p289 = por %p287, %p288
      %p290 = scmp.ne.s32.totalorder %s282, %s284
      %p291 = scmp.eq.s32.totalorder %s28, 1
      %p292 = por %p290, %p291
      %p293 = scmp.ne.s32.totalorder %s284, %s285
      %p294 = scmp.eq.s32.totalorder %s28, 0
      %p295 = por %p293, %p294
      %p296 = scmp.ne.s32.totalorder %s284, %s285
      %p297 = scmp.eq.s32.totalorder %s29, 1
      %p298 = por %p296, %p297
      %p300 = scmp.ne.s32.totalorder %s285, %s299
      %p301 = scmp.eq.s32.totalorder %s29, 0
      %p302 = por %p300, %p301
      %s304 = sadd.s32 %s303, 1
      %p307 = scmp.eq.s32.totalorder %s23, 1
      %p308 = scmp.ne.s32.totalorder %s303, %s305
      %p309 = scmp.eq.s32.totalorder %s23, 0
      %p310 = por %p308, %p309
      %p311 = scmp.ne.s32.totalorder %s303, %s305
      %p312 = scmp.eq.s32.totalorder %s28, 1
      %p313 = por %p311, %p312
      %p314 = scmp.ne.s32.totalorder %s305, %s306
      %p315 = scmp.eq.s32.totalorder %s28, 0
      %p316 = por %p314, %p315
      %p317 = scmp.ne.s32.totalorder %s305, %s306
      %p318 = scmp.eq.s32.totalorder %s29, 1
      %p319 = por %p317, %p318
      %p321 = scmp.ne.s32.totalorder %s306, %s320
      %p322 = scmp.eq.s32.totalorder %s29, 0
      %p323 = por %p321, %p322
      %s324 = ssub.s32 %s23, %s30
      %p325 = scmp.eq.s32.totalorder %s324, 0
      %s327 = sadd.s32 %s326, 1
      %s328 = scalar_select %p325, %s326, %s327
      %p331 = pneg %p325
      %p332 = scmp.eq.s32.totalorder %s23, 1
      %p333 = por %p331, %p332
      %p334 = scmp.ne.s32.totalorder %s326, %s329
      %p335 = scmp.eq.s32.totalorder %s23, 0
      %p336 = por %p334, %p335
      %p337 = scmp.ne.s32.totalorder %s326, %s329
      %p338 = scmp.eq.s32.totalorder %s28, 1
      %p339 = por %p337, %p338
      %p340 = scmp.ne.s32.totalorder %s329, %s330
      %p341 = scmp.eq.s32.totalorder %s28, 0
      %p342 = por %p340, %p341
      %p343 = scmp.ne.s32.totalorder %s329, %s330
      %p344 = scmp.eq.s32.totalorder %s29, 1
      %p345 = por %p343, %p344
      %p347 = scmp.ne.s32.totalorder %s330, %s346
      %p348 = scmp.eq.s32.totalorder %s29, 0
      %p349 = por %p347, %p348
      %p350 = scmp.le.s32.totalorder 1, %s23
      %p351 = scmp.lt.s32.totalorder %s23, 3
      %p352 = pnand %p350, %p351
      %p353 = pneg %p352
      // Predicated region
      $region9: #{task_forward.1} parent=5 // pred_check
        _
      $region10: #{task_forward.1} parent=5 // pred_check_branch
        %355 = sbr.rel (%p352) target = $region12
      $region11: #{task_forward.1} parent=5 // pred_region
        %s356 = ssub.s32 %s23, 1
        // Predicated region
        $region13: #{task_forward.1} parent=11 // pred_check
          %p357 = pneg %p44
        $region14: #{task_forward.1} parent=11 // pred_check_branch
          %359 = sbr.rel (%p357) target = $region16
        $region15: #{task_forward.1} parent=11 // pred_region
          %361 = vsyncadd [#allocation4], 0
          %s363 = sshll.u32 %s0, 4
          %s364 = int_to_ptr.vmem [resolvable:$true] %s363
          %366 = dma.vmem_to_smem %s364, 64, [#allocation2], [#allocation4]
        $region16: #{task_forward.1} parent=11 // pred_fallthru
          _
        // Predicated region
        $region17: #{task_forward.1} parent=11 // pred_check
          %p367 = pneg %p169
        $region18: #{task_forward.1} parent=11 // pred_check_branch
          %369 = sbr.rel (%p367) target = $region20
        $region19: #{task_forward.1} parent=11 // pred_region
          _
        $region20: #{task_forward.1} parent=11 // pred_fallthru
          _
        // Predicated region
        $region21: #{task_forward.1} parent=11 // pred_check
          %p370 = pneg %p190
        $region22: #{task_forward.1} parent=11 // pred_check_branch
          %372 = sbr.rel (%p370) target = $region24
        $region23: #{task_forward.1} parent=11 // pred_region
          _
        $region24: #{task_forward.1} parent=11 // pred_fallthru
          _
        // Predicated region
        $region25: #{task_forward.1} parent=11 // pred_check
          %p373 = pneg %p211
        $region26: #{task_forward.1} parent=11 // pred_check_branch
          %375 = sbr.rel (%p373) target = $region28
        $region27: #{task_forward.1} parent=11 // pred_region
          _
        $region28: #{task_forward.1} parent=11 // pred_fallthru
          _
        // Predicated region
        $region29: #{task_forward.1} parent=11 // pred_check
          %p376 = pneg %p232
        $region30: #{task_forward.1} parent=11 // pred_check_branch
          %378 = sbr.rel (%p376) target = $region32
        $region31: #{task_forward.1} parent=11 // pred_region
          _
        $region32: #{task_forward.1} parent=11 // pred_fallthru
          _
        // Predicated region
        $region33: #{task_forward.1} parent=11 // pred_check
          %p379 = pneg %p253
        $region34: #{task_forward.1} parent=11 // pred_check_branch
          %381 = sbr.rel (%p379) target = $region36
        $region35: #{task_forward.1} parent=11 // pred_region
          _
        $region36: #{task_forward.1} parent=11 // pred_fallthru
          _
        // Predicated region
        $region37: #{task_forward.1} parent=11 // pred_check
          %p382 = pneg %p274
        $region38: #{task_forward.1} parent=11 // pred_check_branch
          %384 = sbr.rel (%p382) target = $region40
        $region39: #{task_forward.1} parent=11 // pred_region
          _
        $region40: #{task_forward.1} parent=11 // pred_fallthru
          _
        // Predicated region
        $region41: #{task_forward.1} parent=11 // pred_check
          %p385 = pneg %p295
        $region42: #{task_forward.1} parent=11 // pred_check_branch
          %387 = sbr.rel (%p385) target = $region44
        $region43: #{task_forward.1} parent=11 // pred_region
          _
        $region44: #{task_forward.1} parent=11 // pred_fallthru
          _
        // Predicated region
        $region45: #{task_forward.1} parent=11 // pred_check
          %p388 = pneg %p316
        $region46: #{task_forward.1} parent=11 // pred_check_branch
          %390 = sbr.rel (%p388) target = $region48
        $region47: #{task_forward.1} parent=11 // pred_region
          _
        $region48: #{task_forward.1} parent=11 // pred_fallthru
          _
      $region12: #{task_forward.1} parent=5 // pred_fallthru
        _
      %p391 = scmp.lt.s32.totalorder %s23, 2
      // Predicated region
      $region49: #{task_forward.1} parent=5 // pred_check
        %p392 = pneg %p391
      $region50: #{task_forward.1} parent=5 // pred_check_branch
        %394 = sbr.rel (%p392) target = $region52
      $region51: #{task_forward.1} parent=5 // pred_region
        // Predicated region
        $region53: #{task_forward.1} parent=51 // pred_check
          %p395 = pneg %p64
        $region54: #{task_forward.1} parent=51 // pred_check_branch
          %397 = sbr.rel (%p395) target = $region56
        $region55: #{task_forward.1} parent=51 // pred_region
          %p398 = scmp.lt.s32.totalorder %s23, 1
          %s399 = scalar_select %p398, %s23, 1
          %s400 = smul.addr %s399, 25
          %s401 = smul.addr %s400, 8
          %s402 = scalar_lea.vmem %s1, %s401
        $region56: #{task_forward.1} parent=51 // pred_fallthru
          _
        // Predicated region
        $region57: #{task_forward.1} parent=51 // pred_check
          %p403 = pneg %p90
        $region58: #{task_forward.1} parent=51 // pred_check_branch
          %405 = sbr.rel (%p403) target = $region60
        $region59: #{task_forward.1} parent=51 // pred_region
          %p406 = scmp.lt.s32.totalorder %s23, 1
          %s407 = scalar_select %p406, %s23, 1
          %s408 = smul.addr %s407, 5
          %s409 = smul.addr %s408, 8
          %s410 = scalar_lea.vmem %s2, %s409
        $region60: #{task_forward.1} parent=51 // pred_fallthru
          _
        // Predicated region
        $region61: #{task_forward.1} parent=51 // pred_check
          %p411 = pneg %p116
        $region62: #{task_forward.1} parent=51 // pred_check_branch
          %413 = sbr.rel (%p411) target = $region64
        $region63: #{task_forward.1} parent=51 // pred_region
          %p414 = scmp.lt.s32.totalorder %s23, 1
          %s415 = scalar_select %p414, %s23, 1
          %s416 = smul.addr %s415, 8
          %s417 = scalar_lea.vmem %s3, %s416
        $region64: #{task_forward.1} parent=51 // pred_fallthru
          _
        // Predicated region
        $region65: #{task_forward.1} parent=51 // pred_check
          %p418 = pneg %p142
        $region66: #{task_forward.1} parent=51 // pred_check_branch
          %420 = sbr.rel (%p418) target = $region68
        $region67: #{task_forward.1} parent=51 // pred_region
          %p421 = scmp.lt.s32.totalorder %s23, 1
          %s422 = scalar_select %p421, %s23, 1
          %s423 = smul.addr %s422, 2
          %s424 = smul.addr %s423, 4
          %s425 = scalar_lea.vmem %s4, %s424
        $region68: #{task_forward.1} parent=51 // pred_fallthru
          _
      $region52: #{task_forward.1} parent=5 // pred_fallthru
        _
      %p426 = scmp.le.s32.totalorder 1, %s23
      %p427 = scmp.lt.s32.totalorder %s23, 3
      %p428 = pnand %p426, %p427
      %p429 = pneg %p428
      // Predicated region
      $region69: #{task_forward.1} parent=5 // pred_check
        _
      $region70: #{task_forward.1} parent=5 // pred_check_branch
        %431 = sbr.rel (%p428) target = $region72
      $region71: #{task_forward.1} parent=5 // pred_region
        %s432 = ssub.s32 %s23, 1
        // Predicated region
        $region73: #{task_forward.1} parent=71 // pred_check
          %p433 = pneg %p44
        $region74: #{task_forward.1} parent=71 // pred_check_branch
          %435 = sbr.rel (%p433) target = $region76
        $region75: #{task_forward.1} parent=71 // pred_region
          %437 = dma.done [#allocation4], 64
        $region76: #{task_forward.1} parent=71 // pred_fallthru
          _
        %438 = sfence
        %p439 = pneg %p44
        %p440 = pneg %p41
        %p441 = scmp.lt.s32.totalorder %s28, 1
        %s442 = scalar_select %p441, %s28, 1
        %s443 = smul.addr %s442, 25
        %s444 = smul.addr %s443, 8
        %s445 = scalar_lea.vmem %s1, %s444
        %p446 = pneg %p70
        %p447 = pneg %p67
        %p448 = scmp.lt.s32.totalorder %s28, 1
        %s449 = scalar_select %p448, %s28, 1
        %s450 = smul.addr %s449, 5
        %s451 = smul.addr %s450, 8
        %s452 = scalar_lea.vmem %s2, %s451
        %p453 = pneg %p96
        %p454 = pneg %p93
        %p455 = scmp.lt.s32.totalorder %s28, 1
        %s456 = scalar_select %p455, %s28, 1
        %s457 = smul.addr %s456, 8
        %s458 = scalar_lea.vmem %s3, %s457
        %p459 = pneg %p122
        %p460 = pneg %p119
        %p461 = scmp.lt.s32.totalorder %s28, 1
        %s462 = scalar_select %p461, %s28, 1
        %s463 = smul.addr %s462, 2
        %s464 = smul.addr %s463, 4
        %s465 = scalar_lea.vmem %s4, %s464
        %p466 = pneg %p148
        %p467 = pneg %p145
        %p468 = pneg %p169
        %p469 = pneg %p166
        %p470 = pneg %p190
        %p471 = pneg %p187
        %p472 = pneg %p211
        %p473 = pneg %p208
        %p474 = pneg %p232
        %p475 = pneg %p229
        %p476 = pneg %p253
        %p477 = pneg %p250
        %p478 = pneg %p274
        %p479 = pneg %p271
        %p480 = pneg %p295
        %p481 = pneg %p292
        %p482 = pneg %p316
        %p483 = pneg %p313
        %p484 = pneg %p342
        %p485 = pneg %p339
        %s486 = sand.u32 %s329, 1
        %s487 = scalar_lea.sflag [#allocation3], %s486
        %s488 = sand.u32 %s329, 1
        %s489 = smul.addr %s488, 16
        %s490 = scalar_lea.vmem [#allocation5], %s489
        %p491 = scmp.lt.s32.totalorder %s28, 1
        %s492 = scalar_select %p491, %s28, 1
        %s493 = smul.addr %s492, 25
        %s494 = smul.addr %s493, 8
        %s495 = scalar_lea.vmem %s1, %s494
        %p496 = scmp.lt.s32.totalorder %s28, 1
        %s497 = scalar_select %p496, %s28, 1
        %s498 = smul.addr %s497, 5
        %s499 = smul.addr %s498, 8
        %s500 = scalar_lea.vmem %s2, %s499
        %p501 = scmp.lt.s32.totalorder %s28, 1
        %s502 = scalar_select %p501, %s28, 1
        %s503 = smul.addr %s502, 8
        %s504 = scalar_lea.vmem %s3, %s503
        %p505 = scmp.lt.s32.totalorder %s28, 1
        %s506 = scalar_select %p505, %s28, 1
        %s507 = smul.addr %s506, 2
        %s508 = smul.addr %s507, 4
        %s509 = scalar_lea.vmem %s4, %s508
        %v511 = vld [vmem:[%s495] sm:$0xff]
        %v512 = vld [vmem:[%s495 + $0x8] sm:$0xff]
        %v513 = vld [vmem:[%s495 + $0x10] sm:$0xff]
        %v514 = vld [vmem:[%s495 + $0x18] sm:$0xff]
        %v515 = vld [vmem:[%s495 + $0x20] sm:$0xff]
        %v516 = vld [vmem:[%s495 + $0x28] sm:$0xff]
        %v517 = vld [vmem:[%s495 + $0x30] sm:$0xff]
        %v518 = vld [vmem:[%s495 + $0x38] sm:$0xff]
        %v519 = vld [vmem:[%s495 + $0x40] sm:$0xff]
        %v520 = vld [vmem:[%s495 + $0x48] sm:$0xff]
        %v521 = vld [vmem:[%s495 + $0x50] sm:$0xff]
        %v522 = vld [vmem:[%s495 + $0x58] sm:$0xff]
        %v523 = vld [vmem:[%s495 + $0x60] sm:$0xff]
        %v524 = vld [vmem:[%s495 + $0x68] sm:$0xff]
        %v525 = vld [vmem:[%s495 + $0x70] sm:$0xff]
        %v526 = vld [vmem:[%s495 + $0x78] sm:$0xff]
        %v527 = vld [vmem:[%s495 + $0x80] sm:$0xff]
        %v528 = vld [vmem:[%s495 + $0x88] sm:$0xff]
        %v529 = vld [vmem:[%s495 + $0x90] sm:$0xff]
        %v530 = vld [vmem:[%s495 + $0x98] sm:$0xff]
        %v531 = vld [vmem:[%s495 + $0xa0] sm:$0xff]
        %v532 = vld [vmem:[%s495 + $0xa8] sm:$0xff]
        %v533 = vld [vmem:[%s495 + $0xb0] sm:$0xff]
        %v534 = vld [vmem:[%s495 + $0xb8] sm:$0xff]
        %v535 = vld [vmem:[%s495 + $0xc0] sm:$0xff]
        %s536 = sld [smem:[#allocation2]]
        %s537 = sld [smem:[#allocation2 + $0x1]]
        %s538 = sld [smem:[#allocation2 + $0x2]]
        %vm539 = vcmask 261120
        %v540 = vsel %vm539, %v511, 0.0
        %v541 = vsel %vm539, %v512, 0.0
        %v542 = vadd.f32 %v540, %v541
        %v543 = vsel %vm539, %v513, 0.0
        %v544 = vadd.f32 %v542, %v543
        %v545 = vsel %vm539, %v514, 0.0
        %v546 = vadd.f32 %v544, %v545
        %v547 = vsel %vm539, %v515, 0.0
        %v548 = vadd.f32 %v546, %v547
        %v549 = vsel %vm539, %v516, 0.0
        %v550 = vadd.f32 %v548, %v549
        %v551 = vsel %vm539, %v517, 0.0
        %v552 = vadd.f32 %v550, %v551
        %v553 = vsel %vm539, %v518, 0.0
        %v554 = vadd.f32 %v552, %v553
        %v555 = vsel %vm539, %v519, 0.0
        %v556 = vadd.f32 %v554, %v555
        %v557 = vsel %vm539, %v520, 0.0
        %v558 = vadd.f32 %v556, %v557
        %v559 = vsel %vm539, %v521, 0.0
        %v560 = vadd.f32 %v558, %v559
        %v561 = vsel %vm539, %v522, 0.0
        %v562 = vadd.f32 %v560, %v561
        %v563 = vsel %vm539, %v523, 0.0
        %v564 = vadd.f32 %v562, %v563
        %v565 = vsel %vm539, %v524, 0.0
        %v566 = vadd.f32 %v564, %v565
        %v567 = vsel %vm539, %v525, 0.0
        %v568 = vadd.f32 %v566, %v567
        %v569 = vsel %vm539, %v526, 0.0
        %v570 = vadd.f32 %v568, %v569
        %v571 = vsel %vm539, %v527, 0.0
        %v572 = vadd.f32 %v570, %v571
        %v573 = vsel %vm539, %v528, 0.0
        %v574 = vadd.f32 %v572, %v573
        %v575 = vsel %vm539, %v529, 0.0
        %v576 = vadd.f32 %v574, %v575
        %v577 = vsel %vm539, %v530, 0.0
        %v578 = vadd.f32 %v576, %v577
        %v579 = vsel %vm539, %v531, 0.0
        %v580 = vadd.f32 %v578, %v579
        %v581 = vsel %vm539, %v532, 0.0
        %v582 = vadd.f32 %v580, %v581
        %v583 = vsel %vm539, %v533, 0.0
        %v584 = vadd.f32 %v582, %v583
        %v585 = vsel %vm539, %v534, 0.0
        %v586 = vadd.f32 %v584, %v585
        %v587 = vsel %vm539, %v535, 0.0
        %v588 = vadd.f32 %v586, %v587
        %v589 = vrot.slane %v588, 4
        %v590 = vadd.f32 %v588, %v589
        %v591 = vrot.slane %v590, 2
        %v592 = vadd.f32 %v590, %v591
        %v593 = vrot.slane %v592, 1
        %v594 = vadd.f32 %v592, %v593
        %v595 = vrcp.pop 200.0
        %v596 = vmul.f32 200.0, %v595
        %v597 = vsub.f32 1.0, %v596
        %v598 = vmul.f32 %v595, %v597
        %v599 = vadd.f32 %v595, %v598
        %vm600 = vweird.f32 %v595
        %v601 = vsel %vm600, %v595, %v599
        %v602 = vmul.f32 %v594, %v601
        %v603 = vlaneseq
        %v604 = vshrl.u32 %v603, 7
        %v605 = vadd.s32 %v604, 8
        %v606 = vadd.s32 %v604, 16
        %v607 = vadd.s32 %v604, 24
        %v608 = vlaneseq
        %v609 = vand.u32 %v608, 127
        %v610 = vsub.s32 %v609, 1
        %vm611 = vcmp.eq.s32.totalorder %v604, %v610
        %vm612 = vcmp.eq.s32.totalorder %v605, %v610
        %vm613 = vcmp.eq.s32.totalorder %v606, %v610
        %vm614 = vcmp.eq.s32.totalorder %v607, %v610
        %v615 = vsel %vm611, 1, 0
        %v616 = vsel %vm612, 1, 0
        %v617 = vsel %vm613, 1, 0
        %v618 = vsel %vm614, 1, 0
        %v619 = vcvt.s32.f32 %v615
        %v620 = vcvt.s32.f32 %v616
        %v621 = vcvt.s32.f32 %v617
        %v622 = vcvt.s32.f32 %v618
        %v623 = vstv %s536
        %v624 = vmul.f32 %v623, %v619
        %v625 = vmul.f32 %v623, %v620
        %v626 = vmul.f32 %v623, %v621
        %v627 = vmul.f32 %v623, %v622
        %vm628 = vcmp.eq.s32.totalorder %v604, %v609
        %vm629 = vcmp.eq.s32.totalorder %v605, %v609
        %vm630 = vcmp.eq.s32.totalorder %v606, %v609
        %vm631 = vcmp.eq.s32.totalorder %v607, %v609
        %v632 = vsel %vm628, 1, 0
        %v633 = vsel %vm629, 1, 0
        %v634 = vsel %vm630, 1, 0
        %v635 = vsel %vm631, 1, 0
        %v636 = vcvt.s32.f32 %v632
        %v637 = vcvt.s32.f32 %v633
        %v638 = vcvt.s32.f32 %v634
        %v639 = vcvt.s32.f32 %v635
        %v640 = vstv %s537
        %v641 = vmul.f32 %v640, %v636
        %v642 = vmul.f32 %v640, %v637
        %v643 = vmul.f32 %v640, %v638
        %v644 = vmul.f32 %v640, %v639
        %v645 = vadd.f32 %v624, %v641
        %v646 = vadd.f32 %v625, %v642
        %v647 = vadd.f32 %v626, %v643
        %v648 = vadd.f32 %v627, %v644
        %v649 = vadd.s32 %v609, 1
        %vm650 = vcmp.eq.s32.totalorder %v604, %v649
        %vm651 = vcmp.eq.s32.totalorder %v605, %v649
        %vm652 = vcmp.eq.s32.totalorder %v606, %v649
        %vm653 = vcmp.eq.s32.totalorder %v607, %v649
        %v654 = vsel %vm650, 1, 0
        %v655 = vsel %vm651, 1, 0
        %v656 = vsel %vm652, 1, 0
        %v657 = vsel %vm653, 1, 0
        %v658 = vcvt.s32.f32 %v654
        %v659 = vcvt.s32.f32 %v655
        %v660 = vcvt.s32.f32 %v656
        %v661 = vcvt.s32.f32 %v657
        %v662 = vstv %s538
        %v663 = vmul.f32 %v662, %v658
        %v664 = vmul.f32 %v662, %v659
        %v665 = vmul.f32 %v662, %v660
        %v666 = vmul.f32 %v662, %v661
        %v667 = vadd.f32 %v645, %v663
        %v668 = vadd.f32 %v646, %v664
        %v669 = vadd.f32 %v647, %v665
        %v670 = vadd.f32 %v648, %v666
        %v672 = vsel %vm539, %v602, 0
        %674 = vmatpush.msra.mxu0 0.0
        %675 = vmatpush.msra.mxu0 0.0
        %676 = vmatpush.msra.mxu0 0.0
        %677 = vmatpush.msra.mxu0 0.0
        %678 = vmatpush.msra.mxu0 0.0
        %679 = vmatpush.msra.mxu0 0.0
        %680 = vmatpush.msra.mxu0 0.0
        %681 = vmatpush.msra.mxu0 0.0
        %682 = vmatpush.msra.mxu0 0.0
        %683 = vmatpush.msra.mxu0 0.0
        %684 = vmatpush.msra.mxu0 0.0
        %685 = vmatpush.msra.mxu0 0.0
        %686 = vmatpush.msra.mxu0 %v670
        %687 = vmatpush.msra.mxu0 %v669
        %688 = vmatpush.msra.mxu0 %v668
        %689 = vmatpush.msra.mxu0 %v667
        %690 = vmatmul.f32.gmra.mxu0 %v672
        %v691 = vpop.f32.mrf.mxu0
        %v692 = vadd.f32 0.0, %v691
        %693 = vdwg.mxu0
        %v694 = vxor.u32 %v692, 2147483648
        %v695 = vmul.f32 %v694, 1.442695
        %v696 = vpow.pop %v695
        %v697 = vadd.f32 %v696, 1.0
        %v698 = vrcp.pop %v697
        %v699 = vmul.f32 %v697, %v698
        %v700 = vsub.f32 1.0, %v699
        %v701 = vmul.f32 %v698, %v700
        %v702 = vadd.f32 %v698, %v701
        %vm703 = vweird.f32 %v697
        %vm704 = vweird.f32 %v698
        %vm705 = vmor %vm703, %vm704
        %v706 = vsel %vm705, %v698, %v702
        %v707 = vand.u32 2147483647, %v697
        %vm708 = vcmp.eq.f32.partialorder %v707, 8.507059e+37
        %v709 = vand.u32 %v697, 2147483648
        %v710 = vor.u32 1.1754944e-38, %v709
        %v711 = vsel %vm708, %v710, %v706
        %v712 = vmul.f32 1.0, %v711
        %v713 = vperm.slane %v712, 0
        %v714 = vmul.f32 %v511, %v713
        %v715 = vmul.f32 %v512, %v713
        %v716 = vmul.f32 %v513, %v713
        %v717 = vmul.f32 %v514, %v713
        %v718 = vmul.f32 %v515, %v713
        %v719 = vmul.f32 %v516, %v713
        %v720 = vmul.f32 %v517, %v713
        %v721 = vmul.f32 %v518, %v713
        %v722 = vmul.f32 %v519, %v713
        %v723 = vmul.f32 %v520, %v713
        %v724 = vmul.f32 %v521, %v713
        %v725 = vmul.f32 %v522, %v713
        %v726 = vmul.f32 %v523, %v713
        %v727 = vmul.f32 %v524, %v713
        %v728 = vmul.f32 %v525, %v713
        %v729 = vmul.f32 %v526, %v713
        %v730 = vmul.f32 %v527, %v713
        %v731 = vmul.f32 %v528, %v713
        %v732 = vmul.f32 %v529, %v713
        %v733 = vmul.f32 %v530, %v713
        %v734 = vmul.f32 %v531, %v713
        %v735 = vmul.f32 %v532, %v713
        %v736 = vmul.f32 %v533, %v713
        %v737 = vmul.f32 %v534, %v713
        %v738 = vmul.f32 %v535, %v713
        %v739 = vpack.c.bf16 %v715, %v714
        %v740 = vpack.c.bf16 %v717, %v716
        %v741 = vpack.c.bf16 %v719, %v718
        %v742 = vpack.c.bf16 %v721, %v720
        %v743 = vpack.c.bf16 %v723, %v722
        %v744 = vpack.c.bf16 %v725, %v724
        %v745 = vpack.c.bf16 %v727, %v726
        %v746 = vpack.c.bf16 %v729, %v728
        %v747 = vpack.c.bf16 %v731, %v730
        %v748 = vpack.c.bf16 %v733, %v732
        %v749 = vpack.c.bf16 %v735, %v734
        %v750 = vpack.c.bf16 %v737, %v736
        %v751 = vpack.c.bf16 %v738, %v738
        %v752 = vld [vmem:[%s5] sm:$0xf]
        %v753 = vld [vmem:[%s5 + $0x4] sm:$0xf]
        %v754 = vld [vmem:[%s5 + $0x8] sm:$0xf]
        %v755 = vld [vmem:[%s5 + $0xc] sm:$0xf]
        %v756 = vld [vmem:[%s6] sm:$0x1]
        %v758 = vperm.slane %v756, 0
        %v764 = vunpack.c.l.b16 %v752
        %v765 = vunpack.c.l.b16 %v753
        %v766 = vunpack.c.l.b16 %v754
        %v767 = vunpack.c.l.b16 %v755
        %v768 = vpack.c.b16 %v765, %v764
        %v769 = vpack.c.b16 %v767, %v766
        %v773 = vsel %vm539, %v739, 0
        %v776 = vsel %vm539, %v740, 0
        %v779 = vsel %vm539, %v741, 0
        %v782 = vsel %vm539, %v742, 0
        %v785 = vsel %vm539, %v743, 0
        %v788 = vsel %vm539, %v744, 0
        %v791 = vsel %vm539, %v745, 0
        %v794 = vsel %vm539, %v746, 0
        %v797 = vsel %vm539, %v747, 0
        %v800 = vsel %vm539, %v748, 0
        %v803 = vsel %vm539, %v749, 0
        %v806 = vsel %vm539, %v750, 0
        %v809 = vsel %vm539, %v751, 0
        %811 = vmatpush.bf16.msra.mxu0 0
        %812 = vmatpush.bf16.msra.mxu0 0
        %813 = vmatpush.bf16.msra.mxu0 0
        %814 = vmatpush.bf16.msra.mxu0 0
        %815 = vmatpush.bf16.msra.mxu0 0
        %816 = vmatpush.bf16.msra.mxu0 0
        %817 = vmatpush.bf16.msra.mxu0 %v769
        %818 = vmatpush.bf16.msra.mxu0 %v768
        %819 = vmatmul.bf16.gmra.mxu0 %v773
        %v820 = vpop.f32.mrf.mxu0
        %v821 = vadd.f32 %v758, %v820
        %v822 = vpop.f32.mrf.mxu0
        %v823 = vadd.f32 %v758, %v822
        %824 = vmatmul.bf16.gmra.mxu0 %v776
        %v825 = vpop.f32.mrf.mxu0
        %v826 = vadd.f32 %v758, %v825
        %v827 = vpop.f32.mrf.mxu0
        %v828 = vadd.f32 %v758, %v827
        %829 = vmatmul.bf16.gmra.mxu0 %v779
        %v830 = vpop.f32.mrf.mxu0
        %v831 = vadd.f32 %v758, %v830
        %v832 = vpop.f32.mrf.mxu0
        %v833 = vadd.f32 %v758, %v832
        %834 = vmatmul.bf16.gmra.mxu0 %v782
        %v835 = vpop.f32.mrf.mxu0
        %v836 = vadd.f32 %v758, %v835
        %v837 = vpop.f32.mrf.mxu0
        %v838 = vadd.f32 %v758, %v837
        %839 = vmatmul.bf16.gmra.mxu0 %v785
        %v840 = vpop.f32.mrf.mxu0
        %v841 = vadd.f32 %v758, %v840
        %v842 = vpop.f32.mrf.mxu0
        %v843 = vadd.f32 %v758, %v842
        %844 = vmatmul.bf16.gmra.mxu0 %v788
        %v845 = vpop.f32.mrf.mxu0
        %v846 = vadd.f32 %v758, %v845
        %v847 = vpop.f32.mrf.mxu0
        %v848 = vadd.f32 %v758, %v847
        %849 = vmatmul.bf16.gmra.mxu0 %v791
        %v850 = vpop.f32.mrf.mxu0
        %v851 = vadd.f32 %v758, %v850
        %v852 = vpop.f32.mrf.mxu0
        %v853 = vadd.f32 %v758, %v852
        %854 = vmatmul.bf16.gmra.mxu0 %v794
        %v855 = vpop.f32.mrf.mxu0
        %v856 = vadd.f32 %v758, %v855
        %v857 = vpop.f32.mrf.mxu0
        %v858 = vadd.f32 %v758, %v857
        %859 = vmatmul.bf16.gmra.mxu0 %v797
        %v860 = vpop.f32.mrf.mxu0
        %v861 = vadd.f32 %v758, %v860
        %v862 = vpop.f32.mrf.mxu0
        %v863 = vadd.f32 %v758, %v862
        %864 = vmatmul.bf16.gmra.mxu0 %v800
        %v865 = vpop.f32.mrf.mxu0
        %v866 = vadd.f32 %v758, %v865
        %v867 = vpop.f32.mrf.mxu0
        %v868 = vadd.f32 %v758, %v867
        %869 = vmatmul.bf16.gmra.mxu0 %v803
        %v870 = vpop.f32.mrf.mxu0
        %v871 = vadd.f32 %v758, %v870
        %v872 = vpop.f32.mrf.mxu0
        %v873 = vadd.f32 %v758, %v872
        %874 = vmatmul.bf16.gmra.mxu0 %v806
        %v875 = vpop.f32.mrf.mxu0
        %v876 = vadd.f32 %v758, %v875
        %v877 = vpop.f32.mrf.mxu0
        %v878 = vadd.f32 %v758, %v877
        %879 = vmatmul.bf16.gmra.mxu0 %v809
        %v880 = vpop.f32.mrf.mxu0
        %v881 = vadd.f32 %v758, %v880
        %v882 = vpop.f32.mrf.mxu0
        %883 = vdwg.mxu0
        %v909 = vrot.slane %v821, 1
        %v910 = vrot.slane %v821, 2
        %v911 = vrot.slane %v821, 3
        %v912 = vrot.slane %v821, 4
        %v913 = vrot.slane %v821, 5
        %v914 = vrot.slane %v821, 6
        %v915 = vrot.slane %v821, 7
        %v916 = vrot.slane %v823, 1
        %v917 = vrot.slane %v823, 2
        %v918 = vrot.slane %v823, 3
        %v919 = vrot.slane %v823, 4
        %v920 = vrot.slane %v823, 5
        %v921 = vrot.slane %v823, 6
        %v922 = vrot.slane %v823, 7
        %v923 = vrot.slane %v826, 1
        %v924 = vrot.slane %v826, 2
        %v925 = vrot.slane %v826, 3
        %v926 = vrot.slane %v826, 4
        %v927 = vrot.slane %v826, 5
        %v928 = vrot.slane %v826, 6
        %v929 = vrot.slane %v826, 7
        %v930 = vrot.slane %v828, 1
        %v931 = vrot.slane %v828, 2
        %v932 = vrot.slane %v828, 3
        %v933 = vrot.slane %v828, 4
        %v934 = vrot.slane %v828, 5
        %v935 = vrot.slane %v828, 6
        %v936 = vrot.slane %v828, 7
        %v937 = vrot.slane %v831, 1
        %v938 = vrot.slane %v831, 2
        %v939 = vrot.slane %v831, 3
        %v940 = vrot.slane %v831, 4
        %v941 = vrot.slane %v831, 5
        %v942 = vrot.slane %v831, 6
        %v943 = vrot.slane %v831, 7
        %v944 = vrot.slane %v833, 1
        %v945 = vrot.slane %v833, 2
        %v946 = vrot.slane %v833, 3
        %v947 = vrot.slane %v833, 4
        %v948 = vrot.slane %v833, 5
        %v949 = vrot.slane %v833, 6
        %v950 = vrot.slane %v833, 7
        %v951 = vrot.slane %v836, 1
        %v952 = vrot.slane %v836, 2
        %v953 = vrot.slane %v836, 3
        %v954 = vrot.slane %v836, 4
        %v955 = vrot.slane %v836, 5
        %v956 = vrot.slane %v836, 6
        %v957 = vrot.slane %v836, 7
        %v958 = vrot.slane %v838, 1
        %v959 = vrot.slane %v838, 2
        %v960 = vrot.slane %v838, 3
        %v961 = vrot.slane %v838, 4
        %v962 = vrot.slane %v838, 5
        %v963 = vrot.slane %v838, 6
        %v964 = vrot.slane %v838, 7
        %v965 = vrot.slane %v841, 1
        %v966 = vrot.slane %v841, 2
        %v967 = vrot.slane %v841, 3
        %v968 = vrot.slane %v841, 4
        %v969 = vrot.slane %v841, 5
        %v970 = vrot.slane %v841, 6
        %v971 = vrot.slane %v841, 7
        %v972 = vrot.slane %v843, 1
        %v973 = vrot.slane %v843, 2
        %v974 = vrot.slane %v843, 3
        %v975 = vrot.slane %v843, 4
        %v976 = vrot.slane %v843, 5
        %v977 = vrot.slane %v843, 6
        %v978 = vrot.slane %v843, 7
        %v979 = vrot.slane %v846, 1
        %v980 = vrot.slane %v846, 2
        %v981 = vrot.slane %v846, 3
        %v982 = vrot.slane %v846, 4
        %v983 = vrot.slane %v846, 5
        %v984 = vrot.slane %v846, 6
        %v985 = vrot.slane %v846, 7
        %v986 = vrot.slane %v848, 1
        %v987 = vrot.slane %v848, 2
        %v988 = vrot.slane %v848, 3
        %v989 = vrot.slane %v848, 4
        %v990 = vrot.slane %v848, 5
        %v991 = vrot.slane %v848, 6
        %v992 = vrot.slane %v848, 7
        %v993 = vrot.slane %v851, 1
        %v994 = vrot.slane %v851, 2
        %v995 = vrot.slane %v851, 3
        %v996 = vrot.slane %v851, 4
        %v997 = vrot.slane %v851, 5
        %v998 = vrot.slane %v851, 6
        %v999 = vrot.slane %v851, 7
        %v1000 = vrot.slane %v853, 1
        %v1001 = vrot.slane %v853, 2
        %v1002 = vrot.slane %v853, 3
        %v1003 = vrot.slane %v853, 4
        %v1004 = vrot.slane %v853, 5
        %v1005 = vrot.slane %v853, 6
        %v1006 = vrot.slane %v853, 7
        %v1007 = vrot.slane %v856, 1
        %v1008 = vrot.slane %v856, 2
        %v1009 = vrot.slane %v856, 3
        %v1010 = vrot.slane %v856, 4
        %v1011 = vrot.slane %v856, 5
        %v1012 = vrot.slane %v856, 6
        %v1013 = vrot.slane %v856, 7
        %v1014 = vrot.slane %v858, 1
        %v1015 = vrot.slane %v858, 2
        %v1016 = vrot.slane %v858, 3
        %v1017 = vrot.slane %v858, 4
        %v1018 = vrot.slane %v858, 5
        %v1019 = vrot.slane %v858, 6
        %v1020 = vrot.slane %v858, 7
        %v1021 = vrot.slane %v861, 1
        %v1022 = vrot.slane %v861, 2
        %v1023 = vrot.slane %v861, 3
        %v1024 = vrot.slane %v861, 4
        %v1025 = vrot.slane %v861, 5
        %v1026 = vrot.slane %v861, 6
        %v1027 = vrot.slane %v861, 7
        %v1028 = vrot.slane %v863, 1
        %v1029 = vrot.slane %v863, 2
        %v1030 = vrot.slane %v863, 3
        %v1031 = vrot.slane %v863, 4
        %v1032 = vrot.slane %v863, 5
        %v1033 = vrot.slane %v863, 6
        %v1034 = vrot.slane %v863, 7
        %v1035 = vrot.slane %v866, 1
        %v1036 = vrot.slane %v866, 2
        %v1037 = vrot.slane %v866, 3
        %v1038 = vrot.slane %v866, 4
        %v1039 = vrot.slane %v866, 5
        %v1040 = vrot.slane %v866, 6
        %v1041 = vrot.slane %v866, 7
        %v1042 = vrot.slane %v868, 1
        %v1043 = vrot.slane %v868, 2
        %v1044 = vrot.slane %v868, 3
        %v1045 = vrot.slane %v868, 4
        %v1046 = vrot.slane %v868, 5
        %v1047 = vrot.slane %v868, 6
        %v1048 = vrot.slane %v868, 7
        %v1049 = vrot.slane %v871, 1
        %v1050 = vrot.slane %v871, 2
        %v1051 = vrot.slane %v871, 3
        %v1052 = vrot.slane %v871, 4
        %v1053 = vrot.slane %v871, 5
        %v1054 = vrot.slane %v871, 6
        %v1055 = vrot.slane %v871, 7
        %v1056 = vrot.slane %v873, 1
        %v1057 = vrot.slane %v873, 2
        %v1058 = vrot.slane %v873, 3
        %v1059 = vrot.slane %v873, 4
        %v1060 = vrot.slane %v873, 5
        %v1061 = vrot.slane %v873, 6
        %v1062 = vrot.slane %v873, 7
        %v1063 = vrot.slane %v876, 1
        %v1064 = vrot.slane %v876, 2
        %v1065 = vrot.slane %v876, 3
        %v1066 = vrot.slane %v876, 4
        %v1067 = vrot.slane %v876, 5
        %v1068 = vrot.slane %v876, 6
        %v1069 = vrot.slane %v876, 7
        %v1070 = vrot.slane %v878, 1
        %v1071 = vrot.slane %v878, 2
        %v1072 = vrot.slane %v878, 3
        %v1073 = vrot.slane %v878, 4
        %v1074 = vrot.slane %v878, 5
        %v1075 = vrot.slane %v878, 6
        %v1076 = vrot.slane %v878, 7
        %v1077 = vrot.slane %v881, 1
        %v1078 = vrot.slane %v881, 2
        %v1079 = vrot.slane %v881, 3
        %v1080 = vrot.slane %v881, 4
        %v1081 = vrot.slane %v881, 5
        %v1082 = vrot.slane %v881, 6
        %v1083 = vrot.slane %v881, 7
        %1084 = vst [vmem:[#allocation1] ss:$9 sm:$0xff] %v821
        %s1085 = scalar_lea.vmem [#allocation1], 1
        %1086 = vst [vmem:[%s1085] ss:$9 sm:$0xff] %v909
        %s1087 = scalar_lea.vmem [#allocation1], 2
        %1088 = vst [vmem:[%s1087] ss:$9 sm:$0xff] %v910
        %s1089 = scalar_lea.vmem [#allocation1], 3
        %1090 = vst [vmem:[%s1089] ss:$9 sm:$0xff] %v911
        %s1091 = scalar_lea.vmem [#allocation1], 4
        %1092 = vst [vmem:[%s1091] ss:$9 sm:$0xff] %v912
        %v1093 = vld [vmem:[#allocation1] sm:$0xff]
        %1094 = vst [vmem:[#allocation1] ss:$9 sm:$0xff] %v913
        %1095 = vst [vmem:[%s1085] ss:$9 sm:$0xff] %v914
        %1096 = vst [vmem:[%s1087] ss:$9 sm:$0xff] %v915
        %1097 = vst [vmem:[%s1089] ss:$9 sm:$0xff] %v823
        %1098 = vst [vmem:[%s1091] ss:$9 sm:$0xff] %v916
        %v1099 = vld [vmem:[#allocation1] sm:$0xff]
        %1100 = vst [vmem:[#allocation1] ss:$9 sm:$0xff] %v917
        %1101 = vst [vmem:[%s1085] ss:$9 sm:$0xff] %v918
        %1102 = vst [vmem:[%s1087] ss:$9 sm:$0xff] %v919
        %1103 = vst [vmem:[%s1089] ss:$9 sm:$0xff] %v920
        %1104 = vst [vmem:[%s1091] ss:$9 sm:$0xff] %v921
        %v1105 = vld [vmem:[#allocation1] sm:$0xff]
        %1106 = vst [vmem:[#allocation1] ss:$9 sm:$0xff] %v922
        %1107 = vst [vmem:[%s1085] ss:$9 sm:$0xff] %v826
        %1108 = vst [vmem:[%s1087] ss:$9 sm:$0xff] %v923
        %1109 = vst [vmem:[%s1089] ss:$9 sm:$0xff] %v924
        %1110 = vst [vmem:[%s1091] ss:$9 sm:$0xff] %v925
        %v1111 = vld [vmem:[#allocation1] sm:$0xff]
        %1112 = vst [vmem:[#allocation1] ss:$9 sm:$0xff] %v926
        %1113 = vst [vmem:[%s1085] ss:$9 sm:$0xff] %v927
        %1114 = vst [vmem:[%s1087] ss:$9 sm:$0xff] %v928
        %1115 = vst [vmem:[%s1089] ss:$9 sm:$0xff] %v929
        %1116 = vst [vmem:[%s1091] ss:$9 sm:$0xff] %v828
        %v1117 = vld [vmem:[#allocation1] sm:$0xff]
        %1118 = vst [vmem:[#allocation1] ss:$9 sm:$0xff] %v930
        %1119 = vst [vmem:[%s1085] ss:$9 sm:$0xff] %v931
        %1120 = vst [vmem:[%s1087] ss:$9 sm:$0xff] %v932
        %1121 = vst [vmem:[%s1089] ss:$9 sm:$0xff] %v933
        %1122 = vst [vmem:[%s1091] ss:$9 sm:$0xff] %v934
        %v1123 = vld [vmem:[#allocation1] sm:$0xff]
        %1124 = vst [vmem:[#allocation1] ss:$9 sm:$0xff] %v935
        %1125 = vst [vmem:[%s1085] ss:$9 sm:$0xff] %v936
        %1126 = vst [vmem:[%s1087] ss:$9 sm:$0xff] %v831
        %1127 = vst [vmem:[%s1089] ss:$9 sm:$0xff] %v937
        %1128 = vst [vmem:[%s1091] ss:$9 sm:$0xff] %v938
        %v1129 = vld [vmem:[#allocation1] sm:$0xff]
        %1130 = vst [vmem:[#allocation1] ss:$9 sm:$0xff] %v939
        %1131 = vst [vmem:[%s1085] ss:$9 sm:$0xff] %v940
        %1132 = vst [vmem:[%s1087] ss:$9 sm:$0xff] %v941
        %1133 = vst [vmem:[%s1089] ss:$9 sm:$0xff] %v942
        %1134 = vst [vmem:[%s1091] ss:$9 sm:$0xff] %v943
        %v1135 = vld [vmem:[#allocation1] sm:$0xff]
        %1136 = vst [vmem:[#allocation1] ss:$9 sm:$0xff] %v833
        %1137 = vst [vmem:[%s1085] ss:$9 sm:$0xff] %v944
        %1138 = vst [vmem:[%s1087] ss:$9 sm:$0xff] %v945
        %1139 = vst [vmem:[%s1089] ss:$9 sm:$0xff] %v946
        %1140 = vst [vmem:[%s1091] ss:$9 sm:$0xff] %v947
        %v1141 = vld [vmem:[#allocation1] sm:$0xff]
        %1142 = vst [vmem:[#allocation1] ss:$9 sm:$0xff] %v948
        %1143 = vst [vmem:[%s1085] ss:$9 sm:$0xff] %v949
        %1144 = vst [vmem:[%s1087] ss:$9 sm:$0xff] %v950
        %1145 = vst [vmem:[%s1089] ss:$9 sm:$0xff] %v836
        %1146 = vst [vmem:[%s1091] ss:$9 sm:$0xff] %v951
        %v1147 = vld [vmem:[#allocation1] sm:$0xff]
        %1148 = vst [vmem:[#allocation1] ss:$9 sm:$0xff] %v952
        %1149 = vst [vmem:[%s1085] ss:$9 sm:$0xff] %v953
        %1150 = vst [vmem:[%s1087] ss:$9 sm:$0xff] %v954
        %1151 = vst [vmem:[%s1089] ss:$9 sm:$0xff] %v955
        %1152 = vst [vmem:[%s1091] ss:$9 sm:$0xff] %v956
        %v1153 = vld [vmem:[#allocation1] sm:$0xff]
        %1154 = vst [vmem:[#allocation1] ss:$9 sm:$0xff] %v957
        %1155 = vst [vmem:[%s1085] ss:$9 sm:$0xff] %v838
        %1156 = vst [vmem:[%s1087] ss:$9 sm:$0xff] %v958
        %1157 = vst [vmem:[%s1089] ss:$9 sm:$0xff] %v959
        %1158 = vst [vmem:[%s1091] ss:$9 sm:$0xff] %v960
        %v1159 = vld [vmem:[#allocation1] sm:$0xff]
        %1160 = vst [vmem:[#allocation1] ss:$9 sm:$0xff] %v961
        %1161 = vst [vmem:[%s1085] ss:$9 sm:$0xff] %v962
        %1162 = vst [vmem:[%s1087] ss:$9 sm:$0xff] %v963
        %1163 = vst [vmem:[%s1089] ss:$9 sm:$0xff] %v964
        %1164 = vst [vmem:[%s1091] ss:$9 sm:$0xff] %v841
        %v1165 = vld [vmem:[#allocation1] sm:$0xff]
        %1166 = vst [vmem:[#allocation1] ss:$9 sm:$0xff] %v965
        %1167 = vst [vmem:[%s1085] ss:$9 sm:$0xff] %v966
        %1168 = vst [vmem:[%s1087] ss:$9 sm:$0xff] %v967
        %1169 = vst [vmem:[%s1089] ss:$9 sm:$0xff] %v968
        %1170 = vst [vmem:[%s1091] ss:$9 sm:$0xff] %v969
        %v1171 = vld [vmem:[#allocation1] sm:$0xff]
        %1172 = vst [vmem:[#allocation1] ss:$9 sm:$0xff] %v970
        %1173 = vst [vmem:[%s1085] ss:$9 sm:$0xff] %v971
        %1174 = vst [vmem:[%s1087] ss:$9 sm:$0xff] %v843
        %1175 = vst [vmem:[%s1089] ss:$9 sm:$0xff] %v972
        %1176 = vst [vmem:[%s1091] ss:$9 sm:$0xff] %v973
        %v1177 = vld [vmem:[#allocation1] sm:$0xff]
        %1178 = vst [vmem:[#allocation1] ss:$9 sm:$0xff] %v974
        %1179 = vst [vmem:[%s1085] ss:$9 sm:$0xff] %v975
        %1180 = vst [vmem:[%s1087] ss:$9 sm:$0xff] %v976
        %1181 = vst [vmem:[%s1089] ss:$9 sm:$0xff] %v977
        %1182 = vst [vmem:[%s1091] ss:$9 sm:$0xff] %v978
        %v1183 = vld [vmem:[#allocation1] sm:$0xff]
        %1184 = vst [vmem:[#allocation1] ss:$9 sm:$0xff] %v846
        %1185 = vst [vmem:[%s1085] ss:$9 sm:$0xff] %v979
        %1186 = vst [vmem:[%s1087] ss:$9 sm:$0xff] %v980
        %1187 = vst [vmem:[%s1089] ss:$9 sm:$0xff] %v981
        %1188 = vst [vmem:[%s1091] ss:$9 sm:$0xff] %v982
        %v1189 = vld [vmem:[#allocation1] sm:$0xff]
        %1190 = vst [vmem:[#allocation1] ss:$9 sm:$0xff] %v983
        %1191 = vst [vmem:[%s1085] ss:$9 sm:$0xff] %v984
        %1192 = vst [vmem:[%s1087] ss:$9 sm:$0xff] %v985
        %1193 = vst [vmem:[%s1089] ss:$9 sm:$0xff] %v848
        %1194 = vst [vmem:[%s1091] ss:$9 sm:$0xff] %v986
        %v1195 = vld [vmem:[#allocation1] sm:$0xff]
        %1196 = vst [vmem:[#allocation1] ss:$9 sm:$0xff] %v987
        %1197 = vst [vmem:[%s1085] ss:$9 sm:$0xff] %v988
        %1198 = vst [vmem:[%s1087] ss:$9 sm:$0xff] %v989
        %1199 = vst [vmem:[%s1089] ss:$9 sm:$0xff] %v990
        %1200 = vst [vmem:[%s1091] ss:$9 sm:$0xff] %v991
        %v1201 = vld [vmem:[#allocation1] sm:$0xff]
        %1202 = vst [vmem:[#allocation1] ss:$9 sm:$0xff] %v992
        %1203 = vst [vmem:[%s1085] ss:$9 sm:$0xff] %v851
        %1204 = vst [vmem:[%s1087] ss:$9 sm:$0xff] %v993
        %1205 = vst [vmem:[%s1089] ss:$9 sm:$0xff] %v994
        %1206 = vst [vmem:[%s1091] ss:$9 sm:$0xff] %v995
        %v1207 = vld [vmem:[#allocation1] sm:$0xff]
        %1208 = vst [vmem:[#allocation1] ss:$9 sm:$0xff] %v996
        %1209 = vst [vmem:[%s1085] ss:$9 sm:$0xff] %v997
        %1210 = vst [vmem:[%s1087] ss:$9 sm:$0xff] %v998
        %1211 = vst [vmem:[%s1089] ss:$9 sm:$0xff] %v999
        %1212 = vst [vmem:[%s1091] ss:$9 sm:$0xff] %v853
        %v1213 = vld [vmem:[#allocation1] sm:$0xff]
        %1214 = vst [vmem:[#allocation1] ss:$9 sm:$0xff] %v1000
        %1215 = vst [vmem:[%s1085] ss:$9 sm:$0xff] %v1001
        %1216 = vst [vmem:[%s1087] ss:$9 sm:$0xff] %v1002
        %1217 = vst [vmem:[%s1089] ss:$9 sm:$0xff] %v1003
        %1218 = vst [vmem:[%s1091] ss:$9 sm:$0xff] %v1004
        %v1219 = vld [vmem:[#allocation1] sm:$0xff]
        %1220 = vst [vmem:[#allocation1] ss:$9 sm:$0xff] %v1005
        %1221 = vst [vmem:[%s1085] ss:$9 sm:$0xff] %v1006
        %1222 = vst [vmem:[%s1087] ss:$9 sm:$0xff] %v856
        %1223 = vst [vmem:[%s1089] ss:$9 sm:$0xff] %v1007
        %1224 = vst [vmem:[%s1091] ss:$9 sm:$0xff] %v1008
        %v1225 = vld [vmem:[#allocation1] sm:$0xff]
        %1226 = vst [vmem:[#allocation1] ss:$9 sm:$0xff] %v1009
        %1227 = vst [vmem:[%s1085] ss:$9 sm:$0xff] %v1010
        %1228 = vst [vmem:[%s1087] ss:$9 sm:$0xff] %v1011
        %1229 = vst [vmem:[%s1089] ss:$9 sm:$0xff] %v1012
        %1230 = vst [vmem:[%s1091] ss:$9 sm:$0xff] %v1013
        %v1231 = vld [vmem:[#allocation1] sm:$0xff]
        %1232 = vst [vmem:[#allocation1] ss:$9 sm:$0xff] %v858
        %1233 = vst [vmem:[%s1085] ss:$9 sm:$0xff] %v1014
        %1234 = vst [vmem:[%s1087] ss:$9 sm:$0xff] %v1015
        %1235 = vst [vmem:[%s1089] ss:$9 sm:$0xff] %v1016
        %1236 = vst [vmem:[%s1091] ss:$9 sm:$0xff] %v1017
        %v1237 = vld [vmem:[#allocation1] sm:$0xff]
        %1238 = vst [vmem:[#allocation1] ss:$9 sm:$0xff] %v1018
        %1239 = vst [vmem:[%s1085] ss:$9 sm:$0xff] %v1019
        %1240 = vst [vmem:[%s1087] ss:$9 sm:$0xff] %v1020
        %1241 = vst [vmem:[%s1089] ss:$9 sm:$0xff] %v861
        %1242 = vst [vmem:[%s1091] ss:$9 sm:$0xff] %v1021
        %v1243 = vld [vmem:[#allocation1] sm:$0xff]
        %1244 = vst [vmem:[#allocation1] ss:$9 sm:$0xff] %v1022
        %1245 = vst [vmem:[%s1085] ss:$9 sm:$0xff] %v1023
        %1246 = vst [vmem:[%s1087] ss:$9 sm:$0xff] %v1024
        %1247 = vst [vmem:[%s1089] ss:$9 sm:$0xff] %v1025
        %1248 = vst [vmem:[%s1091] ss:$9 sm:$0xff] %v1026
        %v1249 = vld [vmem:[#allocation1] sm:$0xff]
        %1250 = vst [vmem:[#allocation1] ss:$9 sm:$0xff] %v1027
        %1251 = vst [vmem:[%s1085] ss:$9 sm:$0xff] %v863
        %1252 = vst [vmem:[%s1087] ss:$9 sm:$0xff] %v1028
        %1253 = vst [vmem:[%s1089] ss:$9 sm:$0xff] %v1029
        %1254 = vst [vmem:[%s1091] ss:$9 sm:$0xff] %v1030
        %v1255 = vld [vmem:[#allocation1] sm:$0xff]
        %1256 = vst [vmem:[#allocation1] ss:$9 sm:$0xff] %v1031
        %1257 = vst [vmem:[%s1085] ss:$9 sm:$0xff] %v1032
        %1258 = vst [vmem:[%s1087] ss:$9 sm:$0xff] %v1033
        %1259 = vst [vmem:[%s1089] ss:$9 sm:$0xff] %v1034
        %1260 = vst [vmem:[%s1091] ss:$9 sm:$0xff] %v866
        %v1261 = vld [vmem:[#allocation1] sm:$0xff]
        %1262 = vst [vmem:[#allocation1] ss:$9 sm:$0xff] %v1035
        %1263 = vst [vmem:[%s1085] ss:$9 sm:$0xff] %v1036
        %1264 = vst [vmem:[%s1087] ss:$9 sm:$0xff] %v1037
        %1265 = vst [vmem:[%s1089] ss:$9 sm:$0xff] %v1038
        %1266 = vst [vmem:[%s1091] ss:$9 sm:$0xff] %v1039
        %v1267 = vld [vmem:[#allocation1] sm:$0xff]
        %1268 = vst [vmem:[#allocation1] ss:$9 sm:$0xff] %v1040
        %1269 = vst [vmem:[%s1085] ss:$9 sm:$0xff] %v1041
        %1270 = vst [vmem:[%s1087] ss:$9 sm:$0xff] %v868
        %1271 = vst [vmem:[%s1089] ss:$9 sm:$0xff] %v1042
        %1272 = vst [vmem:[%s1091] ss:$9 sm:$0xff] %v1043
        %v1273 = vld [vmem:[#allocation1] sm:$0xff]
        %1274 = vst [vmem:[#allocation1] ss:$9 sm:$0xff] %v1044
        %1275 = vst [vmem:[%s1085] ss:$9 sm:$0xff] %v1045
        %1276 = vst [vmem:[%s1087] ss:$9 sm:$0xff] %v1046
        %1277 = vst [vmem:[%s1089] ss:$9 sm:$0xff] %v1047
        %1278 = vst [vmem:[%s1091] ss:$9 sm:$0xff] %v1048
        %v1279 = vld [vmem:[#allocation1] sm:$0xff]
        %1280 = vst [vmem:[#allocation1] ss:$9 sm:$0xff] %v871
        %1281 = vst [vmem:[%s1085] ss:$9 sm:$0xff] %v1049
        %1282 = vst [vmem:[%s1087] ss:$9 sm:$0xff] %v1050
        %1283 = vst [vmem:[%s1089] ss:$9 sm:$0xff] %v1051
        %1284 = vst [vmem:[%s1091] ss:$9 sm:$0xff] %v1052
        %v1285 = vld [vmem:[#allocation1] sm:$0xff]
        %1286 = vst [vmem:[#allocation1] ss:$9 sm:$0xff] %v1053
        %1287 = vst [vmem:[%s1085] ss:$9 sm:$0xff] %v1054
        %1288 = vst [vmem:[%s1087] ss:$9 sm:$0xff] %v1055
        %1289 = vst [vmem:[%s1089] ss:$9 sm:$0xff] %v873
        %1290 = vst [vmem:[%s1091] ss:$9 sm:$0xff] %v1056
        %v1291 = vld [vmem:[#allocation1] sm:$0xff]
        %1292 = vst [vmem:[#allocation1] ss:$9 sm:$0xff] %v1057
        %1293 = vst [vmem:[%s1085] ss:$9 sm:$0xff] %v1058
        %1294 = vst [vmem:[%s1087] ss:$9 sm:$0xff] %v1059
        %1295 = vst [vmem:[%s1089] ss:$9 sm:$0xff] %v1060
        %1296 = vst [vmem:[%s1091] ss:$9 sm:$0xff] %v1061
        %v1297 = vld [vmem:[#allocation1] sm:$0xff]
        %1298 = vst [vmem:[#allocation1] ss:$9 sm:$0xff] %v1062
        %1299 = vst [vmem:[%s1085] ss:$9 sm:$0xff] %v876
        %1300 = vst [vmem:[%s1087] ss:$9 sm:$0xff] %v1063
        %1301 = vst [vmem:[%s1089] ss:$9 sm:$0xff] %v1064
        %1302 = vst [vmem:[%s1091] ss:$9 sm:$0xff] %v1065
        %v1303 = vld [vmem:[#allocation1] sm:$0xff]
        %1304 = vst [vmem:[#allocation1] ss:$9 sm:$0xff] %v1066
        %1305 = vst [vmem:[%s1085] ss:$9 sm:$0xff] %v1067
        %1306 = vst [vmem:[%s1087] ss:$9 sm:$0xff] %v1068
        %1307 = vst [vmem:[%s1089] ss:$9 sm:$0xff] %v1069
        %1308 = vst [vmem:[%s1091] ss:$9 sm:$0xff] %v878
        %v1309 = vld [vmem:[#allocation1] sm:$0xff]
        %1310 = vst [vmem:[#allocation1] ss:$9 sm:$0xff] %v1070
        %1311 = vst [vmem:[%s1085] ss:$9 sm:$0xff] %v1071
        %1312 = vst [vmem:[%s1087] ss:$9 sm:$0xff] %v1072
        %1313 = vst [vmem:[%s1089] ss:$9 sm:$0xff] %v1073
        %1314 = vst [vmem:[%s1091] ss:$9 sm:$0xff] %v1074
        %v1315 = vld [vmem:[#allocation1] sm:$0xff]
        %1316 = vst [vmem:[#allocation1] ss:$9 sm:$0xff] %v1075
        %1317 = vst [vmem:[%s1085] ss:$9 sm:$0xff] %v1076
        %1318 = vst [vmem:[%s1087] ss:$9 sm:$0xff] %v881
        %1319 = vst [vmem:[%s1089] ss:$9 sm:$0xff] %v1077
        %1320 = vst [vmem:[%s1091] ss:$9 sm:$0xff] %v1078
        %v1321 = vld [vmem:[#allocation1] sm:$0xff]
        %1322 = vst [vmem:[#allocation1] ss:$9 sm:$0xff] %v1079
        %1323 = vst [vmem:[%s1085] ss:$9 sm:$0xff] %v1080
        %1324 = vst [vmem:[%s1087] ss:$9 sm:$0xff] %v1081
        %1325 = vst [vmem:[%s1089] ss:$9 sm:$0xff] %v1082
        %1326 = vst [vmem:[%s1091] ss:$9 sm:$0xff] %v1083
        %v1327 = vld [vmem:[#allocation1] sm:$0xff]
        %vm1368 = vcmask 520192
        %v1369 = vsel %vm1368, %v1093, -inf
        %v1370 = vrot.slane %v1369, 4
        %v1371 = vmax.f32 %v1369, %v1370
        %v1372 = vrot.slane %v1371, 2
        %v1373 = vmax.f32 %v1371, %v1372
        %v1374 = vrot.slane %v1373, 1
        %v1375 = vmax.f32 %v1373, %v1374
        %v1376 = vsel %vm1368, %v1099, -inf
        %v1377 = vrot.slane %v1376, 4
        %v1378 = vmax.f32 %v1376, %v1377
        %v1379 = vrot.slane %v1378, 2
        %v1380 = vmax.f32 %v1378, %v1379
        %v1381 = vrot.slane %v1380, 1
        %v1382 = vmax.f32 %v1380, %v1381
        %v1383 = vsel %vm1368, %v1105, -inf
        %v1384 = vrot.slane %v1383, 4
        %v1385 = vmax.f32 %v1383, %v1384
        %v1386 = vrot.slane %v1385, 2
        %v1387 = vmax.f32 %v1385, %v1386
        %v1388 = vrot.slane %v1387, 1
        %v1389 = vmax.f32 %v1387, %v1388
        %v1390 = vsel %vm1368, %v1111, -inf
        %v1391 = vrot.slane %v1390, 4
        %v1392 = vmax.f32 %v1390, %v1391
        %v1393 = vrot.slane %v1392, 2
        %v1394 = vmax.f32 %v1392, %v1393
        %v1395 = vrot.slane %v1394, 1
        %v1396 = vmax.f32 %v1394, %v1395
        %v1397 = vsel %vm1368, %v1117, -inf
        %v1398 = vrot.slane %v1397, 4
        %v1399 = vmax.f32 %v1397, %v1398
        %v1400 = vrot.slane %v1399, 2
        %v1401 = vmax.f32 %v1399, %v1400
        %v1402 = vrot.slane %v1401, 1
        %v1403 = vmax.f32 %v1401, %v1402
        %v1404 = vsel %vm1368, %v1123, -inf
        %v1405 = vrot.slane %v1404, 4
        %v1406 = vmax.f32 %v1404, %v1405
        %v1407 = vrot.slane %v1406, 2
        %v1408 = vmax.f32 %v1406, %v1407
        %v1409 = vrot.slane %v1408, 1
        %v1410 = vmax.f32 %v1408, %v1409
        %v1411 = vsel %vm1368, %v1129, -inf
        %v1412 = vrot.slane %v1411, 4
        %v1413 = vmax.f32 %v1411, %v1412
        %v1414 = vrot.slane %v1413, 2
        %v1415 = vmax.f32 %v1413, %v1414
        %v1416 = vrot.slane %v1415, 1
        %v1417 = vmax.f32 %v1415, %v1416
        %v1418 = vsel %vm1368, %v1135, -inf
        %v1419 = vrot.slane %v1418, 4
        %v1420 = vmax.f32 %v1418, %v1419
        %v1421 = vrot.slane %v1420, 2
        %v1422 = vmax.f32 %v1420, %v1421
        %v1423 = vrot.slane %v1422, 1
        %v1424 = vmax.f32 %v1422, %v1423
        %v1425 = vsel %vm1368, %v1141, -inf
        %v1426 = vrot.slane %v1425, 4
        %v1427 = vmax.f32 %v1425, %v1426
        %v1428 = vrot.slane %v1427, 2
        %v1429 = vmax.f32 %v1427, %v1428
        %v1430 = vrot.slane %v1429, 1
        %v1431 = vmax.f32 %v1429, %v1430
        %v1432 = vsel %vm1368, %v1147, -inf
        %v1433 = vrot.slane %v1432, 4
        %v1434 = vmax.f32 %v1432, %v1433
        %v1435 = vrot.slane %v1434, 2
        %v1436 = vmax.f32 %v1434, %v1435
        %v1437 = vrot.slane %v1436, 1
        %v1438 = vmax.f32 %v1436, %v1437
        %v1439 = vsel %vm1368, %v1153, -inf
        %v1440 = vrot.slane %v1439, 4
        %v1441 = vmax.f32 %v1439, %v1440
        %v1442 = vrot.slane %v1441, 2
        %v1443 = vmax.f32 %v1441, %v1442
        %v1444 = vrot.slane %v1443, 1
        %v1445 = vmax.f32 %v1443, %v1444
        %v1446 = vsel %vm1368, %v1159, -inf
        %v1447 = vrot.slane %v1446, 4
        %v1448 = vmax.f32 %v1446, %v1447
        %v1449 = vrot.slane %v1448, 2
        %v1450 = vmax.f32 %v1448, %v1449
        %v1451 = vrot.slane %v1450, 1
        %v1452 = vmax.f32 %v1450, %v1451
        %v1453 = vsel %vm1368, %v1165, -inf
        %v1454 = vrot.slane %v1453, 4
        %v1455 = vmax.f32 %v1453, %v1454
        %v1456 = vrot.slane %v1455, 2
        %v1457 = vmax.f32 %v1455, %v1456
        %v1458 = vrot.slane %v1457, 1
        %v1459 = vmax.f32 %v1457, %v1458
        %v1460 = vsel %vm1368, %v1171, -inf
        %v1461 = vrot.slane %v1460, 4
        %v1462 = vmax.f32 %v1460, %v1461
        %v1463 = vrot.slane %v1462, 2
        %v1464 = vmax.f32 %v1462, %v1463
        %v1465 = vrot.slane %v1464, 1
        %v1466 = vmax.f32 %v1464, %v1465
        %v1467 = vsel %vm1368, %v1177, -inf
        %v1468 = vrot.slane %v1467, 4
        %v1469 = vmax.f32 %v1467, %v1468
        %v1470 = vrot.slane %v1469, 2
        %v1471 = vmax.f32 %v1469, %v1470
        %v1472 = vrot.slane %v1471, 1
        %v1473 = vmax.f32 %v1471, %v1472
        %v1474 = vsel %vm1368, %v1183, -inf
        %v1475 = vrot.slane %v1474, 4
        %v1476 = vmax.f32 %v1474, %v1475
        %v1477 = vrot.slane %v1476, 2
        %v1478 = vmax.f32 %v1476, %v1477
        %v1479 = vrot.slane %v1478, 1
        %v1480 = vmax.f32 %v1478, %v1479
        %v1481 = vsel %vm1368, %v1189, -inf
        %v1482 = vrot.slane %v1481, 4
        %v1483 = vmax.f32 %v1481, %v1482
        %v1484 = vrot.slane %v1483, 2
        %v1485 = vmax.f32 %v1483, %v1484
        %v1486 = vrot.slane %v1485, 1
        %v1487 = vmax.f32 %v1485, %v1486
        %v1488 = vsel %vm1368, %v1195, -inf
        %v1489 = vrot.slane %v1488, 4
        %v1490 = vmax.f32 %v1488, %v1489
        %v1491 = vrot.slane %v1490, 2
        %v1492 = vmax.f32 %v1490, %v1491
        %v1493 = vrot.slane %v1492, 1
        %v1494 = vmax.f32 %v1492, %v1493
        %v1495 = vsel %vm1368, %v1201, -inf
        %v1496 = vrot.slane %v1495, 4
        %v1497 = vmax.f32 %v1495, %v1496
        %v1498 = vrot.slane %v1497, 2
        %v1499 = vmax.f32 %v1497, %v1498
        %v1500 = vrot.slane %v1499, 1
        %v1501 = vmax.f32 %v1499, %v1500
        %v1502 = vsel %vm1368, %v1207, -inf
        %v1503 = vrot.slane %v1502, 4
        %v1504 = vmax.f32 %v1502, %v1503
        %v1505 = vrot.slane %v1504, 2
        %v1506 = vmax.f32 %v1504, %v1505
        %v1507 = vrot.slane %v1506, 1
        %v1508 = vmax.f32 %v1506, %v1507
        %v1509 = vsel %vm1368, %v1213, -inf
        %v1510 = vrot.slane %v1509, 4
        %v1511 = vmax.f32 %v1509, %v1510
        %v1512 = vrot.slane %v1511, 2
        %v1513 = vmax.f32 %v1511, %v1512
        %v1514 = vrot.slane %v1513, 1
        %v1515 = vmax.f32 %v1513, %v1514
        %v1516 = vsel %vm1368, %v1219, -inf
        %v1517 = vrot.slane %v1516, 4
        %v1518 = vmax.f32 %v1516, %v1517
        %v1519 = vrot.slane %v1518, 2
        %v1520 = vmax.f32 %v1518, %v1519
        %v1521 = vrot.slane %v1520, 1
        %v1522 = vmax.f32 %v1520, %v1521
        %v1523 = vsel %vm1368, %v1225, -inf
        %v1524 = vrot.slane %v1523, 4
        %v1525 = vmax.f32 %v1523, %v1524
        %v1526 = vrot.slane %v1525, 2
        %v1527 = vmax.f32 %v1525, %v1526
        %v1528 = vrot.slane %v1527, 1
        %v1529 = vmax.f32 %v1527, %v1528
        %v1530 = vsel %vm1368, %v1231, -inf
        %v1531 = vrot.slane %v1530, 4
        %v1532 = vmax.f32 %v1530, %v1531
        %v1533 = vrot.slane %v1532, 2
        %v1534 = vmax.f32 %v1532, %v1533
        %v1535 = vrot.slane %v1534, 1
        %v1536 = vmax.f32 %v1534, %v1535
        %v1537 = vsel %vm1368, %v1237, -inf
        %v1538 = vrot.slane %v1537, 4
        %v1539 = vmax.f32 %v1537, %v1538
        %v1540 = vrot.slane %v1539, 2
        %v1541 = vmax.f32 %v1539, %v1540
        %v1542 = vrot.slane %v1541, 1
        %v1543 = vmax.f32 %v1541, %v1542
        %v1544 = vsel %vm1368, %v1243, -inf
        %v1545 = vrot.slane %v1544, 4
        %v1546 = vmax.f32 %v1544, %v1545
        %v1547 = vrot.slane %v1546, 2
        %v1548 = vmax.f32 %v1546, %v1547
        %v1549 = vrot.slane %v1548, 1
        %v1550 = vmax.f32 %v1548, %v1549
        %v1551 = vsel %vm1368, %v1249, -inf
        %v1552 = vrot.slane %v1551, 4
        %v1553 = vmax.f32 %v1551, %v1552
        %v1554 = vrot.slane %v1553, 2
        %v1555 = vmax.f32 %v1553, %v1554
        %v1556 = vrot.slane %v1555, 1
        %v1557 = vmax.f32 %v1555, %v1556
        %v1558 = vsel %vm1368, %v1255, -inf
        %v1559 = vrot.slane %v1558, 4
        %v1560 = vmax.f32 %v1558, %v1559
        %v1561 = vrot.slane %v1560, 2
        %v1562 = vmax.f32 %v1560, %v1561
        %v1563 = vrot.slane %v1562, 1
        %v1564 = vmax.f32 %v1562, %v1563
        %v1565 = vsel %vm1368, %v1261, -inf
        %v1566 = vrot.slane %v1565, 4
        %v1567 = vmax.f32 %v1565, %v1566
        %v1568 = vrot.slane %v1567, 2
        %v1569 = vmax.f32 %v1567, %v1568
        %v1570 = vrot.slane %v1569, 1
        %v1571 = vmax.f32 %v1569, %v1570
        %v1572 = vsel %vm1368, %v1267, -inf
        %v1573 = vrot.slane %v1572, 4
        %v1574 = vmax.f32 %v1572, %v1573
        %v1575 = vrot.slane %v1574, 2
        %v1576 = vmax.f32 %v1574, %v1575
        %v1577 = vrot.slane %v1576, 1
        %v1578 = vmax.f32 %v1576, %v1577
        %v1579 = vsel %vm1368, %v1273, -inf
        %v1580 = vrot.slane %v1579, 4
        %v1581 = vmax.f32 %v1579, %v1580
        %v1582 = vrot.slane %v1581, 2
        %v1583 = vmax.f32 %v1581, %v1582
        %v1584 = vrot.slane %v1583, 1
        %v1585 = vmax.f32 %v1583, %v1584
        %v1586 = vsel %vm1368, %v1279, -inf
        %v1587 = vrot.slane %v1586, 4
        %v1588 = vmax.f32 %v1586, %v1587
        %v1589 = vrot.slane %v1588, 2
        %v1590 = vmax.f32 %v1588, %v1589
        %v1591 = vrot.slane %v1590, 1
        %v1592 = vmax.f32 %v1590, %v1591
        %v1593 = vsel %vm1368, %v1285, -inf
        %v1594 = vrot.slane %v1593, 4
        %v1595 = vmax.f32 %v1593, %v1594
        %v1596 = vrot.slane %v1595, 2
        %v1597 = vmax.f32 %v1595, %v1596
        %v1598 = vrot.slane %v1597, 1
        %v1599 = vmax.f32 %v1597, %v1598
        %v1600 = vsel %vm1368, %v1291, -inf
        %v1601 = vrot.slane %v1600, 4
        %v1602 = vmax.f32 %v1600, %v1601
        %v1603 = vrot.slane %v1602, 2
        %v1604 = vmax.f32 %v1602, %v1603
        %v1605 = vrot.slane %v1604, 1
        %v1606 = vmax.f32 %v1604, %v1605
        %v1607 = vsel %vm1368, %v1297, -inf
        %v1608 = vrot.slane %v1607, 4
        %v1609 = vmax.f32 %v1607, %v1608
        %v1610 = vrot.slane %v1609, 2
        %v1611 = vmax.f32 %v1609, %v1610
        %v1612 = vrot.slane %v1611, 1
        %v1613 = vmax.f32 %v1611, %v1612
        %v1614 = vsel %vm1368, %v1303, -inf
        %v1615 = vrot.slane %v1614, 4
        %v1616 = vmax.f32 %v1614, %v1615
        %v1617 = vrot.slane %v1616, 2
        %v1618 = vmax.f32 %v1616, %v1617
        %v1619 = vrot.slane %v1618, 1
        %v1620 = vmax.f32 %v1618, %v1619
        %v1621 = vsel %vm1368, %v1309, -inf
        %v1622 = vrot.slane %v1621, 4
        %v1623 = vmax.f32 %v1621, %v1622
        %v1624 = vrot.slane %v1623, 2
        %v1625 = vmax.f32 %v1623, %v1624
        %v1626 = vrot.slane %v1625, 1
        %v1627 = vmax.f32 %v1625, %v1626
        %v1628 = vsel %vm1368, %v1315, -inf
        %v1629 = vrot.slane %v1628, 4
        %v1630 = vmax.f32 %v1628, %v1629
        %v1631 = vrot.slane %v1630, 2
        %v1632 = vmax.f32 %v1630, %v1631
        %v1633 = vrot.slane %v1632, 1
        %v1634 = vmax.f32 %v1632, %v1633
        %v1635 = vsel %vm1368, %v1321, -inf
        %v1636 = vrot.slane %v1635, 4
        %v1637 = vmax.f32 %v1635, %v1636
        %v1638 = vrot.slane %v1637, 2
        %v1639 = vmax.f32 %v1637, %v1638
        %v1640 = vrot.slane %v1639, 1
        %v1641 = vmax.f32 %v1639, %v1640
        %v1642 = vsel %vm1368, %v1327, -inf
        %v1643 = vrot.slane %v1642, 4
        %v1644 = vmax.f32 %v1642, %v1643
        %v1645 = vrot.slane %v1644, 2
        %v1646 = vmax.f32 %v1644, %v1645
        %v1647 = vrot.slane %v1646, 1
        %v1648 = vmax.f32 %v1646, %v1647
        %v1649 = vld [vmem:[%s500] sm:$0xff]
        %v1650 = vld [vmem:[%s500 + $0x8] sm:$0xff]
        %v1651 = vld [vmem:[%s500 + $0x10] sm:$0xff]
        %v1652 = vld [vmem:[%s500 + $0x18] sm:$0xff]
        %v1653 = vld [vmem:[%s500 + $0x20] sm:$0xff]
        %v1659 = vrot.slane %v1649, 1
        %v1660 = vrot.slane %v1649, 2
        %v1661 = vrot.slane %v1649, 3
        %v1662 = vrot.slane %v1649, 4
        %v1663 = vrot.slane %v1649, 5
        %v1664 = vrot.slane %v1649, 6
        %v1665 = vrot.slane %v1649, 7
        %v1666 = vrot.slane %v1650, 1
        %v1667 = vrot.slane %v1650, 2
        %v1668 = vrot.slane %v1650, 3
        %v1669 = vrot.slane %v1650, 4
        %v1670 = vrot.slane %v1650, 5
        %v1671 = vrot.slane %v1650, 6
        %v1672 = vrot.slane %v1650, 7
        %v1673 = vrot.slane %v1651, 1
        %v1674 = vrot.slane %v1651, 2
        %v1675 = vrot.slane %v1651, 3
        %v1676 = vrot.slane %v1651, 4
        %v1677 = vrot.slane %v1651, 5
        %v1678 = vrot.slane %v1651, 6
        %v1679 = vrot.slane %v1651, 7
        %v1680 = vrot.slane %v1652, 1
        %v1681 = vrot.slane %v1652, 2
        %v1682 = vrot.slane %v1652, 3
        %v1683 = vrot.slane %v1652, 4
        %v1684 = vrot.slane %v1652, 5
        %v1685 = vrot.slane %v1652, 6
        %v1686 = vrot.slane %v1652, 7
        %v1687 = vrot.slane %v1653, 1
        %v1688 = vrot.slane %v1653, 2
        %v1689 = vrot.slane %v1653, 3
        %v1690 = vrot.slane %v1653, 4
        %v1691 = vrot.slane %v1653, 5
        %v1692 = vrot.slane %v1653, 6
        %v1693 = vrot.slane %v1653, 7
        %v1734 = vadd.f32 %v1375, %v1649
        %v1735 = vadd.f32 %v1382, %v1659
        %v1736 = vadd.f32 %v1389, %v1660
        %v1737 = vadd.f32 %v1396, %v1661
        %v1738 = vadd.f32 %v1403, %v1662
        %v1739 = vadd.f32 %v1410, %v1663
        %v1740 = vadd.f32 %v1417, %v1664
        %v1741 = vadd.f32 %v1424, %v1665
        %v1742 = vadd.f32 %v1431, %v1650
        %v1743 = vadd.f32 %v1438, %v1666
        %v1744 = vadd.f32 %v1445, %v1667
        %v1745 = vadd.f32 %v1452, %v1668
        %v1746 = vadd.f32 %v1459, %v1669
        %v1747 = vadd.f32 %v1466, %v1670
        %v1748 = vadd.f32 %v1473, %v1671
        %v1749 = vadd.f32 %v1480, %v1672
        %v1750 = vadd.f32 %v1487, %v1651
        %v1751 = vadd.f32 %v1494, %v1673
        %v1752 = vadd.f32 %v1501, %v1674
        %v1753 = vadd.f32 %v1508, %v1675
        %v1754 = vadd.f32 %v1515, %v1676
        %v1755 = vadd.f32 %v1522, %v1677
        %v1756 = vadd.f32 %v1529, %v1678
        %v1757 = vadd.f32 %v1536, %v1679
        %v1758 = vadd.f32 %v1543, %v1652
        %v1759 = vadd.f32 %v1550, %v1680
        %v1760 = vadd.f32 %v1557, %v1681
        %v1761 = vadd.f32 %v1564, %v1682
        %v1762 = vadd.f32 %v1571, %v1683
        %v1763 = vadd.f32 %v1578, %v1684
        %v1764 = vadd.f32 %v1585, %v1685
        %v1765 = vadd.f32 %v1592, %v1686
        %v1766 = vadd.f32 %v1599, %v1653
        %v1767 = vadd.f32 %v1606, %v1687
        %v1768 = vadd.f32 %v1613, %v1688
        %v1769 = vadd.f32 %v1620, %v1689
        %v1770 = vadd.f32 %v1627, %v1690
        %v1771 = vadd.f32 %v1634, %v1691
        %v1772 = vadd.f32 %v1641, %v1692
        %v1773 = vadd.f32 %v1648, %v1693
        %s1774 = sld [smem:[#allocation2 + $0x80]]
        %s1775 = sld [smem:[#allocation2 + $0x81]]
        %s1776 = sld [smem:[#allocation2 + $0x82]]
        %v1817 = vrot.slane %v1735, 7
        %vm1818 = vcmask 1041409
        %v1819 = vsel %vm1818, %v1817, %v1734
        %v1820 = vrot.slane %v1736, 6
        %vm1821 = vcmask 1042434
        %v1822 = vsel %vm1821, %v1820, %v1819
        %v1823 = vrot.slane %v1737, 5
        %vm1824 = vcmask 1043459
        %v1825 = vsel %vm1824, %v1823, %v1822
        %v1826 = vrot.slane %v1738, 4
        %vm1827 = vcmask 1044484
        %v1828 = vsel %vm1827, %v1826, %v1825
        %v1829 = vrot.slane %v1739, 3
        %vm1830 = vcmask 1045509
        %v1831 = vsel %vm1830, %v1829, %v1828
        %v1832 = vrot.slane %v1740, 2
        %vm1833 = vcmask 1046534
        %v1834 = vsel %vm1833, %v1832, %v1831
        %v1835 = vrot.slane %v1741, 1
        %vm1836 = vcmask 1047559
        %v1837 = vsel %vm1836, %v1835, %v1834
        %v1838 = vrot.slane %v1743, 7
        %v1839 = vsel %vm1818, %v1838, %v1742
        %v1840 = vrot.slane %v1744, 6
        %v1841 = vsel %vm1821, %v1840, %v1839
        %v1842 = vrot.slane %v1745, 5
        %v1843 = vsel %vm1824, %v1842, %v1841
        %v1844 = vrot.slane %v1746, 4
        %v1845 = vsel %vm1827, %v1844, %v1843
        %v1846 = vrot.slane %v1747, 3
        %v1847 = vsel %vm1830, %v1846, %v1845
        %v1848 = vrot.slane %v1748, 2
        %v1849 = vsel %vm1833, %v1848, %v1847
        %v1850 = vrot.slane %v1749, 1
        %v1851 = vsel %vm1836, %v1850, %v1849
        %v1852 = vrot.slane %v1751, 7
        %v1853 = vsel %vm1818, %v1852, %v1750
        %v1854 = vrot.slane %v1752, 6
        %v1855 = vsel %vm1821, %v1854, %v1853
        %v1856 = vrot.slane %v1753, 5
        %v1857 = vsel %vm1824, %v1856, %v1855
        %v1858 = vrot.slane %v1754, 4
        %v1859 = vsel %vm1827, %v1858, %v1857
        %v1860 = vrot.slane %v1755, 3
        %v1861 = vsel %vm1830, %v1860, %v1859
        %v1862 = vrot.slane %v1756, 2
        %v1863 = vsel %vm1833, %v1862, %v1861
        %v1864 = vrot.slane %v1757, 1
        %v1865 = vsel %vm1836, %v1864, %v1863
        %v1866 = vrot.slane %v1759, 7
        %v1867 = vsel %vm1818, %v1866, %v1758
        %v1868 = vrot.slane %v1760, 6
        %v1869 = vsel %vm1821, %v1868, %v1867
        %v1870 = vrot.slane %v1761, 5
        %v1871 = vsel %vm1824, %v1870, %v1869
        %v1872 = vrot.slane %v1762, 4
        %v1873 = vsel %vm1827, %v1872, %v1871
        %v1874 = vrot.slane %v1763, 3
        %v1875 = vsel %vm1830, %v1874, %v1873
        %v1876 = vrot.slane %v1764, 2
        %v1877 = vsel %vm1833, %v1876, %v1875
        %v1878 = vrot.slane %v1765, 1
        %v1879 = vsel %vm1836, %v1878, %v1877
        %v1880 = vrot.slane %v1767, 7
        %v1881 = vsel %vm1818, %v1880, %v1766
        %v1882 = vrot.slane %v1768, 6
        %v1883 = vsel %vm1821, %v1882, %v1881
        %v1884 = vrot.slane %v1769, 5
        %v1885 = vsel %vm1824, %v1884, %v1883
        %v1886 = vrot.slane %v1770, 4
        %v1887 = vsel %vm1827, %v1886, %v1885
        %v1888 = vrot.slane %v1771, 3
        %v1889 = vsel %vm1830, %v1888, %v1887
        %v1890 = vrot.slane %v1772, 2
        %v1891 = vsel %vm1833, %v1890, %v1889
        %v1892 = vrot.slane %v1773, 1
        %v1893 = vsel %vm1836, %v1892, %v1891
        %vm1899 = vcmask 523264
        %v1900 = vsel %vm1899, %v1837, 0.0
        %v1901 = vsel %vm1899, %v1851, 0.0
        %v1902 = vadd.f32 %v1900, %v1901
        %v1903 = vsel %vm1899, %v1865, 0.0
        %v1904 = vadd.f32 %v1902, %v1903
        %v1905 = vsel %vm1899, %v1879, 0.0
        %v1906 = vadd.f32 %v1904, %v1905
        %v1907 = vsel %vm1899, %v1893, 0.0
        %v1908 = vadd.f32 %v1906, %v1907
        %v1909 = vrot.slane %v1908, 4
        %v1910 = vadd.f32 %v1908, %v1909
        %v1911 = vrot.slane %v1910, 2
        %v1912 = vadd.f32 %v1910, %v1911
        %v1913 = vrot.slane %v1912, 1
        %v1914 = vadd.f32 %v1912, %v1913
        %v1915 = vrcp.pop 40.0
        %v1916 = vmul.f32 40.0, %v1915
        %v1917 = vsub.f32 1.0, %v1916
        %v1918 = vmul.f32 %v1915, %v1917
        %v1919 = vadd.f32 %v1915, %v1918
        %vm1920 = vweird.f32 %v1915
        %v1921 = vsel %vm1920, %v1915, %v1919
        %v1922 = vmul.f32 %v1914, %v1921
        %v1923 = vadd.s32 %v604, 32
        %v1924 = vadd.s32 %v604, 40
        %v1925 = vadd.s32 %v604, 48
        %v1926 = vadd.s32 %v604, 56
        %vm1927 = vcmp.eq.s32.totalorder %v1923, %v610
        %vm1928 = vcmp.eq.s32.totalorder %v1924, %v610
        %vm1929 = vcmp.eq.s32.totalorder %v1925, %v610
        %vm1930 = vcmp.eq.s32.totalorder %v1926, %v610
        %v1931 = vsel %vm1927, 1, 0
        %v1932 = vsel %vm1928, 1, 0
        %v1933 = vsel %vm1929, 1, 0
        %v1934 = vsel %vm1930, 1, 0
        %v1935 = vcvt.s32.f32 %v1931
        %v1936 = vcvt.s32.f32 %v1932
        %v1937 = vcvt.s32.f32 %v1933
        %v1938 = vcvt.s32.f32 %v1934
        %v1939 = vstv %s1774
        %v1940 = vmul.f32 %v1939, %v619
        %v1941 = vmul.f32 %v1939, %v620
        %v1942 = vmul.f32 %v1939, %v621
        %v1943 = vmul.f32 %v1939, %v622
        %v1944 = vmul.f32 %v1939, %v1935
        %v1945 = vmul.f32 %v1939, %v1936
        %v1946 = vmul.f32 %v1939, %v1937
        %v1947 = vmul.f32 %v1939, %v1938
        %vm1948 = vcmp.eq.s32.totalorder %v1923, %v609
        %vm1949 = vcmp.eq.s32.totalorder %v1924, %v609
        %vm1950 = vcmp.eq.s32.totalorder %v1925, %v609
        %vm1951 = vcmp.eq.s32.totalorder %v1926, %v609
        %v1952 = vsel %vm1948, 1, 0
        %v1953 = vsel %vm1949, 1, 0
        %v1954 = vsel %vm1950, 1, 0
        %v1955 = vsel %vm1951, 1, 0
        %v1956 = vcvt.s32.f32 %v1952
        %v1957 = vcvt.s32.f32 %v1953
        %v1958 = vcvt.s32.f32 %v1954
        %v1959 = vcvt.s32.f32 %v1955
        %v1960 = vstv %s1775
        %v1961 = vmul.f32 %v1960, %v636
        %v1962 = vmul.f32 %v1960, %v637
        %v1963 = vmul.f32 %v1960, %v638
        %v1964 = vmul.f32 %v1960, %v639
        %v1965 = vmul.f32 %v1960, %v1956
        %v1966 = vmul.f32 %v1960, %v1957
        %v1967 = vmul.f32 %v1960, %v1958
        %v1968 = vmul.f32 %v1960, %v1959
        %v1969 = vadd.f32 %v1940, %v1961
        %v1970 = vadd.f32 %v1941, %v1962
        %v1971 = vadd.f32 %v1942, %v1963
        %v1972 = vadd.f32 %v1943, %v1964
        %v1973 = vadd.f32 %v1944, %v1965
        %v1974 = vadd.f32 %v1945, %v1966
        %v1975 = vadd.f32 %v1946, %v1967
        %v1976 = vadd.f32 %v1947, %v1968
        %vm1977 = vcmp.eq.s32.totalorder %v1923, %v649
        %vm1978 = vcmp.eq.s32.totalorder %v1924, %v649
        %vm1979 = vcmp.eq.s32.totalorder %v1925, %v649
        %vm1980 = vcmp.eq.s32.totalorder %v1926, %v649
        %v1981 = vsel %vm1977, 1, 0
        %v1982 = vsel %vm1978, 1, 0
        %v1983 = vsel %vm1979, 1, 0
        %v1984 = vsel %vm1980, 1, 0
        %v1985 = vcvt.s32.f32 %v1981
        %v1986 = vcvt.s32.f32 %v1982
        %v1987 = vcvt.s32.f32 %v1983
        %v1988 = vcvt.s32.f32 %v1984
        %v1989 = vstv %s1776
        %v1990 = vmul.f32 %v1989, %v658
        %v1991 = vmul.f32 %v1989, %v659
        %v1992 = vmul.f32 %v1989, %v660
        %v1993 = vmul.f32 %v1989, %v661
        %v1994 = vmul.f32 %v1989, %v1985
        %v1995 = vmul.f32 %v1989, %v1986
        %v1996 = vmul.f32 %v1989, %v1987
        %v1997 = vmul.f32 %v1989, %v1988
        %v1998 = vadd.f32 %v1969, %v1990
        %v1999 = vadd.f32 %v1970, %v1991
        %v2000 = vadd.f32 %v1971, %v1992
        %v2001 = vadd.f32 %v1972, %v1993
        %v2002 = vadd.f32 %v1973, %v1994
        %v2003 = vadd.f32 %v1974, %v1995
        %v2004 = vadd.f32 %v1975, %v1996
        %v2005 = vadd.f32 %v1976, %v1997
        %v2007 = vsel %vm1899, %v1922, 0
        %2009 = vmatpush.msra.mxu0 0.0
        %2010 = vmatpush.msra.mxu0 0.0
        %2011 = vmatpush.msra.mxu0 0.0
        %2012 = vmatpush.msra.mxu0 0.0
        %2013 = vmatpush.msra.mxu0 0.0
        %2014 = vmatpush.msra.mxu0 0.0
        %2015 = vmatpush.msra.mxu0 0.0
        %2016 = vmatpush.msra.mxu0 0.0
        %2017 = vmatpush.msra.mxu0 %v2005
        %2018 = vmatpush.msra.mxu0 %v2004
        %2019 = vmatpush.msra.mxu0 %v2003
        %2020 = vmatpush.msra.mxu0 %v2002
        %2021 = vmatpush.msra.mxu0 %v2001
        %2022 = vmatpush.msra.mxu0 %v2000
        %2023 = vmatpush.msra.mxu0 %v1999
        %2024 = vmatpush.msra.mxu0 %v1998
        %2025 = vmatmul.f32.gmra.mxu0 %v2007
        %v2026 = vpop.f32.mrf.mxu0
        %v2027 = vadd.f32 0.0, %v2026
        %2028 = vdwg.mxu0
        %v2029 = vxor.u32 %v2027, 2147483648
        %v2030 = vmul.f32 %v2029, 1.442695
        %v2031 = vpow.pop %v2030
        %v2032 = vadd.f32 %v2031, 1.0
        %v2033 = vrcp.pop %v2032
        %v2034 = vmul.f32 %v2032, %v2033
        %v2035 = vsub.f32 1.0, %v2034
        %v2036 = vmul.f32 %v2033, %v2035
        %v2037 = vadd.f32 %v2033, %v2036
        %vm2038 = vweird.f32 %v2032
        %vm2039 = vweird.f32 %v2033
        %vm2040 = vmor %vm2038, %vm2039
        %v2041 = vsel %vm2040, %v2033, %v2037
        %v2042 = vand.u32 2147483647, %v2032
        %vm2043 = vcmp.eq.f32.partialorder %v2042, 8.507059e+37
        %v2044 = vand.u32 %v2032, 2147483648
        %v2045 = vor.u32 1.1754944e-38, %v2044
        %v2046 = vsel %vm2043, %v2045, %v2041
        %v2047 = vmul.f32 1.0, %v2046
        %v2048 = vperm.slane %v2047, 0
        %v2049 = vmul.f32 %v1734, %v2048
        %v2050 = vmul.f32 %v1735, %v2048
        %v2051 = vmul.f32 %v1736, %v2048
        %v2052 = vmul.f32 %v1737, %v2048
        %v2053 = vmul.f32 %v1738, %v2048
        %v2054 = vmul.f32 %v1739, %v2048
        %v2055 = vmul.f32 %v1740, %v2048
        %v2056 = vmul.f32 %v1741, %v2048
        %v2057 = vmul.f32 %v1742, %v2048
        %v2058 = vmul.f32 %v1743, %v2048
        %v2059 = vmul.f32 %v1744, %v2048
        %v2060 = vmul.f32 %v1745, %v2048
        %v2061 = vmul.f32 %v1746, %v2048
        %v2062 = vmul.f32 %v1747, %v2048
        %v2063 = vmul.f32 %v1748, %v2048
        %v2064 = vmul.f32 %v1749, %v2048
        %v2065 = vmul.f32 %v1750, %v2048
        %v2066 = vmul.f32 %v1751, %v2048
        %v2067 = vmul.f32 %v1752, %v2048
        %v2068 = vmul.f32 %v1753, %v2048
        %v2069 = vmul.f32 %v1754, %v2048
        %v2070 = vmul.f32 %v1755, %v2048
        %v2071 = vmul.f32 %v1756, %v2048
        %v2072 = vmul.f32 %v1757, %v2048
        %v2073 = vmul.f32 %v1758, %v2048
        %v2074 = vmul.f32 %v1759, %v2048
        %v2075 = vmul.f32 %v1760, %v2048
        %v2076 = vmul.f32 %v1761, %v2048
        %v2077 = vmul.f32 %v1762, %v2048
        %v2078 = vmul.f32 %v1763, %v2048
        %v2079 = vmul.f32 %v1764, %v2048
        %v2080 = vmul.f32 %v1765, %v2048
        %v2081 = vmul.f32 %v1766, %v2048
        %v2082 = vmul.f32 %v1767, %v2048
        %v2083 = vmul.f32 %v1768, %v2048
        %v2084 = vmul.f32 %v1769, %v2048
        %v2085 = vmul.f32 %v1770, %v2048
        %v2086 = vmul.f32 %v1771, %v2048
        %v2087 = vmul.f32 %v1772, %v2048
        %v2088 = vmul.f32 %v1773, %v2048
        %v2089 = vpack.c.bf16 %v2049, %v2049
        %v2090 = vpack.c.bf16 %v2050, %v2050
        %v2091 = vpack.c.bf16 %v2051, %v2051
        %v2092 = vpack.c.bf16 %v2052, %v2052
        %v2093 = vpack.c.bf16 %v2053, %v2053
        %v2094 = vpack.c.bf16 %v2054, %v2054
        %v2095 = vpack.c.bf16 %v2055, %v2055
        %v2096 = vpack.c.bf16 %v2056, %v2056
        %v2097 = vpack.c.bf16 %v2057, %v2057
        %v2098 = vpack.c.bf16 %v2058, %v2058
        %v2099 = vpack.c.bf16 %v2059, %v2059
        %v2100 = vpack.c.bf16 %v2060, %v2060
        %v2101 = vpack.c.bf16 %v2061, %v2061
        %v2102 = vpack.c.bf16 %v2062, %v2062
        %v2103 = vpack.c.bf16 %v2063, %v2063
        %v2104 = vpack.c.bf16 %v2064, %v2064
        %v2105 = vpack.c.bf16 %v2065, %v2065
        %v2106 = vpack.c.bf16 %v2066, %v2066
        %v2107 = vpack.c.bf16 %v2067, %v2067
        %v2108 = vpack.c.bf16 %v2068, %v2068
        %v2109 = vpack.c.bf16 %v2069, %v2069
        %v2110 = vpack.c.bf16 %v2070, %v2070
        %v2111 = vpack.c.bf16 %v2071, %v2071
        %v2112 = vpack.c.bf16 %v2072, %v2072
        %v2113 = vpack.c.bf16 %v2073, %v2073
        %v2114 = vpack.c.bf16 %v2074, %v2074
        %v2115 = vpack.c.bf16 %v2075, %v2075
        %v2116 = vpack.c.bf16 %v2076, %v2076
        %v2117 = vpack.c.bf16 %v2077, %v2077
        %v2118 = vpack.c.bf16 %v2078, %v2078
        %v2119 = vpack.c.bf16 %v2079, %v2079
        %v2120 = vpack.c.bf16 %v2080, %v2080
        %v2121 = vpack.c.bf16 %v2081, %v2081
        %v2122 = vpack.c.bf16 %v2082, %v2082
        %v2123 = vpack.c.bf16 %v2083, %v2083
        %v2124 = vpack.c.bf16 %v2084, %v2084
        %v2125 = vpack.c.bf16 %v2085, %v2085
        %v2126 = vpack.c.bf16 %v2086, %v2086
        %v2127 = vpack.c.bf16 %v2087, %v2087
        %v2128 = vpack.c.bf16 %v2088, %v2088
        %v2129 = vld [vmem:[%s7] sm:$0xf]
        %v2130 = vld [vmem:[%s7 + $0x4] sm:$0xf]
        %v2131 = vld [vmem:[%s7 + $0x8] sm:$0xf]
        %v2132 = vld [vmem:[%s7 + $0xc] sm:$0xf]
        %v2133 = vld [vmem:[%s7 + $0x10] sm:$0xf]
        %v2134 = vld [vmem:[%s7 + $0x14] sm:$0xf]
        %v2135 = vld [vmem:[%s7 + $0x18] sm:$0xf]
        %v2136 = vld [vmem:[%s7 + $0x1c] sm:$0xf]
        %v2137 = vld [vmem:[%s8] sm:$0x1]
        %v2139 = vperm.slane %v2137, 0
        %v2181 = vunpack.c.l.b16 %v2089
        %v2182 = vunpack.c.l.b16 %v2090
        %v2183 = vunpack.c.l.b16 %v2091
        %v2184 = vunpack.c.l.b16 %v2092
        %v2185 = vunpack.c.l.b16 %v2093
        %v2186 = vunpack.c.l.b16 %v2094
        %v2187 = vunpack.c.l.b16 %v2095
        %v2188 = vunpack.c.l.b16 %v2096
        %v2189 = vunpack.c.l.b16 %v2097
        %v2190 = vunpack.c.l.b16 %v2098
        %v2191 = vunpack.c.l.b16 %v2099
        %v2192 = vunpack.c.l.b16 %v2100
        %v2193 = vunpack.c.l.b16 %v2101
        %v2194 = vunpack.c.l.b16 %v2102
        %v2195 = vunpack.c.l.b16 %v2103
        %v2196 = vunpack.c.l.b16 %v2104
        %v2197 = vunpack.c.l.b16 %v2105
        %v2198 = vunpack.c.l.b16 %v2106
        %v2199 = vunpack.c.l.b16 %v2107
        %v2200 = vunpack.c.l.b16 %v2108
        %v2201 = vunpack.c.l.b16 %v2109
        %v2202 = vunpack.c.l.b16 %v2110
        %v2203 = vunpack.c.l.b16 %v2111
        %v2204 = vunpack.c.l.b16 %v2112
        %v2205 = vunpack.c.l.b16 %v2113
        %v2206 = vunpack.c.l.b16 %v2114
        %v2207 = vunpack.c.l.b16 %v2115
        %v2208 = vunpack.c.l.b16 %v2116
        %v2209 = vunpack.c.l.b16 %v2117
        %v2210 = vunpack.c.l.b16 %v2118
        %v2211 = vunpack.c.l.b16 %v2119
        %v2212 = vunpack.c.l.b16 %v2120
        %v2213 = vunpack.c.l.b16 %v2121
        %v2214 = vunpack.c.l.b16 %v2122
        %v2215 = vunpack.c.l.b16 %v2123
        %v2216 = vunpack.c.l.b16 %v2124
        %v2217 = vunpack.c.l.b16 %v2125
        %v2218 = vunpack.c.l.b16 %v2126
        %v2219 = vunpack.c.l.b16 %v2127
        %v2220 = vunpack.c.l.b16 %v2128
        %v2221 = vrot.slane %v2182, 7
        %v2222 = vsel %vm1818, %v2221, %v2181
        %v2223 = vrot.slane %v2183, 6
        %v2224 = vsel %vm1821, %v2223, %v2222
        %v2225 = vrot.slane %v2184, 5
        %v2226 = vsel %vm1824, %v2225, %v2224
        %v2227 = vrot.slane %v2185, 4
        %v2228 = vsel %vm1827, %v2227, %v2226
        %v2229 = vrot.slane %v2186, 3
        %v2230 = vsel %vm1830, %v2229, %v2228
        %v2231 = vrot.slane %v2187, 2
        %v2232 = vsel %vm1833, %v2231, %v2230
        %v2233 = vrot.slane %v2188, 1
        %v2234 = vsel %vm1836, %v2233, %v2232
        %v2235 = vrot.slane %v2190, 7
        %v2236 = vsel %vm1818, %v2235, %v2189
        %v2237 = vrot.slane %v2191, 6
        %v2238 = vsel %vm1821, %v2237, %v2236
        %v2239 = vrot.slane %v2192, 5
        %v2240 = vsel %vm1824, %v2239, %v2238
        %v2241 = vrot.slane %v2193, 4
        %v2242 = vsel %vm1827, %v2241, %v2240
        %v2243 = vrot.slane %v2194, 3
        %v2244 = vsel %vm1830, %v2243, %v2242
        %v2245 = vrot.slane %v2195, 2
        %v2246 = vsel %vm1833, %v2245, %v2244
        %v2247 = vrot.slane %v2196, 1
        %v2248 = vsel %vm1836, %v2247, %v2246
        %v2249 = vrot.slane %v2198, 7
        %v2250 = vsel %vm1818, %v2249, %v2197
        %v2251 = vrot.slane %v2199, 6
        %v2252 = vsel %vm1821, %v2251, %v2250
        %v2253 = vrot.slane %v2200, 5
        %v2254 = vsel %vm1824, %v2253, %v2252
        %v2255 = vrot.slane %v2201, 4
        %v2256 = vsel %vm1827, %v2255, %v2254
        %v2257 = vrot.slane %v2202, 3
        %v2258 = vsel %vm1830, %v2257, %v2256
        %v2259 = vrot.slane %v2203, 2
        %v2260 = vsel %vm1833, %v2259, %v2258
        %v2261 = vrot.slane %v2204, 1
        %v2262 = vsel %vm1836, %v2261, %v2260
        %v2263 = vrot.slane %v2206, 7
        %v2264 = vsel %vm1818, %v2263, %v2205
        %v2265 = vrot.slane %v2207, 6
        %v2266 = vsel %vm1821, %v2265, %v2264
        %v2267 = vrot.slane %v2208, 5
        %v2268 = vsel %vm1824, %v2267, %v2266
        %v2269 = vrot.slane %v2209, 4
        %v2270 = vsel %vm1827, %v2269, %v2268
        %v2271 = vrot.slane %v2210, 3
        %v2272 = vsel %vm1830, %v2271, %v2270
        %v2273 = vrot.slane %v2211, 2
        %v2274 = vsel %vm1833, %v2273, %v2272
        %v2275 = vrot.slane %v2212, 1
        %v2276 = vsel %vm1836, %v2275, %v2274
        %v2277 = vrot.slane %v2214, 7
        %v2278 = vsel %vm1818, %v2277, %v2213
        %v2279 = vrot.slane %v2215, 6
        %v2280 = vsel %vm1821, %v2279, %v2278
        %v2281 = vrot.slane %v2216, 5
        %v2282 = vsel %vm1824, %v2281, %v2280
        %v2283 = vrot.slane %v2217, 4
        %v2284 = vsel %vm1827, %v2283, %v2282
        %v2285 = vrot.slane %v2218, 3
        %v2286 = vsel %vm1830, %v2285, %v2284
        %v2287 = vrot.slane %v2219, 2
        %v2288 = vsel %vm1833, %v2287, %v2286
        %v2289 = vrot.slane %v2220, 1
        %v2290 = vsel %vm1836, %v2289, %v2288
        %v2291 = vpack.c.b16 %v2248, %v2234
        %v2292 = vpack.c.b16 %v2276, %v2262
        %v2293 = vpack.c.b16 %v2290, %v2290
        %v2302 = vunpack.c.l.b16 %v2129
        %v2303 = vunpack.c.l.b16 %v2130
        %v2304 = vunpack.c.l.b16 %v2131
        %v2305 = vunpack.c.l.b16 %v2132
        %v2306 = vunpack.c.l.b16 %v2133
        %v2307 = vunpack.c.l.b16 %v2134
        %v2308 = vunpack.c.l.b16 %v2135
        %v2309 = vunpack.c.l.b16 %v2136
        %v2310 = vpack.c.b16 %v2303, %v2302
        %v2311 = vpack.c.b16 %v2305, %v2304
        %v2312 = vpack.c.b16 %v2307, %v2306
        %v2313 = vpack.c.b16 %v2309, %v2308
        %v2319 = vsel %vm1899, %v2291, 0
        %v2322 = vsel %vm1899, %v2292, 0
        %v2325 = vsel %vm1899, %v2293, 0
        %2327 = vmatpush.bf16.msra.mxu0 0
        %2328 = vmatpush.bf16.msra.mxu0 0
        %2329 = vmatpush.bf16.msra.mxu0 0
        %2330 = vmatpush.bf16.msra.mxu0 0
        %2331 = vmatpush.bf16.msra.mxu0 %v2313
        %2332 = vmatpush.bf16.msra.mxu0 %v2312
        %2333 = vmatpush.bf16.msra.mxu0 %v2311
        %2334 = vmatpush.bf16.msra.mxu0 %v2310
        %2335 = vmatmul.bf16.gmra.mxu0 %v2319
        %v2336 = vpop.f32.mrf.mxu0
        %v2337 = vadd.f32 %v2139, %v2336
        %v2338 = vpop.f32.mrf.mxu0
        %v2339 = vadd.f32 %v2139, %v2338
        %2340 = vmatmul.bf16.gmra.mxu0 %v2322
        %v2341 = vpop.f32.mrf.mxu0
        %v2342 = vadd.f32 %v2139, %v2341
        %v2343 = vpop.f32.mrf.mxu0
        %v2344 = vadd.f32 %v2139, %v2343
        %2345 = vmatmul.bf16.gmra.mxu0 %v2325
        %v2346 = vpop.f32.mrf.mxu0
        %v2347 = vadd.f32 %v2139, %v2346
        %v2348 = vpop.f32.mrf.mxu0
        %2349 = vdwg.mxu0
        %v2355 = vrot.slane %v2337, 1
        %v2356 = vrot.slane %v2337, 2
        %v2357 = vrot.slane %v2337, 3
        %v2358 = vrot.slane %v2337, 4
        %v2359 = vrot.slane %v2337, 5
        %v2360 = vrot.slane %v2337, 6
        %v2361 = vrot.slane %v2337, 7
        %v2362 = vrot.slane %v2339, 1
        %v2363 = vrot.slane %v2339, 2
        %v2364 = vrot.slane %v2339, 3
        %v2365 = vrot.slane %v2339, 4
        %v2366 = vrot.slane %v2339, 5
        %v2367 = vrot.slane %v2339, 6
        %v2368 = vrot.slane %v2339, 7
        %v2369 = vrot.slane %v2342, 1
        %v2370 = vrot.slane %v2342, 2
        %v2371 = vrot.slane %v2342, 3
        %v2372 = vrot.slane %v2342, 4
        %v2373 = vrot.slane %v2342, 5
        %v2374 = vrot.slane %v2342, 6
        %v2375 = vrot.slane %v2342, 7
        %v2376 = vrot.slane %v2344, 1
        %v2377 = vrot.slane %v2344, 2
        %v2378 = vrot.slane %v2344, 3
        %v2379 = vrot.slane %v2344, 4
        %v2380 = vrot.slane %v2344, 5
        %v2381 = vrot.slane %v2344, 6
        %v2382 = vrot.slane %v2344, 7
        %v2383 = vrot.slane %v2347, 1
        %v2384 = vrot.slane %v2347, 2
        %v2385 = vrot.slane %v2347, 3
        %v2386 = vrot.slane %v2347, 4
        %v2387 = vrot.slane %v2347, 5
        %v2388 = vrot.slane %v2347, 6
        %v2389 = vrot.slane %v2347, 7
        %2390 = vst [vmem:[#allocation1] ss:$9 sm:$0xff] %v2337
        %s2391 = scalar_lea.vmem [#allocation1], 1
        %2392 = vst [vmem:[%s2391] ss:$9 sm:$0xff] %v2355
        %s2393 = scalar_lea.vmem [#allocation1], 2
        %2394 = vst [vmem:[%s2393] ss:$9 sm:$0xff] %v2356
        %s2395 = scalar_lea.vmem [#allocation1], 3
        %2396 = vst [vmem:[%s2395] ss:$9 sm:$0xff] %v2357
        %s2397 = scalar_lea.vmem [#allocation1], 4
        %2398 = vst [vmem:[%s2397] ss:$9 sm:$0xff] %v2358
        %v2399 = vld [vmem:[#allocation1] sm:$0xff]
        %2400 = vst [vmem:[#allocation1] ss:$9 sm:$0xff] %v2359
        %2401 = vst [vmem:[%s2391] ss:$9 sm:$0xff] %v2360
        %2402 = vst [vmem:[%s2393] ss:$9 sm:$0xff] %v2361
        %2403 = vst [vmem:[%s2395] ss:$9 sm:$0xff] %v2339
        %2404 = vst [vmem:[%s2397] ss:$9 sm:$0xff] %v2362
        %v2405 = vld [vmem:[#allocation1] sm:$0xff]
        %2406 = vst [vmem:[#allocation1] ss:$9 sm:$0xff] %v2363
        %2407 = vst [vmem:[%s2391] ss:$9 sm:$0xff] %v2364
        %2408 = vst [vmem:[%s2393] ss:$9 sm:$0xff] %v2365
        %2409 = vst [vmem:[%s2395] ss:$9 sm:$0xff] %v2366
        %2410 = vst [vmem:[%s2397] ss:$9 sm:$0xff] %v2367
        %v2411 = vld [vmem:[#allocation1] sm:$0xff]
        %2412 = vst [vmem:[#allocation1] ss:$9 sm:$0xff] %v2368
        %2413 = vst [vmem:[%s2391] ss:$9 sm:$0xff] %v2342
        %2414 = vst [vmem:[%s2393] ss:$9 sm:$0xff] %v2369
        %2415 = vst [vmem:[%s2395] ss:$9 sm:$0xff] %v2370
        %2416 = vst [vmem:[%s2397] ss:$9 sm:$0xff] %v2371
        %v2417 = vld [vmem:[#allocation1] sm:$0xff]
        %2418 = vst [vmem:[#allocation1] ss:$9 sm:$0xff] %v2372
        %2419 = vst [vmem:[%s2391] ss:$9 sm:$0xff] %v2373
        %2420 = vst [vmem:[%s2393] ss:$9 sm:$0xff] %v2374
        %2421 = vst [vmem:[%s2395] ss:$9 sm:$0xff] %v2375
        %2422 = vst [vmem:[%s2397] ss:$9 sm:$0xff] %v2344
        %v2423 = vld [vmem:[#allocation1] sm:$0xff]
        %2424 = vst [vmem:[#allocation1] ss:$9 sm:$0xff] %v2376
        %2425 = vst [vmem:[%s2391] ss:$9 sm:$0xff] %v2377
        %2426 = vst [vmem:[%s2393] ss:$9 sm:$0xff] %v2378
        %2427 = vst [vmem:[%s2395] ss:$9 sm:$0xff] %v2379
        %2428 = vst [vmem:[%s2397] ss:$9 sm:$0xff] %v2380
        %v2429 = vld [vmem:[#allocation1] sm:$0xff]
        %2430 = vst [vmem:[#allocation1] ss:$9 sm:$0xff] %v2381
        %2431 = vst [vmem:[%s2391] ss:$9 sm:$0xff] %v2382
        %2432 = vst [vmem:[%s2393] ss:$9 sm:$0xff] %v2347
        %2433 = vst [vmem:[%s2395] ss:$9 sm:$0xff] %v2383
        %2434 = vst [vmem:[%s2397] ss:$9 sm:$0xff] %v2384
        %v2435 = vld [vmem:[#allocation1] sm:$0xff]
        %2436 = vst [vmem:[#allocation1] ss:$9 sm:$0xff] %v2385
        %2437 = vst [vmem:[%s2391] ss:$9 sm:$0xff] %v2386
        %2438 = vst [vmem:[%s2393] ss:$9 sm:$0xff] %v2387
        %2439 = vst [vmem:[%s2395] ss:$9 sm:$0xff] %v2388
        %2440 = vst [vmem:[%s2397] ss:$9 sm:$0xff] %v2389
        %v2441 = vld [vmem:[#allocation1] sm:$0xff]
        %vm2450 = vcmask 1044480
        %v2451 = vsel %vm2450, %v2399, -inf
        %v2452 = vrot.slane %v2451, 4
        %v2453 = vmax.f32 %v2451, %v2452
        %v2454 = vrot.slane %v2453, 2
        %v2455 = vmax.f32 %v2453, %v2454
        %v2456 = vrot.slane %v2455, 1
        %v2457 = vmax.f32 %v2455, %v2456
        %v2458 = vsel %vm2450, %v2405, -inf
        %v2459 = vrot.slane %v2458, 4
        %v2460 = vmax.f32 %v2458, %v2459
        %v2461 = vrot.slane %v2460, 2
        %v2462 = vmax.f32 %v2460, %v2461
        %v2463 = vrot.slane %v2462, 1
        %v2464 = vmax.f32 %v2462, %v2463
        %v2465 = vsel %vm2450, %v2411, -inf
        %v2466 = vrot.slane %v2465, 4
        %v2467 = vmax.f32 %v2465, %v2466
        %v2468 = vrot.slane %v2467, 2
        %v2469 = vmax.f32 %v2467, %v2468
        %v2470 = vrot.slane %v2469, 1
        %v2471 = vmax.f32 %v2469, %v2470
        %v2472 = vsel %vm2450, %v2417, -inf
        %v2473 = vrot.slane %v2472, 4
        %v2474 = vmax.f32 %v2472, %v2473
        %v2475 = vrot.slane %v2474, 2
        %v2476 = vmax.f32 %v2474, %v2475
        %v2477 = vrot.slane %v2476, 1
        %v2478 = vmax.f32 %v2476, %v2477
        %v2479 = vsel %vm2450, %v2423, -inf
        %v2480 = vrot.slane %v2479, 4
        %v2481 = vmax.f32 %v2479, %v2480
        %v2482 = vrot.slane %v2481, 2
        %v2483 = vmax.f32 %v2481, %v2482
        %v2484 = vrot.slane %v2483, 1
        %v2485 = vmax.f32 %v2483, %v2484
        %v2486 = vsel %vm2450, %v2429, -inf
        %v2487 = vrot.slane %v2486, 4
        %v2488 = vmax.f32 %v2486, %v2487
        %v2489 = vrot.slane %v2488, 2
        %v2490 = vmax.f32 %v2488, %v2489
        %v2491 = vrot.slane %v2490, 1
        %v2492 = vmax.f32 %v2490, %v2491
        %v2493 = vsel %vm2450, %v2435, -inf
        %v2494 = vrot.slane %v2493, 4
        %v2495 = vmax.f32 %v2493, %v2494
        %v2496 = vrot.slane %v2495, 2
        %v2497 = vmax.f32 %v2495, %v2496
        %v2498 = vrot.slane %v2497, 1
        %v2499 = vmax.f32 %v2497, %v2498
        %v2500 = vsel %vm2450, %v2441, -inf
        %v2501 = vrot.slane %v2500, 4
        %v2502 = vmax.f32 %v2500, %v2501
        %v2503 = vrot.slane %v2502, 2
        %v2504 = vmax.f32 %v2502, %v2503
        %v2505 = vrot.slane %v2504, 1
        %v2506 = vmax.f32 %v2504, %v2505
        %v2507 = vld [vmem:[%s504] sm:$0xff]
        %v2509 = vrot.slane %v2507, 1
        %v2510 = vrot.slane %v2507, 2
        %v2511 = vrot.slane %v2507, 3
        %v2512 = vrot.slane %v2507, 4
        %v2513 = vrot.slane %v2507, 5
        %v2514 = vrot.slane %v2507, 6
        %v2515 = vrot.slane %v2507, 7
        %v2524 = vadd.f32 %v2457, %v2507
        %v2525 = vadd.f32 %v2464, %v2509
        %v2526 = vadd.f32 %v2471, %v2510
        %v2527 = vadd.f32 %v2478, %v2511
        %v2528 = vadd.f32 %v2485, %v2512
        %v2529 = vadd.f32 %v2492, %v2513
        %v2530 = vadd.f32 %v2499, %v2514
        %v2531 = vadd.f32 %v2506, %v2515
        %s2532 = sld [smem:[#allocation2 + $0x100]]
        %s2533 = sld [smem:[#allocation2 + $0x101]]
        %s2534 = sld [smem:[#allocation2 + $0x102]]
        %v2543 = vrot.slane %v2525, 7
        %v2544 = vsel %vm1818, %v2543, %v2524
        %v2545 = vrot.slane %v2526, 6
        %v2546 = vsel %vm1821, %v2545, %v2544
        %v2547 = vrot.slane %v2527, 5
        %v2548 = vsel %vm1824, %v2547, %v2546
        %v2549 = vrot.slane %v2528, 4
        %v2550 = vsel %vm1827, %v2549, %v2548
        %v2551 = vrot.slane %v2529, 3
        %v2552 = vsel %vm1830, %v2551, %v2550
        %v2553 = vrot.slane %v2530, 2
        %v2554 = vsel %vm1833, %v2553, %v2552
        %v2555 = vrot.slane %v2531, 1
        %v2556 = vsel %vm1836, %v2555, %v2554
        %v2558 = vrot.slane %v2556, 4
        %v2559 = vadd.f32 %v2556, %v2558
        %v2560 = vrot.slane %v2559, 2
        %v2561 = vadd.f32 %v2559, %v2560
        %v2562 = vrot.slane %v2561, 1
        %v2563 = vadd.f32 %v2561, %v2562
        %v2564 = vrcp.pop 8.0
        %v2565 = vmul.f32 8.0, %v2564
        %v2566 = vsub.f32 1.0, %v2565
        %v2567 = vmul.f32 %v2564, %v2566
        %v2568 = vadd.f32 %v2564, %v2567
        %vm2569 = vweird.f32 %v2564
        %v2570 = vsel %vm2569, %v2564, %v2568
        %v2571 = vmul.f32 %v2563, %v2570
        %vm2572 = vcmp.eq.s32.totalorder %v609, 0
        %2573 = vrot.lane.b32.xlu0 %v2571, 1
        %v2574 = vpop.permute.xlu0 %2573
        %v2575 = vsel %vm2572, 0.0, %v2574
        %vm2576 = vcmp.eq.s32.totalorder %v609, 127
        %2577 = vrot.lane.b32.xlu0 %v2571, 127
        %v2578 = vpop.permute.xlu0 %2577
        %v2579 = vsel %vm2576, 0.0, %v2578
        %v2580 = vstv %s2532
        %v2581 = vmul.f32 %v2580, %v2575
        %v2582 = vstv %s2533
        %v2583 = vmul.f32 %v2582, %v2571
        %v2584 = vadd.f32 %v2581, %v2583
        %v2585 = vstv %s2534
        %v2586 = vmul.f32 %v2585, %v2579
        %v2587 = vadd.f32 %v2584, %v2586
        %v2588 = vxor.u32 %v2587, 2147483648
        %v2589 = vmul.f32 %v2588, 1.442695
        %v2590 = vpow.pop %v2589
        %v2591 = vadd.f32 %v2590, 1.0
        %v2592 = vrcp.pop %v2591
        %v2593 = vmul.f32 %v2591, %v2592
        %v2594 = vsub.f32 1.0, %v2593
        %v2595 = vmul.f32 %v2592, %v2594
        %v2596 = vadd.f32 %v2592, %v2595
        %vm2597 = vweird.f32 %v2591
        %vm2598 = vweird.f32 %v2592
        %vm2599 = vmor %vm2597, %vm2598
        %v2600 = vsel %vm2599, %v2592, %v2596
        %v2601 = vand.u32 2147483647, %v2591
        %vm2602 = vcmp.eq.f32.partialorder %v2601, 8.507059e+37
        %v2603 = vand.u32 %v2591, 2147483648
        %v2604 = vor.u32 1.1754944e-38, %v2603
        %v2605 = vsel %vm2602, %v2604, %v2600
        %v2606 = vmul.f32 1.0, %v2605
        %v2607 = vperm.slane %v2606, 0
        %v2608 = vmul.f32 %v2524, %v2607
        %v2609 = vmul.f32 %v2525, %v2607
        %v2610 = vmul.f32 %v2526, %v2607
        %v2611 = vmul.f32 %v2527, %v2607
        %v2612 = vmul.f32 %v2528, %v2607
        %v2613 = vmul.f32 %v2529, %v2607
        %v2614 = vmul.f32 %v2530, %v2607
        %v2615 = vmul.f32 %v2531, %v2607
        %v2616 = vpack.c.bf16 %v2608, %v2608
        %v2617 = vpack.c.bf16 %v2609, %v2609
        %v2618 = vpack.c.bf16 %v2610, %v2610
        %v2619 = vpack.c.bf16 %v2611, %v2611
        %v2620 = vpack.c.bf16 %v2612, %v2612
        %v2621 = vpack.c.bf16 %v2613, %v2613
        %v2622 = vpack.c.bf16 %v2614, %v2614
        %v2623 = vpack.c.bf16 %v2615, %v2615
        %v2624 = vld [vmem:[%s9] sm:$0xff]
        %v2625 = vld [vmem:[%s9 + $0x8] sm:$0xff]
        %v2626 = vld [vmem:[%s9 + $0x10] sm:$0xff]
        %v2627 = vld [vmem:[%s9 + $0x18] sm:$0xff]
        %v2628 = vld [vmem:[%s9 + $0x20] sm:$0xff]
        %v2629 = vld [vmem:[%s9 + $0x28] sm:$0xff]
        %v2630 = vld [vmem:[%s9 + $0x30] sm:$0xff]
        %v2631 = vld [vmem:[%s9 + $0x38] sm:$0xff]
        %v2632 = vld [vmem:[%s9 + $0x40] sm:$0xff]
        %v2633 = vld [vmem:[%s9 + $0x48] sm:$0xff]
        %v2634 = vld [vmem:[%s9 + $0x50] sm:$0xff]
        %v2635 = vld [vmem:[%s9 + $0x58] sm:$0xff]
        %v2636 = vld [vmem:[%s9 + $0x60] sm:$0xff]
        %v2637 = vld [vmem:[%s9 + $0x68] sm:$0xff]
        %v2638 = vld [vmem:[%s9 + $0x70] sm:$0xff]
        %v2639 = vld [vmem:[%s9 + $0x78] sm:$0xff]
        %v2640 = vld [vmem:[%s10] sm:$0x3]
        %v2642 = vperm.slane %v2640, 0
        %v2643 = vperm.slane %v2640, 1
        %v2654 = vunpack.c.l.b16 %v2616
        %v2655 = vunpack.c.l.b16 %v2617
        %v2656 = vunpack.c.l.b16 %v2618
        %v2657 = vunpack.c.l.b16 %v2619
        %v2658 = vunpack.c.l.b16 %v2620
        %v2659 = vunpack.c.l.b16 %v2621
        %v2660 = vunpack.c.l.b16 %v2622
        %v2661 = vunpack.c.l.b16 %v2623
        %v2662 = vrot.slane %v2655, 7
        %v2663 = vsel %vm1818, %v2662, %v2654
        %v2664 = vrot.slane %v2656, 6
        %v2665 = vsel %vm1821, %v2664, %v2663
        %v2666 = vrot.slane %v2657, 5
        %v2667 = vsel %vm1824, %v2666, %v2665
        %v2668 = vrot.slane %v2658, 4
        %v2669 = vsel %vm1827, %v2668, %v2667
        %v2670 = vrot.slane %v2659, 3
        %v2671 = vsel %vm1830, %v2670, %v2669
        %v2672 = vrot.slane %v2660, 2
        %v2673 = vsel %vm1833, %v2672, %v2671
        %v2674 = vrot.slane %v2661, 1
        %v2675 = vsel %vm1836, %v2674, %v2673
        %v2676 = vpack.c.b16 %v2675, %v2675
        %v2694 = vunpack.c.l.b16 %v2624
        %v2695 = vunpack.c.h.b16 %v2624
        %v2696 = vunpack.c.l.b16 %v2625
        %v2697 = vunpack.c.h.b16 %v2625
        %v2698 = vunpack.c.l.b16 %v2626
        %v2699 = vunpack.c.h.b16 %v2626
        %v2700 = vunpack.c.l.b16 %v2627
        %v2701 = vunpack.c.h.b16 %v2627
        %v2702 = vunpack.c.l.b16 %v2628
        %v2703 = vunpack.c.h.b16 %v2628
        %v2704 = vunpack.c.l.b16 %v2629
        %v2705 = vunpack.c.h.b16 %v2629
        %v2706 = vunpack.c.l.b16 %v2630
        %v2707 = vunpack.c.h.b16 %v2630
        %v2708 = vunpack.c.l.b16 %v2631
        %v2709 = vunpack.c.h.b16 %v2631
        %v2710 = vunpack.c.l.b16 %v2632
        %v2711 = vunpack.c.h.b16 %v2632
        %v2712 = vunpack.c.l.b16 %v2633
        %v2713 = vunpack.c.h.b16 %v2633
        %v2714 = vunpack.c.l.b16 %v2634
        %v2715 = vunpack.c.h.b16 %v2634
        %v2716 = vunpack.c.l.b16 %v2635
        %v2717 = vunpack.c.h.b16 %v2635
        %v2718 = vunpack.c.l.b16 %v2636
        %v2719 = vunpack.c.h.b16 %v2636
        %v2720 = vunpack.c.l.b16 %v2637
        %v2721 = vunpack.c.h.b16 %v2637
        %v2722 = vunpack.c.l.b16 %v2638
        %v2723 = vunpack.c.h.b16 %v2638
        %v2724 = vunpack.c.l.b16 %v2639
        %v2725 = vunpack.c.h.b16 %v2639
        %v2726 = vpack.c.b16 %v2696, %v2694
        %v2727 = vpack.c.b16 %v2697, %v2695
        %v2728 = vpack.c.b16 %v2700, %v2698
        %v2729 = vpack.c.b16 %v2701, %v2699
        %v2730 = vpack.c.b16 %v2704, %v2702
        %v2731 = vpack.c.b16 %v2705, %v2703
        %v2732 = vpack.c.b16 %v2708, %v2706
        %v2733 = vpack.c.b16 %v2709, %v2707
        %v2734 = vpack.c.b16 %v2712, %v2710
        %v2735 = vpack.c.b16 %v2713, %v2711
        %v2736 = vpack.c.b16 %v2716, %v2714
        %v2737 = vpack.c.b16 %v2717, %v2715
        %v2738 = vpack.c.b16 %v2720, %v2718
        %v2739 = vpack.c.b16 %v2721, %v2719
        %v2740 = vpack.c.b16 %v2724, %v2722
        %v2741 = vpack.c.b16 %v2725, %v2723
        %2758 = vmatpush.bf16.msra.mxu0 %v2740
        %2759 = vmatpush.bf16.msra.mxu0 %v2738
        %2760 = vmatpush.bf16.msra.mxu0 %v2736
        %2761 = vmatpush.bf16.msra.mxu0 %v2734
        %2762 = vmatpush.bf16.msra.mxu0 %v2732
        %2763 = vmatpush.bf16.msra.mxu0 %v2730
        %2764 = vmatpush.bf16.msra.mxu0 %v2728
        %2765 = vmatpush.bf16.msra.mxu0 %v2726
        %2766 = vmatmul.bf16.gmra.mxu0 %v2676
        %v2767 = vpop.f32.mrf.mxu0
        %v2768 = vadd.f32 %v2642, %v2767
        %v2769 = vpop.f32.mrf.mxu0
        %2770 = vdwg.mxu0
        %2771 = vmatpush.bf16.msra.mxu0 %v2741
        %2772 = vmatpush.bf16.msra.mxu0 %v2739
        %2773 = vmatpush.bf16.msra.mxu0 %v2737
        %2774 = vmatpush.bf16.msra.mxu0 %v2735
        %2775 = vmatpush.bf16.msra.mxu0 %v2733
        %2776 = vmatpush.bf16.msra.mxu0 %v2731
        %2777 = vmatpush.bf16.msra.mxu0 %v2729
        %2778 = vmatpush.bf16.msra.mxu0 %v2727
        %2779 = vmatmul.bf16.gmra.mxu0 %v2676
        %v2780 = vpop.f32.mrf.mxu0
        %v2781 = vadd.f32 %v2643, %v2780
        %v2782 = vpop.f32.mrf.mxu0
        %2783 = vdwg.mxu0
        %v2786 = vrot.slane %v2781, 6
        %vm2787 = vcmask 1041408
        %v2788 = vsel %vm2787, %v2768, %v2786
        %vm2789 = vcmask 1043458
        %v2790 = vsel %vm2789, %v2768, %v2786
        %v2791 = vrot.slane %v2790, 2
        %vm2792 = vcmask 1045508
        %v2793 = vsel %vm2792, %v2768, %v2786
        %v2794 = vrot.slane %v2793, 4
        %vm2795 = vcmask 1045504
        %v2796 = vsel %vm2795, %v2786, %v2768
        %v2797 = vrot.slane %v2796, 6
        %2798 = vst [vmem:[#allocation1] ss:$4 sm:$0xff] %v2788
        %v2799 = vld.sshfl [vmem:[#allocation1] sm:$0xff pattern:$0x73625140]
        %v2800 = vld.sshfl [vmem:[#allocation1 + $0x8] sm:$0xff pattern:$0x73625140]
        %s2801 = scalar_lea.vmem [#allocation1], 32
        %2802 = vst [vmem:[%s2801] ss:$4 sm:$0xff] %v2791
        %v2803 = vld.sshfl [vmem:[#allocation1 + $0x20] sm:$0xff pattern:$0x73625140]
        %v2804 = vld.sshfl [vmem:[#allocation1 + $0x28] sm:$0xff pattern:$0x73625140]
        %2805 = vst [vmem:[#allocation1] ss:$4 sm:$0xff] %v2794
        %v2806 = vld.sshfl [vmem:[#allocation1] sm:$0xff pattern:$0x73625140]
        %v2807 = vld.sshfl [vmem:[#allocation1 + $0x8] sm:$0xff pattern:$0x73625140]
        %2808 = vst [vmem:[%s2801] ss:$4 sm:$0xff] %v2797
        %v2809 = vld.sshfl [vmem:[#allocation1 + $0x20] sm:$0xff pattern:$0x73625140]
        %v2810 = vld.sshfl [vmem:[#allocation1 + $0x28] sm:$0xff pattern:$0x73625140]
        %v2819 = vsel %vm2787, %v2799, -inf
        %v2820 = vrot.slane %v2819, 4
        %v2821 = vmax.f32 %v2819, %v2820
        %v2822 = vrot.slane %v2821, 2
        %v2823 = vmax.f32 %v2821, %v2822
        %v2824 = vrot.slane %v2823, 1
        %v2825 = vmax.f32 %v2823, %v2824
        %v2826 = vsel %vm2787, %v2800, -inf
        %v2827 = vrot.slane %v2826, 4
        %v2828 = vmax.f32 %v2826, %v2827
        %v2829 = vrot.slane %v2828, 2
        %v2830 = vmax.f32 %v2828, %v2829
        %v2831 = vrot.slane %v2830, 1
        %v2832 = vmax.f32 %v2830, %v2831
        %v2833 = vsel %vm2787, %v2803, -inf
        %v2834 = vrot.slane %v2833, 4
        %v2835 = vmax.f32 %v2833, %v2834
        %v2836 = vrot.slane %v2835, 2
        %v2837 = vmax.f32 %v2835, %v2836
        %v2838 = vrot.slane %v2837, 1
        %v2839 = vmax.f32 %v2837, %v2838
        %v2840 = vsel %vm2787, %v2804, -inf
        %v2841 = vrot.slane %v2840, 4
        %v2842 = vmax.f32 %v2840, %v2841
        %v2843 = vrot.slane %v2842, 2
        %v2844 = vmax.f32 %v2842, %v2843
        %v2845 = vrot.slane %v2844, 1
        %v2846 = vmax.f32 %v2844, %v2845
        %v2847 = vsel %vm2787, %v2806, -inf
        %v2848 = vrot.slane %v2847, 4
        %v2849 = vmax.f32 %v2847, %v2848
        %v2850 = vrot.slane %v2849, 2
        %v2851 = vmax.f32 %v2849, %v2850
        %v2852 = vrot.slane %v2851, 1
        %v2853 = vmax.f32 %v2851, %v2852
        %v2854 = vsel %vm2787, %v2807, -inf
        %v2855 = vrot.slane %v2854, 4
        %v2856 = vmax.f32 %v2854, %v2855
        %v2857 = vrot.slane %v2856, 2
        %v2858 = vmax.f32 %v2856, %v2857
        %v2859 = vrot.slane %v2858, 1
        %v2860 = vmax.f32 %v2858, %v2859
        %v2861 = vsel %vm2787, %v2809, -inf
        %v2862 = vrot.slane %v2861, 4
        %v2863 = vmax.f32 %v2861, %v2862
        %v2864 = vrot.slane %v2863, 2
        %v2865 = vmax.f32 %v2863, %v2864
        %v2866 = vrot.slane %v2865, 1
        %v2867 = vmax.f32 %v2865, %v2866
        %v2868 = vsel %vm2787, %v2810, -inf
        %v2869 = vrot.slane %v2868, 4
        %v2870 = vmax.f32 %v2868, %v2869
        %v2871 = vrot.slane %v2870, 2
        %v2872 = vmax.f32 %v2870, %v2871
        %v2873 = vrot.slane %v2872, 1
        %v2874 = vmax.f32 %v2872, %v2873
        %v2875 = vld [vmem:[%s509] sm:$0xff]
        %2877 = vst [vmem:[#allocation1] ss:$2 sm:$0xff] %v2875
        %v2878 = vld.sshfl [vmem:[#allocation1] sm:$0xff pattern:$0x75316420]
        %v2879 = vld.sshfl [vmem:[#allocation1 + $0x8] sm:$0xff pattern:$0x75316420]
        %v2880 = vrot.slane %v2878, 1
        %v2881 = vrot.slane %v2879, 1
        %v2882 = vrot.slane %v2878, 2
        %v2883 = vrot.slane %v2879, 2
        %v2884 = vrot.slane %v2878, 3
        %v2885 = vrot.slane %v2879, 3
        %v2894 = vadd.f32 %v2825, %v2878
        %v2895 = vadd.f32 %v2832, %v2879
        %v2896 = vadd.f32 %v2839, %v2880
        %v2897 = vadd.f32 %v2846, %v2881
        %v2898 = vadd.f32 %v2853, %v2882
        %v2899 = vadd.f32 %v2860, %v2883
        %v2900 = vadd.f32 %v2867, %v2884
        %v2901 = vadd.f32 %v2874, %v2885
        %s2902 = sld [smem:[#allocation2 + $0x180]]
        %s2903 = sld [smem:[#allocation2 + $0x181]]
        %s2904 = sld [smem:[#allocation2 + $0x182]]
        %v2913 = vrot.slane %v2896, 7
        %v2914 = vsel %vm1818, %v2913, %v2894
        %v2915 = vrot.slane %v2898, 6
        %v2916 = vsel %vm1821, %v2915, %v2914
        %v2917 = vrot.slane %v2900, 5
        %v2918 = vsel %vm1824, %v2917, %v2916
        %v2919 = vrot.slane %v2897, 7
        %v2920 = vsel %vm1818, %v2919, %v2895
        %v2921 = vrot.slane %v2899, 6
        %v2922 = vsel %vm1821, %v2921, %v2920
        %v2923 = vrot.slane %v2901, 5
        %v2924 = vsel %vm1824, %v2923, %v2922
        %vm2927 = vcmask 1043456
        %v2928 = vsel %vm2927, %v2918, 0.0
        %v2929 = vrot.slane %v2928, 4
        %v2930 = vadd.f32 %v2928, %v2929
        %v2931 = vrot.slane %v2930, 2
        %v2932 = vadd.f32 %v2930, %v2931
        %v2933 = vrot.slane %v2932, 1
        %v2934 = vadd.f32 %v2932, %v2933
        %v2935 = vsel %vm2927, %v2924, 0.0
        %v2936 = vrot.slane %v2935, 4
        %v2937 = vadd.f32 %v2935, %v2936
        %v2938 = vrot.slane %v2937, 2
        %v2939 = vadd.f32 %v2937, %v2938
        %v2940 = vrot.slane %v2939, 1
        %v2941 = vadd.f32 %v2939, %v2940
        %v2942 = vrcp.pop 4.0
        %v2943 = vmul.f32 4.0, %v2942
        %v2944 = vsub.f32 1.0, %v2943
        %v2945 = vmul.f32 %v2942, %v2944
        %v2946 = vadd.f32 %v2942, %v2945
        %vm2947 = vweird.f32 %v2942
        %v2948 = vsel %vm2947, %v2942, %v2946
        %v2949 = vmul.f32 %v2934, %v2948
        %v2950 = vmul.f32 %v2941, %v2948
        %v2951 = vadd.s32 %v609, 128
        %vm2952 = vcmp.eq.s32.totalorder %v2951, 0
        %2953 = vrot.lane.b32.xlu0 %v2949, 1
        %v2954 = vpop.permute.xlu0 %2953
        %2955 = vrot.lane.b32.xlu0 %v2950, 1
        %v2956 = vpop.permute.xlu0 %2955
        %vm2957 = vcmp.lt.s32.totalorder %v609, 1
        %v2958 = vsel %vm2957, %v2954, %v2956
        %v2959 = vsel %vm2957, %v2956, %v2954
        %v2960 = vsel %vm2572, 0.0, %v2959
        %v2961 = vsel %vm2952, 0.0, %v2958
        %vm2962 = vcmp.eq.s32.totalorder %v609, 255
        %vm2963 = vcmp.eq.s32.totalorder %v2951, 255
        %2964 = vrot.lane.b32.xlu0 %v2949, 127
        %v2965 = vpop.permute.xlu0 %2964
        %2966 = vrot.lane.b32.xlu0 %v2950, 127
        %v2967 = vpop.permute.xlu0 %2966
        %vm2968 = vcmp.lt.s32.totalorder %v609, 127
        %v2969 = vsel %vm2968, %v2965, %v2967
        %v2970 = vsel %vm2968, %v2967, %v2965
        %v2971 = vsel %vm2962, 0.0, %v2969
        %v2972 = vsel %vm2963, 0.0, %v2970
        %v2973 = vstv %s2902
        %v2974 = vmul.f32 %v2973, %v2960
        %v2975 = vmul.f32 %v2973, %v2961
        %v2976 = vstv %s2903
        %v2977 = vmul.f32 %v2976, %v2949
        %v2978 = vmul.f32 %v2976, %v2950
        %v2979 = vadd.f32 %v2974, %v2977
        %v2980 = vadd.f32 %v2975, %v2978
        %v2981 = vstv %s2904
        %v2982 = vmul.f32 %v2981, %v2971
        %v2983 = vmul.f32 %v2981, %v2972
        %v2984 = vadd.f32 %v2979, %v2982
        %v2985 = vadd.f32 %v2980, %v2983
        %v2986 = vxor.u32 %v2984, 2147483648
        %v2987 = vxor.u32 %v2985, 2147483648
        %v2988 = vmul.f32 %v2986, 1.442695
        %v2989 = vpow.pop %v2988
        %v2990 = vmul.f32 %v2987, 1.442695
        %v2991 = vpow.pop %v2990
        %v2992 = vadd.f32 %v2989, 1.0
        %v2993 = vadd.f32 %v2991, 1.0
        %v2994 = vrcp.pop %v2992
        %v2995 = vmul.f32 %v2992, %v2994
        %v2996 = vsub.f32 1.0, %v2995
        %v2997 = vmul.f32 %v2994, %v2996
        %v2998 = vadd.f32 %v2994, %v2997
        %vm2999 = vweird.f32 %v2992
        %vm3000 = vweird.f32 %v2994
        %vm3001 = vmor %vm2999, %vm3000
        %v3002 = vsel %vm3001, %v2994, %v2998
        %v3003 = vand.u32 2147483647, %v2992
        %vm3004 = vcmp.eq.f32.partialorder %v3003, 8.507059e+37
        %v3005 = vand.u32 %v2992, 2147483648
        %v3006 = vor.u32 1.1754944e-38, %v3005
        %v3007 = vsel %vm3004, %v3006, %v3002
        %v3008 = vmul.f32 1.0, %v3007
        %v3009 = vrcp.pop %v2993
        %v3010 = vmul.f32 %v2993, %v3009
        %v3011 = vsub.f32 1.0, %v3010
        %v3012 = vmul.f32 %v3009, %v3011
        %v3013 = vadd.f32 %v3009, %v3012
        %vm3014 = vweird.f32 %v2993
        %vm3015 = vweird.f32 %v3009
        %vm3016 = vmor %vm3014, %vm3015
        %v3017 = vsel %vm3016, %v3009, %v3013
        %v3018 = vand.u32 2147483647, %v2993
        %vm3019 = vcmp.eq.f32.partialorder %v3018, 8.507059e+37
        %v3020 = vand.u32 %v2993, 2147483648
        %v3021 = vor.u32 1.1754944e-38, %v3020
        %v3022 = vsel %vm3019, %v3021, %v3017
        %v3023 = vmul.f32 1.0, %v3022
        %v3024 = vperm.slane %v3008, 0
        %v3025 = vperm.slane %v3023, 0
        %v3026 = vmul.f32 %v2894, %v3024
        %v3027 = vmul.f32 %v2895, %v3025
        %v3028 = vmul.f32 %v2896, %v3024
        %v3029 = vmul.f32 %v2897, %v3025
        %v3030 = vmul.f32 %v2898, %v3024
        %v3031 = vmul.f32 %v2899, %v3025
        %v3032 = vmul.f32 %v2900, %v3024
        %v3033 = vmul.f32 %v2901, %v3025
        %v3034 = vpack.c.bf16 %v3026, %v3026
        %v3035 = vpack.c.bf16 %v3027, %v3027
        %v3036 = vpack.c.bf16 %v3028, %v3028
        %v3037 = vpack.c.bf16 %v3029, %v3029
        %v3038 = vpack.c.bf16 %v3030, %v3030
        %v3039 = vpack.c.bf16 %v3031, %v3031
        %v3040 = vpack.c.bf16 %v3032, %v3032
        %v3041 = vpack.c.bf16 %v3033, %v3033
        %v3042 = vld [vmem:[%s11] sm:$0xff]
        %v3043 = vld [vmem:[%s11 + $0x8] sm:$0xff]
        %v3044 = vld [vmem:[%s11 + $0x10] sm:$0xff]
        %v3045 = vld [vmem:[%s11 + $0x18] sm:$0xff]
        %v3046 = vld [vmem:[%s11 + $0x20] sm:$0xff]
        %v3047 = vld [vmem:[%s11 + $0x28] sm:$0xff]
        %v3048 = vld [vmem:[%s11 + $0x30] sm:$0xff]
        %v3049 = vld [vmem:[%s11 + $0x38] sm:$0xff]
        %v3050 = vld [vmem:[%s11 + $0x40] sm:$0xff]
        %v3051 = vld [vmem:[%s11 + $0x48] sm:$0xff]
        %v3052 = vld [vmem:[%s11 + $0x50] sm:$0xff]
        %v3053 = vld [vmem:[%s11 + $0x58] sm:$0xff]
        %v3054 = vld [vmem:[%s11 + $0x60] sm:$0xff]
        %v3055 = vld [vmem:[%s11 + $0x68] sm:$0xff]
        %v3056 = vld [vmem:[%s11 + $0x70] sm:$0xff]
        %v3057 = vld [vmem:[%s11 + $0x78] sm:$0xff]
        %v3058 = vld [vmem:[%s11 + $0x80] sm:$0xff]
        %v3059 = vld [vmem:[%s11 + $0x88] sm:$0xff]
        %v3060 = vld [vmem:[%s11 + $0x90] sm:$0xff]
        %v3061 = vld [vmem:[%s11 + $0x98] sm:$0xff]
        %v3062 = vld [vmem:[%s11 + $0xa0] sm:$0xff]
        %v3063 = vld [vmem:[%s11 + $0xa8] sm:$0xff]
        %v3064 = vld [vmem:[%s11 + $0xb0] sm:$0xff]
        %v3065 = vld [vmem:[%s11 + $0xb8] sm:$0xff]
        %v3066 = vld [vmem:[%s11 + $0xc0] sm:$0xff]
        %v3067 = vld [vmem:[%s11 + $0xc8] sm:$0xff]
        %v3068 = vld [vmem:[%s11 + $0xd0] sm:$0xff]
        %v3069 = vld [vmem:[%s11 + $0xd8] sm:$0xff]
        %v3070 = vld [vmem:[%s11 + $0xe0] sm:$0xff]
        %v3071 = vld [vmem:[%s11 + $0xe8] sm:$0xff]
        %v3072 = vld [vmem:[%s11 + $0xf0] sm:$0xff]
        %v3073 = vld [vmem:[%s11 + $0xf8] sm:$0xff]
        %v3074 = vld [vmem:[%s11 + $0x100] sm:$0xff]
        %v3075 = vld [vmem:[%s11 + $0x108] sm:$0xff]
        %v3076 = vld [vmem:[%s11 + $0x110] sm:$0xff]
        %v3077 = vld [vmem:[%s11 + $0x118] sm:$0xff]
        %v3078 = vld [vmem:[%s11 + $0x120] sm:$0xff]
        %v3079 = vld [vmem:[%s11 + $0x128] sm:$0xff]
        %v3080 = vld [vmem:[%s11 + $0x130] sm:$0xff]
        %v3081 = vld [vmem:[%s11 + $0x138] sm:$0xff]
        %v3082 = vld [vmem:[%s11 + $0x140] sm:$0xff]
        %v3083 = vld [vmem:[%s11 + $0x148] sm:$0xff]
        %v3084 = vld [vmem:[%s11 + $0x150] sm:$0xff]
        %v3085 = vld [vmem:[%s11 + $0x158] sm:$0xff]
        %v3086 = vld [vmem:[%s11 + $0x160] sm:$0xff]
        %v3087 = vld [vmem:[%s11 + $0x168] sm:$0xff]
        %v3088 = vld [vmem:[%s11 + $0x170] sm:$0xff]
        %v3089 = vld [vmem:[%s11 + $0x178] sm:$0xff]
        %v3090 = vld [vmem:[%s11 + $0x180] sm:$0xff]
        %v3091 = vld [vmem:[%s11 + $0x188] sm:$0xff]
        %v3092 = vld [vmem:[%s11 + $0x190] sm:$0xff]
        %v3093 = vld [vmem:[%s11 + $0x198] sm:$0xff]
        %v3094 = vld [vmem:[%s11 + $0x1a0] sm:$0xff]
        %v3095 = vld [vmem:[%s11 + $0x1a8] sm:$0xff]
        %v3096 = vld [vmem:[%s11 + $0x1b0] sm:$0xff]
        %v3097 = vld [vmem:[%s11 + $0x1b8] sm:$0xff]
        %v3098 = vld [vmem:[%s11 + $0x1c0] sm:$0xff]
        %v3099 = vld [vmem:[%s11 + $0x1c8] sm:$0xff]
        %v3100 = vld [vmem:[%s11 + $0x1d0] sm:$0xff]
        %v3101 = vld [vmem:[%s11 + $0x1d8] sm:$0xff]
        %v3102 = vld [vmem:[%s11 + $0x1e0] sm:$0xff]
        %v3103 = vld [vmem:[%s11 + $0x1e8] sm:$0xff]
        %v3104 = vld [vmem:[%s11 + $0x1f0] sm:$0xff]
        %v3105 = vld [vmem:[%s11 + $0x1f8] sm:$0xff]
        %v3106 = vld [vmem:[%s12] sm:$0xf]
        %v3108 = vperm.slane %v3106, 0
        %v3109 = vperm.slane %v3106, 1
        %v3110 = vperm.slane %v3106, 2
        %v3111 = vperm.slane %v3106, 3
        %v3124 = vunpack.c.l.b16 %v3034
        %v3125 = vunpack.c.l.b16 %v3035
        %v3126 = vunpack.c.l.b16 %v3036
        %v3127 = vunpack.c.l.b16 %v3037
        %v3128 = vunpack.c.l.b16 %v3038
        %v3129 = vunpack.c.l.b16 %v3039
        %v3130 = vunpack.c.l.b16 %v3040
        %v3131 = vunpack.c.l.b16 %v3041
        %v3132 = vrot.slane %v3126, 7
        %v3133 = vsel %vm1818, %v3132, %v3124
        %v3134 = vrot.slane %v3128, 6
        %v3135 = vsel %vm1821, %v3134, %v3133
        %v3136 = vrot.slane %v3130, 5
        %v3137 = vsel %vm1824, %v3136, %v3135
        %v3138 = vrot.slane %v3127, 7
        %v3139 = vsel %vm1818, %v3138, %v3125
        %v3140 = vrot.slane %v3129, 6
        %v3141 = vsel %vm1821, %v3140, %v3139
        %v3142 = vrot.slane %v3131, 5
        %v3143 = vsel %vm1824, %v3142, %v3141
        %v3144 = vpack.c.b16 %v3137, %v3137
        %v3145 = vpack.c.b16 %v3143, %v3143
        %v3212 = vunpack.c.l.b16 %v3042
        %v3213 = vunpack.c.h.b16 %v3042
        %v3214 = vunpack.c.l.b16 %v3043
        %v3215 = vunpack.c.h.b16 %v3043
        %v3216 = vunpack.c.l.b16 %v3044
        %v3217 = vunpack.c.h.b16 %v3044
        %v3218 = vunpack.c.l.b16 %v3045
        %v3219 = vunpack.c.h.b16 %v3045
        %v3220 = vunpack.c.l.b16 %v3046
        %v3221 = vunpack.c.h.b16 %v3046
        %v3222 = vunpack.c.l.b16 %v3047
        %v3223 = vunpack.c.h.b16 %v3047
        %v3224 = vunpack.c.l.b16 %v3048
        %v3225 = vunpack.c.h.b16 %v3048
        %v3226 = vunpack.c.l.b16 %v3049
        %v3227 = vunpack.c.h.b16 %v3049
        %v3228 = vunpack.c.l.b16 %v3050
        %v3229 = vunpack.c.h.b16 %v3050
        %v3230 = vunpack.c.l.b16 %v3051
        %v3231 = vunpack.c.h.b16 %v3051
        %v3232 = vunpack.c.l.b16 %v3052
        %v3233 = vunpack.c.h.b16 %v3052
        %v3234 = vunpack.c.l.b16 %v3053
        %v3235 = vunpack.c.h.b16 %v3053
        %v3236 = vunpack.c.l.b16 %v3054
        %v3237 = vunpack.c.h.b16 %v3054
        %v3238 = vunpack.c.l.b16 %v3055
        %v3239 = vunpack.c.h.b16 %v3055
        %v3240 = vunpack.c.l.b16 %v3056
        %v3241 = vunpack.c.h.b16 %v3056
        %v3242 = vunpack.c.l.b16 %v3057
        %v3243 = vunpack.c.h.b16 %v3057
        %v3244 = vunpack.c.l.b16 %v3058
        %v3245 = vunpack.c.h.b16 %v3058
        %v3246 = vunpack.c.l.b16 %v3059
        %v3247 = vunpack.c.h.b16 %v3059
        %v3248 = vunpack.c.l.b16 %v3060
        %v3249 = vunpack.c.h.b16 %v3060
        %v3250 = vunpack.c.l.b16 %v3061
        %v3251 = vunpack.c.h.b16 %v3061
        %v3252 = vunpack.c.l.b16 %v3062
        %v3253 = vunpack.c.h.b16 %v3062
        %v3254 = vunpack.c.l.b16 %v3063
        %v3255 = vunpack.c.h.b16 %v3063
        %v3256 = vunpack.c.l.b16 %v3064
        %v3257 = vunpack.c.h.b16 %v3064
        %v3258 = vunpack.c.l.b16 %v3065
        %v3259 = vunpack.c.h.b16 %v3065
        %v3260 = vunpack.c.l.b16 %v3066
        %v3261 = vunpack.c.h.b16 %v3066
        %v3262 = vunpack.c.l.b16 %v3067
        %v3263 = vunpack.c.h.b16 %v3067
        %v3264 = vunpack.c.l.b16 %v3068
        %v3265 = vunpack.c.h.b16 %v3068
        %v3266 = vunpack.c.l.b16 %v3069
        %v3267 = vunpack.c.h.b16 %v3069
        %v3268 = vunpack.c.l.b16 %v3070
        %v3269 = vunpack.c.h.b16 %v3070
        %v3270 = vunpack.c.l.b16 %v3071
        %v3271 = vunpack.c.h.b16 %v3071
        %v3272 = vunpack.c.l.b16 %v3072
        %v3273 = vunpack.c.h.b16 %v3072
        %v3274 = vunpack.c.l.b16 %v3073
        %v3275 = vunpack.c.h.b16 %v3073
        %v3276 = vunpack.c.l.b16 %v3074
        %v3277 = vunpack.c.h.b16 %v3074
        %v3278 = vunpack.c.l.b16 %v3075
        %v3279 = vunpack.c.h.b16 %v3075
        %v3280 = vunpack.c.l.b16 %v3076
        %v3281 = vunpack.c.h.b16 %v3076
        %v3282 = vunpack.c.l.b16 %v3077
        %v3283 = vunpack.c.h.b16 %v3077
        %v3284 = vunpack.c.l.b16 %v3078
        %v3285 = vunpack.c.h.b16 %v3078
        %v3286 = vunpack.c.l.b16 %v3079
        %v3287 = vunpack.c.h.b16 %v3079
        %v3288 = vunpack.c.l.b16 %v3080
        %v3289 = vunpack.c.h.b16 %v3080
        %v3290 = vunpack.c.l.b16 %v3081
        %v3291 = vunpack.c.h.b16 %v3081
        %v3292 = vunpack.c.l.b16 %v3082
        %v3293 = vunpack.c.h.b16 %v3082
        %v3294 = vunpack.c.l.b16 %v3083
        %v3295 = vunpack.c.h.b16 %v3083
        %v3296 = vunpack.c.l.b16 %v3084
        %v3297 = vunpack.c.h.b16 %v3084
        %v3298 = vunpack.c.l.b16 %v3085
        %v3299 = vunpack.c.h.b16 %v3085
        %v3300 = vunpack.c.l.b16 %v3086
        %v3301 = vunpack.c.h.b16 %v3086
        %v3302 = vunpack.c.l.b16 %v3087
        %v3303 = vunpack.c.h.b16 %v3087
        %v3304 = vunpack.c.l.b16 %v3088
        %v3305 = vunpack.c.h.b16 %v3088
        %v3306 = vunpack.c.l.b16 %v3089
        %v3307 = vunpack.c.h.b16 %v3089
        %v3308 = vunpack.c.l.b16 %v3090
        %v3309 = vunpack.c.h.b16 %v3090
        %v3310 = vunpack.c.l.b16 %v3091
        %v3311 = vunpack.c.h.b16 %v3091
        %v3312 = vunpack.c.l.b16 %v3092
        %v3313 = vunpack.c.h.b16 %v3092
        %v3314 = vunpack.c.l.b16 %v3093
        %v3315 = vunpack.c.h.b16 %v3093
        %v3316 = vunpack.c.l.b16 %v3094
        %v3317 = vunpack.c.h.b16 %v3094
        %v3318 = vunpack.c.l.b16 %v3095
        %v3319 = vunpack.c.h.b16 %v3095
        %v3320 = vunpack.c.l.b16 %v3096
        %v3321 = vunpack.c.h.b16 %v3096
        %v3322 = vunpack.c.l.b16 %v3097
        %v3323 = vunpack.c.h.b16 %v3097
        %v3324 = vunpack.c.l.b16 %v3098
        %v3325 = vunpack.c.h.b16 %v3098
        %v3326 = vunpack.c.l.b16 %v3099
        %v3327 = vunpack.c.h.b16 %v3099
        %v3328 = vunpack.c.l.b16 %v3100
        %v3329 = vunpack.c.h.b16 %v3100
        %v3330 = vunpack.c.l.b16 %v3101
        %v3331 = vunpack.c.h.b16 %v3101
        %v3332 = vunpack.c.l.b16 %v3102
        %v3333 = vunpack.c.h.b16 %v3102
        %v3334 = vunpack.c.l.b16 %v3103
        %v3335 = vunpack.c.h.b16 %v3103
        %v3336 = vunpack.c.l.b16 %v3104
        %v3337 = vunpack.c.h.b16 %v3104
        %v3338 = vunpack.c.l.b16 %v3105
        %v3339 = vunpack.c.h.b16 %v3105
        %v3340 = vpack.c.b16 %v3216, %v3212
        %v3341 = vpack.c.b16 %v3217, %v3213
        %v3342 = vpack.c.b16 %v3218, %v3214
        %v3343 = vpack.c.b16 %v3219, %v3215
        %v3344 = vpack.c.b16 %v3224, %v3220
        %v3345 = vpack.c.b16 %v3225, %v3221
        %v3346 = vpack.c.b16 %v3226, %v3222
        %v3347 = vpack.c.b16 %v3227, %v3223
        %v3348 = vpack.c.b16 %v3232, %v3228
        %v3349 = vpack.c.b16 %v3233, %v3229
        %v3350 = vpack.c.b16 %v3234, %v3230
        %v3351 = vpack.c.b16 %v3235, %v3231
        %v3352 = vpack.c.b16 %v3240, %v3236
        %v3353 = vpack.c.b16 %v3241, %v3237
        %v3354 = vpack.c.b16 %v3242, %v3238
        %v3355 = vpack.c.b16 %v3243, %v3239
        %v3356 = vpack.c.b16 %v3248, %v3244
        %v3357 = vpack.c.b16 %v3249, %v3245
        %v3358 = vpack.c.b16 %v3250, %v3246
        %v3359 = vpack.c.b16 %v3251, %v3247
        %v3360 = vpack.c.b16 %v3256, %v3252
        %v3361 = vpack.c.b16 %v3257, %v3253
        %v3362 = vpack.c.b16 %v3258, %v3254
        %v3363 = vpack.c.b16 %v3259, %v3255
        %v3364 = vpack.c.b16 %v3264, %v3260
        %v3365 = vpack.c.b16 %v3265, %v3261
        %v3366 = vpack.c.b16 %v3266, %v3262
        %v3367 = vpack.c.b16 %v3267, %v3263
        %v3368 = vpack.c.b16 %v3272, %v3268
        %v3369 = vpack.c.b16 %v3273, %v3269
        %v3370 = vpack.c.b16 %v3274, %v3270
        %v3371 = vpack.c.b16 %v3275, %v3271
        %v3372 = vpack.c.b16 %v3280, %v3276
        %v3373 = vpack.c.b16 %v3281, %v3277
        %v3374 = vpack.c.b16 %v3282, %v3278
        %v3375 = vpack.c.b16 %v3283, %v3279
        %v3376 = vpack.c.b16 %v3288, %v3284
        %v3377 = vpack.c.b16 %v3289, %v3285
        %v3378 = vpack.c.b16 %v3290, %v3286
        %v3379 = vpack.c.b16 %v3291, %v3287
        %v3380 = vpack.c.b16 %v3296, %v3292
        %v3381 = vpack.c.b16 %v3297, %v3293
        %v3382 = vpack.c.b16 %v3298, %v3294
        %v3383 = vpack.c.b16 %v3299, %v3295
        %v3384 = vpack.c.b16 %v3304, %v3300
        %v3385 = vpack.c.b16 %v3305, %v3301
        %v3386 = vpack.c.b16 %v3306, %v3302
        %v3387 = vpack.c.b16 %v3307, %v3303
        %v3388 = vpack.c.b16 %v3312, %v3308
        %v3389 = vpack.c.b16 %v3313, %v3309
        %v3390 = vpack.c.b16 %v3314, %v3310
        %v3391 = vpack.c.b16 %v3315, %v3311
        %v3392 = vpack.c.b16 %v3320, %v3316
        %v3393 = vpack.c.b16 %v3321, %v3317
        %v3394 = vpack.c.b16 %v3322, %v3318
        %v3395 = vpack.c.b16 %v3323, %v3319
        %v3396 = vpack.c.b16 %v3328, %v3324
        %v3397 = vpack.c.b16 %v3329, %v3325
        %v3398 = vpack.c.b16 %v3330, %v3326
        %v3399 = vpack.c.b16 %v3331, %v3327
        %v3400 = vpack.c.b16 %v3336, %v3332
        %v3401 = vpack.c.b16 %v3337, %v3333
        %v3402 = vpack.c.b16 %v3338, %v3334
        %v3403 = vpack.c.b16 %v3339, %v3335
        %3468 = vmatpush.bf16.msra.mxu0 %v3368
        %3469 = vmatpush.bf16.msra.mxu0 %v3364
        %3470 = vmatpush.bf16.msra.mxu0 %v3360
        %3471 = vmatpush.bf16.msra.mxu0 %v3356
        %3472 = vmatpush.bf16.msra.mxu0 %v3352
        %3473 = vmatpush.bf16.msra.mxu0 %v3348
        %3474 = vmatpush.bf16.msra.mxu0 %v3344
        %3475 = vmatpush.bf16.msra.mxu0 %v3340
        %3476 = vmatmul.bf16.gmra.mxu0 %v3144
        %v3477 = vpop.f32.mrf.mxu0
        %v3478 = vadd.f32 %v3108, %v3477
        %v3479 = vpop.f32.mrf.mxu0
        %3480 = vdwg.mxu0
        %3481 = vmatpush.bf16.msra.mxu0 %v3400
        %3482 = vmatpush.bf16.msra.mxu0 %v3396
        %3483 = vmatpush.bf16.msra.mxu0 %v3392
        %3484 = vmatpush.bf16.msra.mxu0 %v3388
        %3485 = vmatpush.bf16.msra.mxu0 %v3384
        %3486 = vmatpush.bf16.msra.mxu0 %v3380
        %3487 = vmatpush.bf16.msra.mxu0 %v3376
        %3488 = vmatpush.bf16.msra.mxu0 %v3372
        %3489 = vmatmul.bf16.gmra.mxu0 %v3145
        %v3490 = vpop.f32.mrf.mxu0
        %v3491 = vadd.f32 %v3478, %v3490
        %v3492 = vpop.f32.mrf.mxu0
        %3493 = vdwg.mxu0
        %3494 = vmatpush.bf16.msra.mxu0 %v3369
        %3495 = vmatpush.bf16.msra.mxu0 %v3365
        %3496 = vmatpush.bf16.msra.mxu0 %v3361
        %3497 = vmatpush.bf16.msra.mxu0 %v3357
        %3498 = vmatpush.bf16.msra.mxu0 %v3353
        %3499 = vmatpush.bf16.msra.mxu0 %v3349
        %3500 = vmatpush.bf16.msra.mxu0 %v3345
        %3501 = vmatpush.bf16.msra.mxu0 %v3341
        %3502 = vmatmul.bf16.gmra.mxu0 %v3144
        %v3503 = vpop.f32.mrf.mxu0
        %v3504 = vadd.f32 %v3109, %v3503
        %v3505 = vpop.f32.mrf.mxu0
        %3506 = vdwg.mxu0
        %3507 = vmatpush.bf16.msra.mxu0 %v3401
        %3508 = vmatpush.bf16.msra.mxu0 %v3397
        %3509 = vmatpush.bf16.msra.mxu0 %v3393
        %3510 = vmatpush.bf16.msra.mxu0 %v3389
        %3511 = vmatpush.bf16.msra.mxu0 %v3385
        %3512 = vmatpush.bf16.msra.mxu0 %v3381
        %3513 = vmatpush.bf16.msra.mxu0 %v3377
        %3514 = vmatpush.bf16.msra.mxu0 %v3373
        %3515 = vmatmul.bf16.gmra.mxu0 %v3145
        %v3516 = vpop.f32.mrf.mxu0
        %v3517 = vadd.f32 %v3504, %v3516
        %v3518 = vpop.f32.mrf.mxu0
        %3519 = vdwg.mxu0
        %3520 = vmatpush.bf16.msra.mxu0 %v3370
        %3521 = vmatpush.bf16.msra.mxu0 %v3366
        %3522 = vmatpush.bf16.msra.mxu0 %v3362
        %3523 = vmatpush.bf16.msra.mxu0 %v3358
        %3524 = vmatpush.bf16.msra.mxu0 %v3354
        %3525 = vmatpush.bf16.msra.mxu0 %v3350
        %3526 = vmatpush.bf16.msra.mxu0 %v3346
        %3527 = vmatpush.bf16.msra.mxu0 %v3342
        %3528 = vmatmul.bf16.gmra.mxu0 %v3144
        %v3529 = vpop.f32.mrf.mxu0
        %v3530 = vadd.f32 %v3110, %v3529
        %v3531 = vpop.f32.mrf.mxu0
        %3532 = vdwg.mxu0
        %3533 = vmatpush.bf16.msra.mxu0 %v3402
        %3534 = vmatpush.bf16.msra.mxu0 %v3398
        %3535 = vmatpush.bf16.msra.mxu0 %v3394
        %3536 = vmatpush.bf16.msra.mxu0 %v3390
        %3537 = vmatpush.bf16.msra.mxu0 %v3386
        %3538 = vmatpush.bf16.msra.mxu0 %v3382
        %3539 = vmatpush.bf16.msra.mxu0 %v3378
        %3540 = vmatpush.bf16.msra.mxu0 %v3374
        %3541 = vmatmul.bf16.gmra.mxu0 %v3145
        %v3542 = vpop.f32.mrf.mxu0
        %v3543 = vadd.f32 %v3530, %v3542
        %v3544 = vpop.f32.mrf.mxu0
        %3545 = vdwg.mxu0
        %3546 = vmatpush.bf16.msra.mxu0 %v3371
        %3547 = vmatpush.bf16.msra.mxu0 %v3367
        %3548 = vmatpush.bf16.msra.mxu0 %v3363
        %3549 = vmatpush.bf16.msra.mxu0 %v3359
        %3550 = vmatpush.bf16.msra.mxu0 %v3355
        %3551 = vmatpush.bf16.msra.mxu0 %v3351
        %3552 = vmatpush.bf16.msra.mxu0 %v3347
        %3553 = vmatpush.bf16.msra.mxu0 %v3343
        %3554 = vmatmul.bf16.gmra.mxu0 %v3144
        %v3555 = vpop.f32.mrf.mxu0
        %v3556 = vadd.f32 %v3111, %v3555
        %v3557 = vpop.f32.mrf.mxu0
        %3558 = vdwg.mxu0
        %3559 = vmatpush.bf16.msra.mxu0 %v3403
        %3560 = vmatpush.bf16.msra.mxu0 %v3399
        %3561 = vmatpush.bf16.msra.mxu0 %v3395
        %3562 = vmatpush.bf16.msra.mxu0 %v3391
        %3563 = vmatpush.bf16.msra.mxu0 %v3387
        %3564 = vmatpush.bf16.msra.mxu0 %v3383
        %3565 = vmatpush.bf16.msra.mxu0 %v3379
        %3566 = vmatpush.bf16.msra.mxu0 %v3375
        %3567 = vmatmul.bf16.gmra.mxu0 %v3145
        %v3568 = vpop.f32.mrf.mxu0
        %v3569 = vadd.f32 %v3556, %v3568
        %v3570 = vpop.f32.mrf.mxu0
        %3571 = vdwg.mxu0
        %v3576 = vrot.slane %v3517, 4
        %v3577 = vrot.slane %v3569, 4
        %v3578 = vsel %vm2927, %v3491, %v3576
        %v3579 = vsel %vm2927, %v3543, %v3577
        %3582 = vst [vmem:[%s490] sm:$0xff] %v3578
        %3583 = vst [vmem:[%s490 + $0x8] sm:$0xff] %v3579
        %s3584 = sand.u32 %s329, 1
        %s3585 = scalar_lea.sflag [#allocation3], %s3584
        %s3586 = sand.u32 %s329, 1
        %s3587 = smul.addr %s3586, 16
        %s3588 = scalar_lea.vmem [#allocation5], %s3587
        // Predicated region
        $region77: #{task_forward.1} parent=71 // pred_check
          %p3589 = pneg %p339
        $region78: #{task_forward.1} parent=71 // pred_check_branch
          %3591 = sbr.rel (%p3589) target = $region80
        $region79: #{task_forward.1} parent=71 // pred_region
          %3593 = vsyncadd %s3585, 0
          %s3594 = smul.addr %s28, 4
          %s3595 = smul.addr %s3594, 4
          %s3596 = scalar_lea.hbm %s13, %s3595
          %s3598 = sshll.u32 %s3588, 4
          %s3599 = int_to_ptr.vmem [resolvable:$true] %s3598
          %s3600 = sshll.u32 %s3596, 4
          %s3601 = int_to_ptr.hbm [resolvable:$true] %s3600
          %3603 = dma.vmem_to_hbm [thread:$0]  %s3599, 256, %s3601, %s3585
        $region80: #{task_forward.1} parent=71 // pred_fallthru
          _
      $region72: #{task_forward.1} parent=5 // pred_fallthru
        _
      %p3604 = scmp.le.s32.totalorder 2, %s23
      // Predicated region
      $region81: #{task_forward.1} parent=5 // pred_check
        %p3605 = pneg %p3604
      $region82: #{task_forward.1} parent=5 // pred_check_branch
        %3607 = sbr.rel (%p3605) target = $region84
      $region83: #{task_forward.1} parent=5 // pred_region
        %s3608 = ssub.s32 %s23, 2
        // Predicated region
        $region85: #{task_forward.1} parent=83 // pred_check
          %p3609 = pneg %p345
        $region86: #{task_forward.1} parent=83 // pred_check_branch
          %3611 = sbr.rel (%p3609) target = $region88
        $region87: #{task_forward.1} parent=83 // pred_region
          %s3612 = sand.u32 %s330, 1
          %s3613 = scalar_lea.sflag [#allocation3], %s3612
          %s3614 = sand.u32 %s330, 1
          %s3615 = smul.addr %s3614, 16
          %s3616 = scalar_lea.vmem [#allocation5], %s3615
          %3618 = dma.done %s3613, 256
        $region88: #{task_forward.1} parent=83 // pred_fallthru
          _
      $region84: #{task_forward.1} parent=5 // pred_fallthru
        _
    $region6: #{task_forward.1} parent=1 // loop_footer
      %s27 = sadd.s32 1, %s23
    $region7: #{task_forward.1} parent=1 // loop_footer_branch
      %22 = sbr.rel target = $region3
    $region8: #{task_forward.1} parent=1 // loop_exit
      _
    %3619 = vsyncpa [#allocation3], 1
    %s3620 = scalar_lea.sflag [#allocation3], 1
    %3621 = vsyncpa %s3620, 1
    %3622 = vsyncpa [#allocation4], 1
    %s3623 = scalar_lea.sflag [#allocation4], 1
    %3624 = vsyncpa %s3623, 1

</llo_original>
